<compile_context>
chip_gen: v6e
topology: v6e:2x2x1
jax: 0.10.0
libtpu: 0.0.40
codegen_flags: <defaults>
</compile_context>

<pallas_src>
import functools

import jax
import jax.numpy as jnp
import numpy as np
from jax.experimental import pallas as pl
from jax.experimental.pallas import tpu as pltpu


def _round_up(x, m):
    return ((x + m - 1) // m) * m


# ----------------------------------------------------------------------------
# Fused per-task MAML kernel
# ----------------------------------------------------------------------------
def fused_maml_kernel(xs_ref, ys_ref, xq_ref, yq_ref,          # per-task inputs
                      w_ref, b1_ref, w2_ref, b2_ref,           # base (meta) weights
                      loss_ref,                                # per-task loss out
                      w_sc, b1_sc, w2_sc, b2_sc,               # adapted weights (VMEM)
                      *, inner_lr, update_step, inv_n):
    # Each task starts its adaptation from the base weights.
    w_sc[...] = w_ref[...]
    b1_sc[...] = b1_ref[...]
    w2_sc[...] = w2_ref[...]
    b2_sc[...] = b2_ref[...]

    xs = xs_ref[0]          # (B, KP)  support [flatten(x) | y0], zero-padded
    ys = ys_ref[0]          # (B, TD)  support targets (flattened trajectory)

    def inner_step(_, carry):
        w, b1, w2, b2 = w_sc[...], b1_sc[...], w2_sc[...], b2_sc[...]

        # ---- forward ----
        h = jnp.tanh(jnp.dot(xs, w, preferred_element_type=jnp.float32) + b1)
        yp = jnp.dot(h, w2, preferred_element_type=jnp.float32) + b2

        # ---- analytic backward of mean L1 (sign(0)=0, like torch) ----
        diff = yp - ys
        g = jnp.where(diff > 0, 1.0, jnp.where(diff < 0, -1.0, 0.0)) * inv_n

        dw2 = jax.lax.dot_general(h, g, (((0,), (0,)), ((), ())),
                                  preferred_element_type=jnp.float32)
        db2 = jnp.sum(g, axis=0, keepdims=True)
        dh = jax.lax.dot_general(g, w2, (((1,), (1,)), ((), ())),
                                 preferred_element_type=jnp.float32)
        dpre = dh * (1.0 - h * h)                       # tanh'
        dw = jax.lax.dot_general(xs, dpre, (((0,), (0,)), ((), ())),
                                 preferred_element_type=jnp.float32)
        db1 = jnp.sum(dpre, axis=0, keepdims=True)

        # ---- in-VMEM SGD update ----
        w_sc[...] = w - inner_lr * dw
        b1_sc[...] = b1 - inner_lr * db1
        w2_sc[...] = w2 - inner_lr * dw2
        b2_sc[...] = b2 - inner_lr * db2
        return carry

    jax.lax.fori_loop(0, update_step, inner_step, 0, unroll=True)

    # ---- query forward + L1 loss with the adapted weights ----
    xq = xq_ref[0]          # (B, KP)
    yq = yq_ref[0]          # (B, TD)
    hq = jnp.tanh(jnp.dot(xq, w_sc[...], preferred_element_type=jnp.float32)
                  + b1_sc[...])
    ypq = jnp.dot(hq, w2_sc[...], preferred_element_type=jnp.float32) + b2_sc[...]
    loss = jnp.sum(jnp.abs(ypq - yq)) * inv_n
    loss_ref[...] = jnp.full(loss_ref.shape, loss, jnp.float32)


# ----------------------------------------------------------------------------
# MetaNDP.forward (MAML) — single fused pallas_call over the task grid
# ----------------------------------------------------------------------------
def meta_forward(params, x_spt, y_spt, x_qry, y_qry, *, inner_lr, update_step):
    task_num, B = x_spt.shape[0], x_spt.shape[1]
    T, D = y_spt.shape[2], y_spt.shape[3]
    TD = T * D
    Din = int(np.prod(x_spt.shape[2:]))
    HID = params["w1"].shape[1]

    K = Din + D
    KP = _round_up(K, 128)          # lane-dense contraction dim
    HIDP = _round_up(HID, 128)      # lane-dense hidden dim

    # Concatenate [flatten(x) | y0] and zero-pad to KP (exact: pads multiply 0).
    def pack_inputs(x, y):
        xf = x.reshape(task_num, B, Din)
        y0 = y[:, :, 0, :]
        xc = jnp.concatenate([xf, y0], axis=-1)
        return jnp.pad(xc, ((0, 0), (0, 0), (0, KP - K)))

    xs = pack_inputs(x_spt, y_spt)                  # (task, B, KP)
    xq = pack_inputs(x_qry, y_qry)                  # (task, B, KP)
    ys = y_spt.reshape(task_num, B, TD)             # (task, B, TD)
    yq = y_qry.reshape(task_num, B, TD)             # (task, B, TD)

    # Stack [W1; Wy] and zero-pad (padded rows/cols stay exactly zero under SGD).
    w_cat = jnp.concatenate([params["w1"], params["wy"]], axis=0)     # (K, HID)
    w_cat = jnp.pad(w_cat, ((0, KP - K), (0, HIDP - HID)))            # (KP, HIDP)
    b1 = jnp.pad(params["b1"], ((0, 0), (0, HIDP - HID)))             # (1, HIDP)
    w2 = jnp.pad(params["w2"], ((0, HIDP - HID), (0, 0)))             # (HIDP, TD)
    b2 = params["b2"]                                                 # (1, TD)

    kernel = functools.partial(
        fused_maml_kernel,
        inner_lr=float(inner_lr),
        update_step=int(update_step),
        inv_n=1.0 / float(B * TD),
    )

    losses = pl.pallas_call(
        kernel,
        grid_spec=pltpu.PrefetchScalarGridSpec(
            num_scalar_prefetch=0,
            grid=(task_num,),
            in_specs=[
                pl.BlockSpec((1, B, KP), lambda i: (i, 0, 0)),   # xs
                pl.BlockSpec((1, B, TD), lambda i: (i, 0, 0)),   # ys
                pl.BlockSpec((1, B, KP), lambda i: (i, 0, 0)),   # xq
                pl.BlockSpec((1, B, TD), lambda i: (i, 0, 0)),   # yq
                pl.BlockSpec((KP, HIDP), lambda i: (0, 0)),      # w_cat
                pl.BlockSpec((1, HIDP), lambda i: (0, 0)),       # b1
                pl.BlockSpec((HIDP, TD), lambda i: (0, 0)),      # w2
                pl.BlockSpec((1, TD), lambda i: (0, 0)),         # b2
            ],
            out_specs=pl.BlockSpec((1, 1, 128), lambda i: (i, 0, 0)),
            scratch_shapes=[
                pltpu.VMEM((KP, HIDP), jnp.float32),
                pltpu.VMEM((1, HIDP), jnp.float32),
                pltpu.VMEM((HIDP, TD), jnp.float32),
                pltpu.VMEM((1, TD), jnp.float32),
            ],
        ),
        out_shape=jax.ShapeDtypeStruct((task_num, 1, 128), jnp.float32),
        compiler_params=pltpu.CompilerParams(
            dimension_semantics=("parallel",)),   # v7x: tasks split across 2 TCs
    )(xs, ys, xq, yq, w_cat, b1, w2, b2)

    return jnp.mean(losses[:, 0, 0])


# ----------------------------------------------------------------------------
# Pure-JAX reference (same math, no Pallas) for a correctness check
# ----------------------------------------------------------------------------
def _ref_net(w, xf, y0):
    h = jnp.tanh(xf @ w["w1"] + y0 @ w["wy"] + w["b1"])
    return h @ w["w2"] + w["b2"], h


def ref_meta_forward(params, x_spt, y_spt, x_qry, y_qry, *, inner_lr, update_step):
    task_num, B = x_spt.shape[0], x_spt.shape[1]
    names = ("w1", "wy", "b1", "w2", "b2")
    losses_q = []
    for i in range(task_num):
        xf = x_spt[i].reshape(B, -1)
        y0 = y_spt[i][:, 0, :]
        yt = y_spt[i].reshape(B, -1)
        w = {k: params[k] for k in names}
        for _ in range(update_step):
            yp, h = _ref_net(w, xf, y0)
            diff = yp - yt
            g = jnp.where(diff > 0, 1.0, jnp.where(diff < 0, -1.0, 0.0)) / diff.size
            dw2 = h.T @ g
            db2 = jnp.sum(g, axis=0, keepdims=True)
            dh = g @ w["w2"].T
            dpre = dh * (1.0 - h * h)
            grads = {"w1": xf.T @ dpre, "wy": y0.T @ dpre,
                     "b1": jnp.sum(dpre, axis=0, keepdims=True),
                     "w2": dw2, "b2": db2}
            w = {k: w[k] - inner_lr * grads[k] for k in names}
        ypq, _ = _ref_net(w, x_qry[i].reshape(B, -1), y_qry[i][:, 0, :])
        losses_q.append(jnp.mean(jnp.abs(ypq - y_qry[i].reshape(B, -1))))
    return sum(losses_q) / len(losses_q)


# ----------------------------------------------------------------------------
if __name__ == "__main__":
    TASK, B, C, HI, WI = 2, 8, 1, 16, 16     # x: [task, B, C, H, W]
    T, D, HID = 8, 2, 32                     # y: [task, B, T, D]
    cfg = {"inner_lr": 0.01, "inner_itr": 3, "task_num": TASK}

    key = jax.random.PRNGKey(0)
    ks = jax.random.split(key, 7)
    x_spt = jax.random.normal(ks[0], (TASK, B, C, HI, WI), jnp.float32)
    y_spt = jax.random.normal(ks[1], (TASK, B, T, D), jnp.float32)
    x_qry = jax.random.normal(ks[2], (TASK, B, C, HI, WI), jnp.float32)
    y_qry = jax.random.normal(ks[3], (TASK, B, T, D), jnp.float32)

    params = {
        "w1": 0.05 * jax.random.normal(ks[4], (C * HI * WI, HID), jnp.float32),
        "wy": 0.05 * jax.random.normal(ks[5], (D, HID), jnp.float32),
        "b1": jnp.zeros((1, HID), jnp.float32),
        "w2": 0.05 * jax.random.normal(ks[6], (HID, T * D), jnp.float32),
        "b2": jnp.zeros((1, T * D), jnp.float32),
    }

    meta = jax.jit(functools.partial(
        meta_forward, inner_lr=cfg["inner_lr"], update_step=cfg["inner_itr"]))
    loss = meta(params, x_spt, y_spt, x_qry, y_qry)
    jax.block_until_ready(loss)

    with jax.default_matmul_precision("float32"):
        ref = ref_meta_forward(params, x_spt, y_spt, x_qry, y_qry,
                               inner_lr=cfg["inner_lr"],
                               update_step=cfg["inner_itr"])
    assert np.allclose(np.asarray(loss), np.asarray(ref), rtol=1e-2, atol=1e-3), \
        (float(loss), float(ref))

    print("KERNEL_OK")
</pallas_src>

<mosaic_0001>
module attributes {stable_mosaic.version = 11 : i64} {
  func.func @fused_maml_kernel(%arg0: i32, %arg1: memref<1x8x384xf32, #tpu.memory_space<vmem>>, %arg2: memref<1x8x16xf32, #tpu.memory_space<vmem>>, %arg3: memref<1x8x384xf32, #tpu.memory_space<vmem>>, %arg4: memref<1x8x16xf32, #tpu.memory_space<vmem>>, %arg5: memref<384x128xf32, #tpu.memory_space<vmem>>, %arg6: memref<1x128xf32, #tpu.memory_space<vmem>>, %arg7: memref<128x16xf32, #tpu.memory_space<vmem>>, %arg8: memref<1x16xf32, #tpu.memory_space<vmem>>, %arg9: memref<1x1x128xf32, #tpu.memory_space<vmem>>, %arg10: memref<384x128xf32, #tpu.memory_space<vmem>>, %arg11: memref<1x128xf32, #tpu.memory_space<vmem>>, %arg12: memref<128x16xf32, #tpu.memory_space<vmem>>, %arg13: memref<1x16xf32, #tpu.memory_space<vmem>>) attributes {dimension_semantics = [#tpu.dimension_semantics<parallel>], iteration_bounds = array<i64: 2>, scalar_prefetch = 0 : i64, scratch_operands = 4 : i64, tpu.core_type = #tpu.core_type<tc>, window_params = [{transform_indices = @transform_0, window_bounds = array<i64: 1, 8, 384>}, {transform_indices = @transform_1, window_bounds = array<i64: 1, 8, 16>}, {transform_indices = @transform_2, window_bounds = array<i64: 1, 8, 384>}, {transform_indices = @transform_3, window_bounds = array<i64: 1, 8, 16>}, {pipeline_mode = #tpu.pipeline_mode<synchronous>, transform_indices = @transform_4, window_bounds = array<i64: 384, 128>}, {pipeline_mode = #tpu.pipeline_mode<synchronous>, transform_indices = @transform_5, window_bounds = array<i64: 1, 128>}, {pipeline_mode = #tpu.pipeline_mode<synchronous>, transform_indices = @transform_6, window_bounds = array<i64: 128, 16>}, {pipeline_mode = #tpu.pipeline_mode<synchronous>, transform_indices = @transform_7, window_bounds = array<i64: 1, 16>}, {transform_indices = @transform_8, window_bounds = array<i64: 1, 1, 128>}]} {
    %c0 = arith.constant 0 : index
    %c0_0 = arith.constant 0 : index
    %0 = vector.load %arg5[%c0, %c0_0] : memref<384x128xf32, #tpu.memory_space<vmem>>, vector<384x128xf32>
    %c0_1 = arith.constant 0 : index
    %c0_2 = arith.constant 0 : index
    %1 = vector.load %arg10[%c0_1, %c0_2] : memref<384x128xf32, #tpu.memory_space<vmem>>, vector<384x128xf32>
    tpu.vector_store %arg10[%c0_1, %c0_2], %0 {strides = array<i32>} : memref<384x128xf32, #tpu.memory_space<vmem>>, vector<384x128xf32>,
    %c0_3 = arith.constant 0 : index
    %c0_4 = arith.constant 0 : index
    %2 = vector.load %arg6[%c0_3, %c0_4] : memref<1x128xf32, #tpu.memory_space<vmem>>, vector<1x128xf32>
    %c0_5 = arith.constant 0 : index
    %c0_6 = arith.constant 0 : index
    %3 = vector.load %arg11[%c0_5, %c0_6] : memref<1x128xf32, #tpu.memory_space<vmem>>, vector<1x128xf32>
    tpu.vector_store %arg11[%c0_5, %c0_6], %2 {strides = array<i32>} : memref<1x128xf32, #tpu.memory_space<vmem>>, vector<1x128xf32>,
    %c0_7 = arith.constant 0 : index
    %c0_8 = arith.constant 0 : index
    %4 = vector.load %arg7[%c0_7, %c0_8] : memref<128x16xf32, #tpu.memory_space<vmem>>, vector<128x16xf32>
    %c0_9 = arith.constant 0 : index
    %c0_10 = arith.constant 0 : index
    %5 = vector.load %arg12[%c0_9, %c0_10] : memref<128x16xf32, #tpu.memory_space<vmem>>, vector<128x16xf32>
    tpu.vector_store %arg12[%c0_9, %c0_10], %4 {strides = array<i32>} : memref<128x16xf32, #tpu.memory_space<vmem>>, vector<128x16xf32>,
    %c0_11 = arith.constant 0 : index
    %c0_12 = arith.constant 0 : index
    %6 = vector.load %arg8[%c0_11, %c0_12] : memref<1x16xf32, #tpu.memory_space<vmem>>, vector<1x16xf32>
    %c0_13 = arith.constant 0 : index
    %c0_14 = arith.constant 0 : index
    %7 = vector.load %arg13[%c0_13, %c0_14] : memref<1x16xf32, #tpu.memory_space<vmem>>, vector<1x16xf32>
    tpu.vector_store %arg13[%c0_13, %c0_14], %6 {strides = array<i32>} : memref<1x16xf32, #tpu.memory_space<vmem>>, vector<1x16xf32>,
    %c0_15 = arith.constant 0 : index
    %c0_16 = arith.constant 0 : index
    %c0_17 = arith.constant 0 : index
    %8 = vector.load %arg1[%c0_15, %c0_16, %c0_17] : memref<1x8x384xf32, #tpu.memory_space<vmem>>, vector<1x8x384xf32>
    %9 = vector.shape_cast %8 : vector<1x8x384xf32> to vector<8x384xf32>
    %c0_18 = arith.constant 0 : index
    %c0_19 = arith.constant 0 : index
    %c0_20 = arith.constant 0 : index
    %10 = vector.load %arg2[%c0_18, %c0_19, %c0_20] : memref<1x8x16xf32, #tpu.memory_space<vmem>>, vector<1x8x16xf32>
    %11 = vector.shape_cast %10 : vector<1x8x16xf32> to vector<8x16xf32>
    %c0_i32 = arith.constant 0 : i32
    %c0_21 = arith.constant 0 : index
    %c0_22 = arith.constant 0 : index
    %12 = vector.load %arg10[%c0_21, %c0_22] : memref<384x128xf32, #tpu.memory_space<vmem>>, vector<384x128xf32>
    %c0_23 = arith.constant 0 : index
    %c0_24 = arith.constant 0 : index
    %13 = vector.load %arg11[%c0_23, %c0_24] : memref<1x128xf32, #tpu.memory_space<vmem>>, vector<1x128xf32>
    %c0_25 = arith.constant 0 : index
    %c0_26 = arith.constant 0 : index
    %14 = vector.load %arg12[%c0_25, %c0_26] : memref<128x16xf32, #tpu.memory_space<vmem>>, vector<128x16xf32>
    %c0_27 = arith.constant 0 : index
    %c0_28 = arith.constant 0 : index
    %15 = vector.load %arg13[%c0_27, %c0_28] : memref<1x16xf32, #tpu.memory_space<vmem>>, vector<1x16xf32>
    %cst = arith.constant dense<0.000000e+00> : vector<8x128xf32>
    %16 = tpu.matmul %9, %12, %cst {dimension_numbers = #tpu.dot_dimension_numbers<[1], [0], [0], [1], [0, 0, 1, 1], [], []>} : vector<8x384xf32>, vector<384x128xf32>, vector<8x128xf32> -> vector<8x128xf32>
    %17 = vector.broadcast %13 : vector<1x128xf32> to vector<8x128xf32>
    %18 = arith.addf %16, %17 : vector<8x128xf32>
    %19 = math.tanh %18 : vector<8x128xf32>
    %cst_29 = arith.constant dense<0.000000e+00> : vector<8x16xf32>
    %20 = tpu.matmul %19, %14, %cst_29 {dimension_numbers = #tpu.dot_dimension_numbers<[1], [0], [0], [1], [0, 0, 1, 1], [], []>} : vector<8x128xf32>, vector<128x16xf32>, vector<8x16xf32> -> vector<8x16xf32>
    %21 = vector.broadcast %15 : vector<1x16xf32> to vector<8x16xf32>
    %22 = arith.addf %20, %21 : vector<8x16xf32>
    %23 = arith.subf %22, %11 : vector<8x16xf32>
    %cst_30 = arith.constant 0.000000e+00 : f32
    %24 = vector.broadcast %cst_30 : f32 to vector<8x16xf32>
    %25 = arith.cmpf ogt, %23, %24 : vector<8x16xf32>
    %cst_31 = arith.constant 0.000000e+00 : f32
    %26 = vector.broadcast %cst_31 : f32 to vector<8x16xf32>
    %27 = arith.cmpf olt, %23, %26 : vector<8x16xf32>
    %cst_32 = arith.constant -1.000000e+00 : f32
    %cst_33 = arith.constant 0.000000e+00 : f32
    %28 = vector.broadcast %cst_32 : f32 to vector<8x16xf32>
    %29 = vector.broadcast %cst_33 : f32 to vector<8x16xf32>
    %30 = arith.select %27, %28, %29 : vector<8x16xi1>, vector<8x16xf32>
    %cst_34 = arith.constant 1.000000e+00 : f32
    %31 = vector.broadcast %cst_34 : f32 to vector<8x16xf32>
    %32 = arith.select %25, %31, %30 : vector<8x16xi1>, vector<8x16xf32>
    %cst_35 = arith.constant 7.812500e-03 : f32
    %33 = vector.broadcast %cst_35 : f32 to vector<8x16xf32>
    %34 = arith.mulf %32, %33 : vector<8x16xf32>
    %cst_36 = arith.constant dense<0.000000e+00> : vector<128x16xf32>
    %35 = tpu.matmul %19, %34, %cst_36 {dimension_numbers = #tpu.dot_dimension_numbers<[0], [0], [1], [1], [0, 1, 1, 1], [], []>} : vector<8x128xf32>, vector<8x16xf32>, vector<128x16xf32> -> vector<128x16xf32>
    %cst_37 = arith.constant dense<0.000000e+00> : vector<16xf32>
    %36 = vector.multi_reduction <add>, %34, %cst_37 [0] : vector<8x16xf32> to vector<16xf32>
    %37 = vector.shape_cast %36 : vector<16xf32> to vector<1x16xf32>
    %cst_38 = arith.constant dense<0.000000e+00> : vector<8x128xf32>
    %38 = tpu.matmul %34, %14, %cst_38 {dimension_numbers = #tpu.dot_dimension_numbers<[1], [1], [0], [0], [0, 0, 1, 0], [], []>} : vector<8x16xf32>, vector<128x16xf32>, vector<8x128xf32> -> vector<8x128xf32>
    %39 = arith.mulf %19, %19 : vector<8x128xf32>
    %cst_39 = arith.constant 1.000000e+00 : f32
    %40 = vector.broadcast %cst_39 : f32 to vector<8x128xf32>
    %41 = arith.subf %40, %39 : vector<8x128xf32>
    %42 = arith.mulf %38, %41 : vector<8x128xf32>
    %cst_40 = arith.constant dense<0.000000e+00> : vector<384x128xf32>
    %43 = tpu.matmul %9, %42, %cst_40 {dimension_numbers = #tpu.dot_dimension_numbers<[0], [0], [1], [1], [0, 1, 1, 1], [], []>} : vector<8x384xf32>, vector<8x128xf32>, vector<384x128xf32> -> vector<384x128xf32>
    %cst_41 = arith.constant dense<0.000000e+00> : vector<128xf32>
    %44 = vector.multi_reduction <add>, %42, %cst_41 [0] : vector<8x128xf32> to vector<128xf32>
    %45 = vector.shape_cast %44 : vector<128xf32> to vector<1x128xf32>
    %cst_42 = arith.constant 0.00999999977 : f32
    %46 = vector.broadcast %cst_42 : f32 to vector<384x128xf32>
    %47 = arith.mulf %46, %43 : vector<384x128xf32>
    %48 = arith.subf %12, %47 : vector<384x128xf32>
    %c0_43 = arith.constant 0 : index
    %c0_44 = arith.constant 0 : index
    %49 = vector.load %arg10[%c0_43, %c0_44] : memref<384x128xf32, #tpu.memory_space<vmem>>, vector<384x128xf32>
    tpu.vector_store %arg10[%c0_43, %c0_44], %48 {strides = array<i32>} : memref<384x128xf32, #tpu.memory_space<vmem>>, vector<384x128xf32>,
    %cst_45 = arith.constant 0.00999999977 : f32
    %50 = vector.broadcast %cst_45 : f32 to vector<1x128xf32>
    %51 = arith.mulf %50, %45 : vector<1x128xf32>
    %52 = arith.subf %13, %51 : vector<1x128xf32>
    %c0_46 = arith.constant 0 : index
    %c0_47 = arith.constant 0 : index
    %53 = vector.load %arg11[%c0_46, %c0_47] : memref<1x128xf32, #tpu.memory_space<vmem>>, vector<1x128xf32>
    tpu.vector_store %arg11[%c0_46, %c0_47], %52 {strides = array<i32>} : memref<1x128xf32, #tpu.memory_space<vmem>>, vector<1x128xf32>,
    %cst_48 = arith.constant 0.00999999977 : f32
    %54 = vector.broadcast %cst_48 : f32 to vector<128x16xf32>
    %55 = arith.mulf %54, %35 : vector<128x16xf32>
    %56 = arith.subf %14, %55 : vector<128x16xf32>
    %c0_49 = arith.constant 0 : index
    %c0_50 = arith.constant 0 : index
    %57 = vector.load %arg12[%c0_49, %c0_50] : memref<128x16xf32, #tpu.memory_space<vmem>>, vector<128x16xf32>
    tpu.vector_store %arg12[%c0_49, %c0_50], %56 {strides = array<i32>} : memref<128x16xf32, #tpu.memory_space<vmem>>, vector<128x16xf32>,
    %cst_51 = arith.constant 0.00999999977 : f32
    %58 = vector.broadcast %cst_51 : f32 to vector<1x16xf32>
    %59 = arith.mulf %58, %37 : vector<1x16xf32>
    %60 = arith.subf %15, %59 : vector<1x16xf32>
    %c0_52 = arith.constant 0 : index
    %c0_53 = arith.constant 0 : index
    %61 = vector.load %arg13[%c0_52, %c0_53] : memref<1x16xf32, #tpu.memory_space<vmem>>, vector<1x16xf32>
    tpu.vector_store %arg13[%c0_52, %c0_53], %60 {strides = array<i32>} : memref<1x16xf32, #tpu.memory_space<vmem>>, vector<1x16xf32>,
    %c1_i32 = arith.constant 1 : i32
    %c0_54 = arith.constant 0 : index
    %c0_55 = arith.constant 0 : index
    %62 = vector.load %arg10[%c0_54, %c0_55] : memref<384x128xf32, #tpu.memory_space<vmem>>, vector<384x128xf32>
    %c0_56 = arith.constant 0 : index
    %c0_57 = arith.constant 0 : index
    %63 = vector.load %arg11[%c0_56, %c0_57] : memref<1x128xf32, #tpu.memory_space<vmem>>, vector<1x128xf32>
    %c0_58 = arith.constant 0 : index
    %c0_59 = arith.constant 0 : index
    %64 = vector.load %arg12[%c0_58, %c0_59] : memref<128x16xf32, #tpu.memory_space<vmem>>, vector<128x16xf32>
    %c0_60 = arith.constant 0 : index
    %c0_61 = arith.constant 0 : index
    %65 = vector.load %arg13[%c0_60, %c0_61] : memref<1x16xf32, #tpu.memory_space<vmem>>, vector<1x16xf32>
    %cst_62 = arith.constant dense<0.000000e+00> : vector<8x128xf32>
    %66 = tpu.matmul %9, %62, %cst_62 {dimension_numbers = #tpu.dot_dimension_numbers<[1], [0], [0], [1], [0, 0, 1, 1], [], []>} : vector<8x384xf32>, vector<384x128xf32>, vector<8x128xf32> -> vector<8x128xf32>
    %67 = vector.broadcast %63 : vector<1x128xf32> to vector<8x128xf32>
    %68 = arith.addf %66, %67 : vector<8x128xf32>
    %69 = math.tanh %68 : vector<8x128xf32>
    %cst_63 = arith.constant dense<0.000000e+00> : vector<8x16xf32>
    %70 = tpu.matmul %69, %64, %cst_63 {dimension_numbers = #tpu.dot_dimension_numbers<[1], [0], [0], [1], [0, 0, 1, 1], [], []>} : vector<8x128xf32>, vector<128x16xf32>, vector<8x16xf32> -> vector<8x16xf32>
    %71 = vector.broadcast %65 : vector<1x16xf32> to vector<8x16xf32>
    %72 = arith.addf %70, %71 : vector<8x16xf32>
    %73 = arith.subf %72, %11 : vector<8x16xf32>
    %cst_64 = arith.constant 0.000000e+00 : f32
    %74 = vector.broadcast %cst_64 : f32 to vector<8x16xf32>
    %75 = arith.cmpf ogt, %73, %74 : vector<8x16xf32>
    %cst_65 = arith.constant 0.000000e+00 : f32
    %76 = vector.broadcast %cst_65 : f32 to vector<8x16xf32>
    %77 = arith.cmpf olt, %73, %76 : vector<8x16xf32>
    %cst_66 = arith.constant -1.000000e+00 : f32
    %cst_67 = arith.constant 0.000000e+00 : f32
    %78 = vector.broadcast %cst_66 : f32 to vector<8x16xf32>
    %79 = vector.broadcast %cst_67 : f32 to vector<8x16xf32>
    %80 = arith.select %77, %78, %79 : vector<8x16xi1>, vector<8x16xf32>
    %cst_68 = arith.constant 1.000000e+00 : f32
    %81 = vector.broadcast %cst_68 : f32 to vector<8x16xf32>
    %82 = arith.select %75, %81, %80 : vector<8x16xi1>, vector<8x16xf32>
    %cst_69 = arith.constant 7.812500e-03 : f32
    %83 = vector.broadcast %cst_69 : f32 to vector<8x16xf32>
    %84 = arith.mulf %82, %83 : vector<8x16xf32>
    %cst_70 = arith.constant dense<0.000000e+00> : vector<128x16xf32>
    %85 = tpu.matmul %69, %84, %cst_70 {dimension_numbers = #tpu.dot_dimension_numbers<[0], [0], [1], [1], [0, 1, 1, 1], [], []>} : vector<8x128xf32>, vector<8x16xf32>, vector<128x16xf32> -> vector<128x16xf32>
    %cst_71 = arith.constant dense<0.000000e+00> : vector<16xf32>
    %86 = vector.multi_reduction <add>, %84, %cst_71 [0] : vector<8x16xf32> to vector<16xf32>
    %87 = vector.shape_cast %86 : vector<16xf32> to vector<1x16xf32>
    %cst_72 = arith.constant dense<0.000000e+00> : vector<8x128xf32>
    %88 = tpu.matmul %84, %64, %cst_72 {dimension_numbers = #tpu.dot_dimension_numbers<[1], [1], [0], [0], [0, 0, 1, 0], [], []>} : vector<8x16xf32>, vector<128x16xf32>, vector<8x128xf32> -> vector<8x128xf32>
    %89 = arith.mulf %69, %69 : vector<8x128xf32>
    %cst_73 = arith.constant 1.000000e+00 : f32
    %90 = vector.broadcast %cst_73 : f32 to vector<8x128xf32>
    %91 = arith.subf %90, %89 : vector<8x128xf32>
    %92 = arith.mulf %88, %91 : vector<8x128xf32>
    %cst_74 = arith.constant dense<0.000000e+00> : vector<384x128xf32>
    %93 = tpu.matmul %9, %92, %cst_74 {dimension_numbers = #tpu.dot_dimension_numbers<[0], [0], [1], [1], [0, 1, 1, 1], [], []>} : vector<8x384xf32>, vector<8x128xf32>, vector<384x128xf32> -> vector<384x128xf32>
    %cst_75 = arith.constant dense<0.000000e+00> : vector<128xf32>
    %94 = vector.multi_reduction <add>, %92, %cst_75 [0] : vector<8x128xf32> to vector<128xf32>
    %95 = vector.shape_cast %94 : vector<128xf32> to vector<1x128xf32>
    %cst_76 = arith.constant 0.00999999977 : f32
    %96 = vector.broadcast %cst_76 : f32 to vector<384x128xf32>
    %97 = arith.mulf %96, %93 : vector<384x128xf32>
    %98 = arith.subf %62, %97 : vector<384x128xf32>
    %c0_77 = arith.constant 0 : index
    %c0_78 = arith.constant 0 : index
    %99 = vector.load %arg10[%c0_77, %c0_78] : memref<384x128xf32, #tpu.memory_space<vmem>>, vector<384x128xf32>
    tpu.vector_store %arg10[%c0_77, %c0_78], %98 {strides = array<i32>} : memref<384x128xf32, #tpu.memory_space<vmem>>, vector<384x128xf32>,
    %cst_79 = arith.constant 0.00999999977 : f32
    %100 = vector.broadcast %cst_79 : f32 to vector<1x128xf32>
    %101 = arith.mulf %100, %95 : vector<1x128xf32>
    %102 = arith.subf %63, %101 : vector<1x128xf32>
    %c0_80 = arith.constant 0 : index
    %c0_81 = arith.constant 0 : index
    %103 = vector.load %arg11[%c0_80, %c0_81] : memref<1x128xf32, #tpu.memory_space<vmem>>, vector<1x128xf32>
    tpu.vector_store %arg11[%c0_80, %c0_81], %102 {strides = array<i32>} : memref<1x128xf32, #tpu.memory_space<vmem>>, vector<1x128xf32>,
    %cst_82 = arith.constant 0.00999999977 : f32
    %104 = vector.broadcast %cst_82 : f32 to vector<128x16xf32>
    %105 = arith.mulf %104, %85 : vector<128x16xf32>
    %106 = arith.subf %64, %105 : vector<128x16xf32>
    %c0_83 = arith.constant 0 : index
    %c0_84 = arith.constant 0 : index
    %107 = vector.load %arg12[%c0_83, %c0_84] : memref<128x16xf32, #tpu.memory_space<vmem>>, vector<128x16xf32>
    tpu.vector_store %arg12[%c0_83, %c0_84], %106 {strides = array<i32>} : memref<128x16xf32, #tpu.memory_space<vmem>>, vector<128x16xf32>,
    %cst_85 = arith.constant 0.00999999977 : f32
    %108 = vector.broadcast %cst_85 : f32 to vector<1x16xf32>
    %109 = arith.mulf %108, %87 : vector<1x16xf32>
    %110 = arith.subf %65, %109 : vector<1x16xf32>
    %c0_86 = arith.constant 0 : index
    %c0_87 = arith.constant 0 : index
    %111 = vector.load %arg13[%c0_86, %c0_87] : memref<1x16xf32, #tpu.memory_space<vmem>>, vector<1x16xf32>
    tpu.vector_store %arg13[%c0_86, %c0_87], %110 {strides = array<i32>} : memref<1x16xf32, #tpu.memory_space<vmem>>, vector<1x16xf32>,
    %c2_i32 = arith.constant 2 : i32
    %c0_88 = arith.constant 0 : index
    %c0_89 = arith.constant 0 : index
    %112 = vector.load %arg10[%c0_88, %c0_89] : memref<384x128xf32, #tpu.memory_space<vmem>>, vector<384x128xf32>
    %c0_90 = arith.constant 0 : index
    %c0_91 = arith.constant 0 : index
    %113 = vector.load %arg11[%c0_90, %c0_91] : memref<1x128xf32, #tpu.memory_space<vmem>>, vector<1x128xf32>
    %c0_92 = arith.constant 0 : index
    %c0_93 = arith.constant 0 : index
    %114 = vector.load %arg12[%c0_92, %c0_93] : memref<128x16xf32, #tpu.memory_space<vmem>>, vector<128x16xf32>
    %c0_94 = arith.constant 0 : index
    %c0_95 = arith.constant 0 : index
    %115 = vector.load %arg13[%c0_94, %c0_95] : memref<1x16xf32, #tpu.memory_space<vmem>>, vector<1x16xf32>
    %cst_96 = arith.constant dense<0.000000e+00> : vector<8x128xf32>
    %116 = tpu.matmul %9, %112, %cst_96 {dimension_numbers = #tpu.dot_dimension_numbers<[1], [0], [0], [1], [0, 0, 1, 1], [], []>} : vector<8x384xf32>, vector<384x128xf32>, vector<8x128xf32> -> vector<8x128xf32>
    %117 = vector.broadcast %113 : vector<1x128xf32> to vector<8x128xf32>
    %118 = arith.addf %116, %117 : vector<8x128xf32>
    %119 = math.tanh %118 : vector<8x128xf32>
    %cst_97 = arith.constant dense<0.000000e+00> : vector<8x16xf32>
    %120 = tpu.matmul %119, %114, %cst_97 {dimension_numbers = #tpu.dot_dimension_numbers<[1], [0], [0], [1], [0, 0, 1, 1], [], []>} : vector<8x128xf32>, vector<128x16xf32>, vector<8x16xf32> -> vector<8x16xf32>
    %121 = vector.broadcast %115 : vector<1x16xf32> to vector<8x16xf32>
    %122 = arith.addf %120, %121 : vector<8x16xf32>
    %123 = arith.subf %122, %11 : vector<8x16xf32>
    %cst_98 = arith.constant 0.000000e+00 : f32
    %124 = vector.broadcast %cst_98 : f32 to vector<8x16xf32>
    %125 = arith.cmpf ogt, %123, %124 : vector<8x16xf32>
    %cst_99 = arith.constant 0.000000e+00 : f32
    %126 = vector.broadcast %cst_99 : f32 to vector<8x16xf32>
    %127 = arith.cmpf olt, %123, %126 : vector<8x16xf32>
    %cst_100 = arith.constant -1.000000e+00 : f32
    %cst_101 = arith.constant 0.000000e+00 : f32
    %128 = vector.broadcast %cst_100 : f32 to vector<8x16xf32>
    %129 = vector.broadcast %cst_101 : f32 to vector<8x16xf32>
    %130 = arith.select %127, %128, %129 : vector<8x16xi1>, vector<8x16xf32>
    %cst_102 = arith.constant 1.000000e+00 : f32
    %131 = vector.broadcast %cst_102 : f32 to vector<8x16xf32>
    %132 = arith.select %125, %131, %130 : vector<8x16xi1>, vector<8x16xf32>
    %cst_103 = arith.constant 7.812500e-03 : f32
    %133 = vector.broadcast %cst_103 : f32 to vector<8x16xf32>
    %134 = arith.mulf %132, %133 : vector<8x16xf32>
    %cst_104 = arith.constant dense<0.000000e+00> : vector<128x16xf32>
    %135 = tpu.matmul %119, %134, %cst_104 {dimension_numbers = #tpu.dot_dimension_numbers<[0], [0], [1], [1], [0, 1, 1, 1], [], []>} : vector<8x128xf32>, vector<8x16xf32>, vector<128x16xf32> -> vector<128x16xf32>
    %cst_105 = arith.constant dense<0.000000e+00> : vector<16xf32>
    %136 = vector.multi_reduction <add>, %134, %cst_105 [0] : vector<8x16xf32> to vector<16xf32>
    %137 = vector.shape_cast %136 : vector<16xf32> to vector<1x16xf32>
    %cst_106 = arith.constant dense<0.000000e+00> : vector<8x128xf32>
    %138 = tpu.matmul %134, %114, %cst_106 {dimension_numbers = #tpu.dot_dimension_numbers<[1], [1], [0], [0], [0, 0, 1, 0], [], []>} : vector<8x16xf32>, vector<128x16xf32>, vector<8x128xf32> -> vector<8x128xf32>
    %139 = arith.mulf %119, %119 : vector<8x128xf32>
    %cst_107 = arith.constant 1.000000e+00 : f32
    %140 = vector.broadcast %cst_107 : f32 to vector<8x128xf32>
    %141 = arith.subf %140, %139 : vector<8x128xf32>
    %142 = arith.mulf %138, %141 : vector<8x128xf32>
    %cst_108 = arith.constant dense<0.000000e+00> : vector<384x128xf32>
    %143 = tpu.matmul %9, %142, %cst_108 {dimension_numbers = #tpu.dot_dimension_numbers<[0], [0], [1], [1], [0, 1, 1, 1], [], []>} : vector<8x384xf32>, vector<8x128xf32>, vector<384x128xf32> -> vector<384x128xf32>
    %cst_109 = arith.constant dense<0.000000e+00> : vector<128xf32>
    %144 = vector.multi_reduction <add>, %142, %cst_109 [0] : vector<8x128xf32> to vector<128xf32>
    %145 = vector.shape_cast %144 : vector<128xf32> to vector<1x128xf32>
    %cst_110 = arith.constant 0.00999999977 : f32
    %146 = vector.broadcast %cst_110 : f32 to vector<384x128xf32>
    %147 = arith.mulf %146, %143 : vector<384x128xf32>
    %148 = arith.subf %112, %147 : vector<384x128xf32>
    %c0_111 = arith.constant 0 : index
    %c0_112 = arith.constant 0 : index
    %149 = vector.load %arg10[%c0_111, %c0_112] : memref<384x128xf32, #tpu.memory_space<vmem>>, vector<384x128xf32>
    tpu.vector_store %arg10[%c0_111, %c0_112], %148 {strides = array<i32>} : memref<384x128xf32, #tpu.memory_space<vmem>>, vector<384x128xf32>,
    %cst_113 = arith.constant 0.00999999977 : f32
    %150 = vector.broadcast %cst_113 : f32 to vector<1x128xf32>
    %151 = arith.mulf %150, %145 : vector<1x128xf32>
    %152 = arith.subf %113, %151 : vector<1x128xf32>
    %c0_114 = arith.constant 0 : index
    %c0_115 = arith.constant 0 : index
    %153 = vector.load %arg11[%c0_114, %c0_115] : memref<1x128xf32, #tpu.memory_space<vmem>>, vector<1x128xf32>
    tpu.vector_store %arg11[%c0_114, %c0_115], %152 {strides = array<i32>} : memref<1x128xf32, #tpu.memory_space<vmem>>, vector<1x128xf32>,
    %cst_116 = arith.constant 0.00999999977 : f32
    %154 = vector.broadcast %cst_116 : f32 to vector<128x16xf32>
    %155 = arith.mulf %154, %135 : vector<128x16xf32>
    %156 = arith.subf %114, %155 : vector<128x16xf32>
    %c0_117 = arith.constant 0 : index
    %c0_118 = arith.constant 0 : index
    %157 = vector.load %arg12[%c0_117, %c0_118] : memref<128x16xf32, #tpu.memory_space<vmem>>, vector<128x16xf32>
    tpu.vector_store %arg12[%c0_117, %c0_118], %156 {strides = array<i32>} : memref<128x16xf32, #tpu.memory_space<vmem>>, vector<128x16xf32>,
    %cst_119 = arith.constant 0.00999999977 : f32
    %158 = vector.broadcast %cst_119 : f32 to vector<1x16xf32>
    %159 = arith.mulf %158, %137 : vector<1x16xf32>
    %160 = arith.subf %115, %159 : vector<1x16xf32>
    %c0_120 = arith.constant 0 : index
    %c0_121 = arith.constant 0 : index
    %161 = vector.load %arg13[%c0_120, %c0_121] : memref<1x16xf32, #tpu.memory_space<vmem>>, vector<1x16xf32>
    tpu.vector_store %arg13[%c0_120, %c0_121], %160 {strides = array<i32>} : memref<1x16xf32, #tpu.memory_space<vmem>>, vector<1x16xf32>,
    %c0_122 = arith.constant 0 : index
    %c0_123 = arith.constant 0 : index
    %c0_124 = arith.constant 0 : index
    %162 = vector.load %arg3[%c0_122, %c0_123, %c0_124] : memref<1x8x384xf32, #tpu.memory_space<vmem>>, vector<1x8x384xf32>
    %163 = vector.shape_cast %162 : vector<1x8x384xf32> to vector<8x384xf32>
    %c0_125 = arith.constant 0 : index
    %c0_126 = arith.constant 0 : index
    %c0_127 = arith.constant 0 : index
    %164 = vector.load %arg4[%c0_125, %c0_126, %c0_127] : memref<1x8x16xf32, #tpu.memory_space<vmem>>, vector<1x8x16xf32>
    %165 = vector.shape_cast %164 : vector<1x8x16xf32> to vector<8x16xf32>
    %c0_128 = arith.constant 0 : index
    %c0_129 = arith.constant 0 : index
    %166 = vector.load %arg10[%c0_128, %c0_129] : memref<384x128xf32, #tpu.memory_space<vmem>>, vector<384x128xf32>
    %cst_130 = arith.constant dense<0.000000e+00> : vector<8x128xf32>
    %167 = tpu.matmul %163, %166, %cst_130 {dimension_numbers = #tpu.dot_dimension_numbers<[1], [0], [0], [1], [0, 0, 1, 1], [], []>} : vector<8x384xf32>, vector<384x128xf32>, vector<8x128xf32> -> vector<8x128xf32>
    %c0_131 = arith.constant 0 : index
    %c0_132 = arith.constant 0 : index
    %168 = vector.load %arg11[%c0_131, %c0_132] : memref<1x128xf32, #tpu.memory_space<vmem>>, vector<1x128xf32>
    %169 = vector.broadcast %168 : vector<1x128xf32> to vector<8x128xf32>
    %170 = arith.addf %167, %169 : vector<8x128xf32>
    %171 = math.tanh %170 : vector<8x128xf32>
    %c0_133 = arith.constant 0 : index
    %c0_134 = arith.constant 0 : index
    %172 = vector.load %arg12[%c0_133, %c0_134] : memref<128x16xf32, #tpu.memory_space<vmem>>, vector<128x16xf32>
    %cst_135 = arith.constant dense<0.000000e+00> : vector<8x16xf32>
    %173 = tpu.matmul %171, %172, %cst_135 {dimension_numbers = #tpu.dot_dimension_numbers<[1], [0], [0], [1], [0, 0, 1, 1], [], []>} : vector<8x128xf32>, vector<128x16xf32>, vector<8x16xf32> -> vector<8x16xf32>
    %c0_136 = arith.constant 0 : index
    %c0_137 = arith.constant 0 : index
    %174 = vector.load %arg13[%c0_136, %c0_137] : memref<1x16xf32, #tpu.memory_space<vmem>>, vector<1x16xf32>
    %175 = vector.broadcast %174 : vector<1x16xf32> to vector<8x16xf32>
    %176 = arith.addf %173, %175 : vector<8x16xf32>
    %177 = arith.subf %176, %165 : vector<8x16xf32>
    %178 = math.absf %177 : vector<8x16xf32>
    %179 = vector.shape_cast %178 : vector<8x16xf32> to vector<1x8x16xf32>
    %cst_138 = arith.constant dense<0.000000e+00> : vector<1xf32>
    %180 = vector.multi_reduction <add>, %179, %cst_138 [1, 2] : vector<1x8x16xf32> to vector<1xf32>
    %181 = vector.shape_cast %180 : vector<1xf32> to vector<1x1x1xf32>
    %182 = vector.extract %181[0, 0, 0] : f32 from vector<1x1x1xf32>
    %cst_139 = arith.constant 7.812500e-03 : f32
    %183 = arith.mulf %182, %cst_139 : f32
    %184 = vector.broadcast %183 : f32 to vector<1x1x128xf32>
    %c0_140 = arith.constant 0 : index
    %c0_141 = arith.constant 0 : index
    %c0_142 = arith.constant 0 : index
    %185 = vector.load %arg9[%c0_140, %c0_141, %c0_142] : memref<1x1x128xf32, #tpu.memory_space<vmem>>, vector<1x1x128xf32>
    tpu.vector_store %arg9[%c0_140, %c0_141, %c0_142], %184 {strides = array<i32>} : memref<1x1x128xf32, #tpu.memory_space<vmem>>, vector<1x1x128xf32>,
    return
  }
  func.func @transform_0(%arg0: i32) -> (i32, i32, i32) {
    %c0_i32 = arith.constant 0 : i32
    %c0_i32_0 = arith.constant 0 : i32
    %c0_i32_1 = arith.constant 0 : i32
    return %arg0, %c0_i32, %c0_i32_0 : i32, i32, i32
  }
  func.func @transform_1(%arg0: i32) -> (i32, i32, i32) {
    %c0_i32 = arith.constant 0 : i32
    %c0_i32_0 = arith.constant 0 : i32
    %c0_i32_1 = arith.constant 0 : i32
    return %arg0, %c0_i32, %c0_i32_0 : i32, i32, i32
  }
  func.func @transform_2(%arg0: i32) -> (i32, i32, i32) {
    %c0_i32 = arith.constant 0 : i32
    %c0_i32_0 = arith.constant 0 : i32
    %c0_i32_1 = arith.constant 0 : i32
    return %arg0, %c0_i32, %c0_i32_0 : i32, i32, i32
  }
  func.func @transform_3(%arg0: i32) -> (i32, i32, i32) {
    %c0_i32 = arith.constant 0 : i32
    %c0_i32_0 = arith.constant 0 : i32
    %c0_i32_1 = arith.constant 0 : i32
    return %arg0, %c0_i32, %c0_i32_0 : i32, i32, i32
  }
  func.func @transform_4(%arg0: i32) -> (i32, i32) {
    %c0_i32 = arith.constant 0 : i32
    %c0_i32_0 = arith.constant 0 : i32
    %c0_i32_1 = arith.constant 0 : i32
    return %c0_i32, %c0_i32_0 : i32, i32
  }
  func.func @transform_5(%arg0: i32) -> (i32, i32) {
    %c0_i32 = arith.constant 0 : i32
    %c0_i32_0 = arith.constant 0 : i32
    %c0_i32_1 = arith.constant 0 : i32
    return %c0_i32, %c0_i32_0 : i32, i32
  }
  func.func @transform_6(%arg0: i32) -> (i32, i32) {
    %c0_i32 = arith.constant 0 : i32
    %c0_i32_0 = arith.constant 0 : i32
    %c0_i32_1 = arith.constant 0 : i32
    return %c0_i32, %c0_i32_0 : i32, i32
  }
  func.func @transform_7(%arg0: i32) -> (i32, i32) {
    %c0_i32 = arith.constant 0 : i32
    %c0_i32_0 = arith.constant 0 : i32
    %c0_i32_1 = arith.constant 0 : i32
    return %c0_i32, %c0_i32_0 : i32, i32
  }
  func.func @transform_8(%arg0: i32) -> (i32, i32, i32) {
    %c0_i32 = arith.constant 0 : i32
    %c0_i32_0 = arith.constant 0 : i32
    %c0_i32_1 = arith.constant 0 : i32
    return %arg0, %c0_i32, %c0_i32_0 : i32, i32, i32
  }
}

</mosaic_0001>

<llo_original>
// kernel: meta_forward.1
$region0: #{meta_forward.1}
  #allocation0 [shape = 'u32[]', space=smem, size = 0x4, offset = 0x4, fixed_abs, tag = 'smem constant byte address 0x4 - core index']
  #allocation1 [shape = 'u32[144,128]{1,0:T(1,128)}', space=vmem, size = 0x12000, scoped, tag = 'internal scratch']
  #allocation2 [shape = 'f32[384,128]{1,0:T(8,128)}', space=vmem, size = 0x30000, scoped, tag = 'scratch operand']
  #allocation3 [shape = 'f32[1,128]{1,0:T(1,128)}', space=vmem, size = 0x200, scoped, tag = 'scratch operand']
  #allocation4 [shape = 'f32[128,16]{1,0:T(8,128)}', space=vmem, size = 0x10000, scoped, tag = 'scratch operand']
  #allocation5 [shape = 'f32[1,16]{1,0:T(1,128)}', space=vmem, size = 0x200, scoped, tag = 'scratch operand']
  %s0 = inlined_call_operand.vmem [shape: f32[2,8,384], index: 0, kind: input, shape index: {}]
  %s1 = inlined_call_operand.vmem [shape: f32[2,8,16], index: 1, kind: input, shape index: {}]
  %s2 = inlined_call_operand.vmem [shape: f32[2,8,384], index: 2, kind: input, shape index: {}]
  %s3 = inlined_call_operand.vmem [shape: f32[2,8,16], index: 3, kind: input, shape index: {}]
  %s4 = inlined_call_operand.vmem [shape: f32[384,128], index: 4, kind: input, shape index: {}]
  %s5 = inlined_call_operand.vmem [shape: f32[1,128], index: 5, kind: input, shape index: {}]
  %s6 = inlined_call_operand.vmem [shape: f32[128,16], index: 6, kind: input, shape index: {}]
  %s7 = inlined_call_operand.vmem [shape: f32[1,16], index: 7, kind: input, shape index: {}]
  %s8 = inlined_call_operand.vmem [shape: f32[2,1,128], index: 8, kind: output, shape index: {}]
  %s9 = sld [smem:[#allocation0]]
  $region65: #{meta_forward.1} parent=0
    _
  %s11 = ssub.s32 1, %s9
  %s12 = scalar_select 0, %s11, %s9
  loop: start=0, step=1, limit=4
  $region2: #{meta_forward.1} parent=0 // loop_pre_header
    _
  $region3: #{meta_forward.1} parent=0 // loop_header
    %s14 = sphi 0, %s18
    %p15 = scmp.ge.s32.totalorder %s14, 4
    %s24 = sphi 0, %s26
    %s27 = sphi 0, %s24
    %s28 = sphi 0, %s27
    %s44 = sphi 0, %s28
    %s50 = sphi 0, %s52
    %s53 = sphi 0, %s50
    %s54 = sphi 0, %s53
    %s70 = sphi 0, %s54
    %s76 = sphi 0, %s78
    %s79 = sphi 0, %s76
    %s80 = sphi 0, %s79
    %s96 = sphi 0, %s80
    %s102 = sphi 0, %s104
    %s105 = sphi 0, %s102
    %s106 = sphi 0, %s105
    %s122 = sphi 0, %s106
    %s126 = sphi 0, %s126
    %s128 = sphi 0, %s126
    %s129 = sphi 0, %s128
    %s143 = sphi 0, %s129
    %s147 = sphi 0, %s147
    %s149 = sphi 0, %s147
    %s150 = sphi 0, %s149
    %s164 = sphi 0, %s150
    %s168 = sphi 0, %s168
    %s170 = sphi 0, %s168
    %s171 = sphi 0, %s170
    %s185 = sphi 0, %s171
    %s189 = sphi 0, %s189
    %s191 = sphi 0, %s189
    %s192 = sphi 0, %s191
    %s206 = sphi 0, %s192
    %s212 = sphi 0, %s214
    %s215 = sphi 0, %s212
    %s216 = sphi 0, %s215
    %s232 = sphi 0, %s216
  $region4: #{meta_forward.1} parent=0 // loop_header_branch
    %17 = sbr.rel (%p15) target = $region8
  $region5: #{meta_forward.1} parent=0 // loop_body
    %s19 = ssub.s32 %s14, 1
    %s20 = ssub.s32 %s14, 2
    %s21 = sadd.s32 %s14, 1
    %s22 = ssub.s32 %s14, %s21
    %p23 = scmp.eq.s32.totalorder %s22, 0
    %s25 = sadd.s32 %s24, 1
    %s26 = scalar_select %p23, %s24, %s25
    %p29 = pneg %p23
    %p30 = scmp.eq.s32.totalorder %s14, 1
    %p31 = por %p29, %p30
    %p32 = scmp.ne.s32.totalorder %s24, %s27
    %p33 = scmp.eq.s32.totalorder %s14, 0
    %p34 = por %p32, %p33
    %p35 = scmp.ne.s32.totalorder %s24, %s27
    %p36 = scmp.eq.s32.totalorder %s19, 1
    %p37 = por %p35, %p36
    %p38 = scmp.ne.s32.totalorder %s27, %s28
    %p39 = scmp.eq.s32.totalorder %s19, 0
    %p40 = por %p38, %p39
    %p41 = scmp.ne.s32.totalorder %s27, %s28
    %p42 = scmp.eq.s32.totalorder %s20, 1
    %p43 = por %p41, %p42
    %p45 = scmp.ne.s32.totalorder %s28, %s44
    %p46 = scmp.eq.s32.totalorder %s20, 0
    %p47 = por %p45, %p46
    %s48 = ssub.s32 %s14, %s21
    %p49 = scmp.eq.s32.totalorder %s48, 0
    %s51 = sadd.s32 %s50, 1
    %s52 = scalar_select %p49, %s50, %s51
    %p55 = pneg %p49
    %p56 = scmp.eq.s32.totalorder %s14, 1
    %p57 = por %p55, %p56
    %p58 = scmp.ne.s32.totalorder %s50, %s53
    %p59 = scmp.eq.s32.totalorder %s14, 0
    %p60 = por %p58, %p59
    %p61 = scmp.ne.s32.totalorder %s50, %s53
    %p62 = scmp.eq.s32.totalorder %s19, 1
    %p63 = por %p61, %p62
    %p64 = scmp.ne.s32.totalorder %s53, %s54
    %p65 = scmp.eq.s32.totalorder %s19, 0
    %p66 = por %p64, %p65
    %p67 = scmp.ne.s32.totalorder %s53, %s54
    %p68 = scmp.eq.s32.totalorder %s20, 1
    %p69 = por %p67, %p68
    %p71 = scmp.ne.s32.totalorder %s54, %s70
    %p72 = scmp.eq.s32.totalorder %s20, 0
    %p73 = por %p71, %p72
    %s74 = ssub.s32 %s14, %s21
    %p75 = scmp.eq.s32.totalorder %s74, 0
    %s77 = sadd.s32 %s76, 1
    %s78 = scalar_select %p75, %s76, %s77
    %p81 = pneg %p75
    %p82 = scmp.eq.s32.totalorder %s14, 1
    %p83 = por %p81, %p82
    %p84 = scmp.ne.s32.totalorder %s76, %s79
    %p85 = scmp.eq.s32.totalorder %s14, 0
    %p86 = por %p84, %p85
    %p87 = scmp.ne.s32.totalorder %s76, %s79
    %p88 = scmp.eq.s32.totalorder %s19, 1
    %p89 = por %p87, %p88
    %p90 = scmp.ne.s32.totalorder %s79, %s80
    %p91 = scmp.eq.s32.totalorder %s19, 0
    %p92 = por %p90, %p91
    %p93 = scmp.ne.s32.totalorder %s79, %s80
    %p94 = scmp.eq.s32.totalorder %s20, 1
    %p95 = por %p93, %p94
    %p97 = scmp.ne.s32.totalorder %s80, %s96
    %p98 = scmp.eq.s32.totalorder %s20, 0
    %p99 = por %p97, %p98
    %s100 = ssub.s32 %s14, %s21
    %p101 = scmp.eq.s32.totalorder %s100, 0
    %s103 = sadd.s32 %s102, 1
    %s104 = scalar_select %p101, %s102, %s103
    %p107 = pneg %p101
    %p108 = scmp.eq.s32.totalorder %s14, 1
    %p109 = por %p107, %p108
    %p110 = scmp.ne.s32.totalorder %s102, %s105
    %p111 = scmp.eq.s32.totalorder %s14, 0
    %p112 = por %p110, %p111
    %p113 = scmp.ne.s32.totalorder %s102, %s105
    %p114 = scmp.eq.s32.totalorder %s19, 1
    %p115 = por %p113, %p114
    %p116 = scmp.ne.s32.totalorder %s105, %s106
    %p117 = scmp.eq.s32.totalorder %s19, 0
    %p118 = por %p116, %p117
    %p119 = scmp.ne.s32.totalorder %s105, %s106
    %p120 = scmp.eq.s32.totalorder %s20, 1
    %p121 = por %p119, %p120
    %p123 = scmp.ne.s32.totalorder %s106, %s122
    %p124 = scmp.eq.s32.totalorder %s20, 0
    %p125 = por %p123, %p124
    %s127 = sadd.s32 %s126, 1
    %p130 = scmp.eq.s32.totalorder %s14, 1
    %p131 = scmp.ne.s32.totalorder %s126, %s128
    %p132 = scmp.eq.s32.totalorder %s14, 0
    %p133 = por %p131, %p132
    %p134 = scmp.ne.s32.totalorder %s126, %s128
    %p135 = scmp.eq.s32.totalorder %s19, 1
    %p136 = por %p134, %p135
    %p137 = scmp.ne.s32.totalorder %s128, %s129
    %p138 = scmp.eq.s32.totalorder %s19, 0
    %p139 = por %p137, %p138
    %p140 = scmp.ne.s32.totalorder %s128, %s129
    %p141 = scmp.eq.s32.totalorder %s20, 1
    %p142 = por %p140, %p141
    %p144 = scmp.ne.s32.totalorder %s129, %s143
    %p145 = scmp.eq.s32.totalorder %s20, 0
    %p146 = por %p144, %p145
    %s148 = sadd.s32 %s147, 1
    %p151 = scmp.eq.s32.totalorder %s14, 1
    %p152 = scmp.ne.s32.totalorder %s147, %s149
    %p153 = scmp.eq.s32.totalorder %s14, 0
    %p154 = por %p152, %p153
    %p155 = scmp.ne.s32.totalorder %s147, %s149
    %p156 = scmp.eq.s32.totalorder %s19, 1
    %p157 = por %p155, %p156
    %p158 = scmp.ne.s32.totalorder %s149, %s150
    %p159 = scmp.eq.s32.totalorder %s19, 0
    %p160 = por %p158, %p159
    %p161 = scmp.ne.s32.totalorder %s149, %s150
    %p162 = scmp.eq.s32.totalorder %s20, 1
    %p163 = por %p161, %p162
    %p165 = scmp.ne.s32.totalorder %s150, %s164
    %p166 = scmp.eq.s32.totalorder %s20, 0
    %p167 = por %p165, %p166
    %s169 = sadd.s32 %s168, 1
    %p172 = scmp.eq.s32.totalorder %s14, 1
    %p173 = scmp.ne.s32.totalorder %s168, %s170
    %p174 = scmp.eq.s32.totalorder %s14, 0
    %p175 = por %p173, %p174
    %p176 = scmp.ne.s32.totalorder %s168, %s170
    %p177 = scmp.eq.s32.totalorder %s19, 1
    %p178 = por %p176, %p177
    %p179 = scmp.ne.s32.totalorder %s170, %s171
    %p180 = scmp.eq.s32.totalorder %s19, 0
    %p181 = por %p179, %p180
    %p182 = scmp.ne.s32.totalorder %s170, %s171
    %p183 = scmp.eq.s32.totalorder %s20, 1
    %p184 = por %p182, %p183
    %p186 = scmp.ne.s32.totalorder %s171, %s185
    %p187 = scmp.eq.s32.totalorder %s20, 0
    %p188 = por %p186, %p187
    %s190 = sadd.s32 %s189, 1
    %p193 = scmp.eq.s32.totalorder %s14, 1
    %p194 = scmp.ne.s32.totalorder %s189, %s191
    %p195 = scmp.eq.s32.totalorder %s14, 0
    %p196 = por %p194, %p195
    %p197 = scmp.ne.s32.totalorder %s189, %s191
    %p198 = scmp.eq.s32.totalorder %s19, 1
    %p199 = por %p197, %p198
    %p200 = scmp.ne.s32.totalorder %s191, %s192
    %p201 = scmp.eq.s32.totalorder %s19, 0
    %p202 = por %p200, %p201
    %p203 = scmp.ne.s32.totalorder %s191, %s192
    %p204 = scmp.eq.s32.totalorder %s20, 1
    %p205 = por %p203, %p204
    %p207 = scmp.ne.s32.totalorder %s192, %s206
    %p208 = scmp.eq.s32.totalorder %s20, 0
    %p209 = por %p207, %p208
    %s210 = ssub.s32 %s14, %s21
    %p211 = scmp.eq.s32.totalorder %s210, 0
    %s213 = sadd.s32 %s212, 1
    %s214 = scalar_select %p211, %s212, %s213
    %p217 = pneg %p211
    %p218 = scmp.eq.s32.totalorder %s14, 1
    %p219 = por %p217, %p218
    %p220 = scmp.ne.s32.totalorder %s212, %s215
    %p221 = scmp.eq.s32.totalorder %s14, 0
    %p222 = por %p220, %p221
    %p223 = scmp.ne.s32.totalorder %s212, %s215
    %p224 = scmp.eq.s32.totalorder %s19, 1
    %p225 = por %p223, %p224
    %p226 = scmp.ne.s32.totalorder %s215, %s216
    %p227 = scmp.eq.s32.totalorder %s19, 0
    %p228 = por %p226, %p227
    %p229 = scmp.ne.s32.totalorder %s215, %s216
    %p230 = scmp.eq.s32.totalorder %s20, 1
    %p231 = por %p229, %p230
    %p233 = scmp.ne.s32.totalorder %s216, %s232
    %p234 = scmp.eq.s32.totalorder %s20, 0
    %p235 = por %p233, %p234
    %p236 = scmp.le.s32.totalorder 1, %s14
    %p237 = scmp.lt.s32.totalorder %s14, 3
    %p238 = pnand %p236, %p237
    %p239 = pneg %p238
    // Predicated region
    $region9: #{meta_forward.1} parent=5 // pred_check
      _
    $region10: #{meta_forward.1} parent=5 // pred_check_branch
      %241 = sbr.rel (%p238) target = $region12
    $region11: #{meta_forward.1} parent=5 // pred_region
      %s242 = ssub.s32 %s14, 1
      // Predicated region
      $region13: #{meta_forward.1} parent=11 // pred_check
        %p243 = pneg %p139
      $region14: #{meta_forward.1} parent=11 // pred_check_branch
        %245 = sbr.rel (%p243) target = $region16
      $region15: #{meta_forward.1} parent=11 // pred_region
        _
      $region16: #{meta_forward.1} parent=11 // pred_fallthru
        _
      // Predicated region
      $region17: #{meta_forward.1} parent=11 // pred_check
        %p246 = pneg %p160
      $region18: #{meta_forward.1} parent=11 // pred_check_branch
        %248 = sbr.rel (%p246) target = $region20
      $region19: #{meta_forward.1} parent=11 // pred_region
        _
      $region20: #{meta_forward.1} parent=11 // pred_fallthru
        _
      // Predicated region
      $region21: #{meta_forward.1} parent=11 // pred_check
        %p249 = pneg %p181
      $region22: #{meta_forward.1} parent=11 // pred_check_branch
        %251 = sbr.rel (%p249) target = $region24
      $region23: #{meta_forward.1} parent=11 // pred_region
        _
      $region24: #{meta_forward.1} parent=11 // pred_fallthru
        _
      // Predicated region
      $region25: #{meta_forward.1} parent=11 // pred_check
        %p252 = pneg %p202
      $region26: #{meta_forward.1} parent=11 // pred_check_branch
        %254 = sbr.rel (%p252) target = $region28
      $region27: #{meta_forward.1} parent=11 // pred_region
        _
      $region28: #{meta_forward.1} parent=11 // pred_fallthru
        _
    $region12: #{meta_forward.1} parent=5 // pred_fallthru
      _
    %p255 = scmp.lt.s32.totalorder %s14, 2
    // Predicated region
    $region29: #{meta_forward.1} parent=5 // pred_check
      %p256 = pneg %p255
    $region30: #{meta_forward.1} parent=5 // pred_check_branch
      %258 = sbr.rel (%p256) target = $region32
    $region31: #{meta_forward.1} parent=5 // pred_region
      // Predicated region
      $region33: #{meta_forward.1} parent=31 // pred_check
        %p259 = pneg %p34
      $region34: #{meta_forward.1} parent=31 // pred_check_branch
        %261 = sbr.rel (%p259) target = $region36
      $region35: #{meta_forward.1} parent=31 // pred_region
        %p262 = scmp.lt.s32.totalorder %s14, 1
        %s263 = scalar_select %p262, %s14, 1
        %s264 = smul.addr %s263, 3
        %s265 = smul.addr %s264, 8
        %s266 = scalar_lea.vmem %s0, %s265
      $region36: #{meta_forward.1} parent=31 // pred_fallthru
        _
      // Predicated region
      $region37: #{meta_forward.1} parent=31 // pred_check
        %p267 = pneg %p60
      $region38: #{meta_forward.1} parent=31 // pred_check_branch
        %269 = sbr.rel (%p267) target = $region40
      $region39: #{meta_forward.1} parent=31 // pred_region
        %p270 = scmp.lt.s32.totalorder %s14, 1
        %s271 = scalar_select %p270, %s14, 1
        %s272 = smul.addr %s271, 8
        %s273 = scalar_lea.vmem %s1, %s272
      $region40: #{meta_forward.1} parent=31 // pred_fallthru
        _
      // Predicated region
      $region41: #{meta_forward.1} parent=31 // pred_check
        %p274 = pneg %p86
      $region42: #{meta_forward.1} parent=31 // pred_check_branch
        %276 = sbr.rel (%p274) target = $region44
      $region43: #{meta_forward.1} parent=31 // pred_region
        %p277 = scmp.lt.s32.totalorder %s14, 1
        %s278 = scalar_select %p277, %s14, 1
        %s279 = smul.addr %s278, 3
        %s280 = smul.addr %s279, 8
        %s281 = scalar_lea.vmem %s2, %s280
      $region44: #{meta_forward.1} parent=31 // pred_fallthru
        _
      // Predicated region
      $region45: #{meta_forward.1} parent=31 // pred_check
        %p282 = pneg %p112
      $region46: #{meta_forward.1} parent=31 // pred_check_branch
        %284 = sbr.rel (%p282) target = $region48
      $region47: #{meta_forward.1} parent=31 // pred_region
        %p285 = scmp.lt.s32.totalorder %s14, 1
        %s286 = scalar_select %p285, %s14, 1
        %s287 = smul.addr %s286, 8
        %s288 = scalar_lea.vmem %s3, %s287
      $region48: #{meta_forward.1} parent=31 // pred_fallthru
        _
    $region32: #{meta_forward.1} parent=5 // pred_fallthru
      _
    %p289 = scmp.le.s32.totalorder 1, %s14
    %p290 = scmp.lt.s32.totalorder %s14, 3
    %p291 = pnand %p289, %p290
    %p292 = pneg %p291
    // Predicated region
    $region49: #{meta_forward.1} parent=5 // pred_check
      _
    $region50: #{meta_forward.1} parent=5 // pred_check_branch
      %294 = sbr.rel (%p291) target = $region52
    $region51: #{meta_forward.1} parent=5 // pred_region
      %s295 = ssub.s32 %s14, 1
      %p296 = scmp.lt.s32.totalorder %s19, 1
      %s297 = scalar_select %p296, %s19, 1
      %s298 = smul.addr %s297, 3
      %s299 = smul.addr %s298, 8
      %s300 = scalar_lea.vmem %s0, %s299
      %p301 = pneg %p40
      %p302 = pneg %p37
      %p303 = scmp.lt.s32.totalorder %s19, 1
      %s304 = scalar_select %p303, %s19, 1
      %s305 = smul.addr %s304, 8
      %s306 = scalar_lea.vmem %s1, %s305
      %p307 = pneg %p66
      %p308 = pneg %p63
      %p309 = scmp.lt.s32.totalorder %s19, 1
      %s310 = scalar_select %p309, %s19, 1
      %s311 = smul.addr %s310, 3
      %s312 = smul.addr %s311, 8
      %s313 = scalar_lea.vmem %s2, %s312
      %p314 = pneg %p92
      %p315 = pneg %p89
      %p316 = scmp.lt.s32.totalorder %s19, 1
      %s317 = scalar_select %p316, %s19, 1
      %s318 = smul.addr %s317, 8
      %s319 = scalar_lea.vmem %s3, %s318
      %p320 = pneg %p118
      %p321 = pneg %p115
      %p322 = pneg %p139
      %p323 = pneg %p136
      %p324 = pneg %p160
      %p325 = pneg %p157
      %p326 = pneg %p181
      %p327 = pneg %p178
      %p328 = pneg %p202
      %p329 = pneg %p199
      %p330 = pneg %p228
      %p331 = pneg %p225
      %p332 = scmp.lt.s32.totalorder %s19, 1
      %s333 = scalar_select %p332, %s19, 1
      %s334 = scalar_lea.vmem %s8, %s333
      %p335 = scmp.lt.s32.totalorder %s19, 1
      %s336 = scalar_select %p335, %s19, 1
      %s337 = smul.addr %s336, 3
      %s338 = smul.addr %s337, 8
      %s339 = scalar_lea.vmem %s0, %s338
      %p340 = scmp.lt.s32.totalorder %s19, 1
      %s341 = scalar_select %p340, %s19, 1
      %s342 = smul.addr %s341, 8
      %s343 = scalar_lea.vmem %s1, %s342
      %p344 = scmp.lt.s32.totalorder %s19, 1
      %s345 = scalar_select %p344, %s19, 1
      %s346 = smul.addr %s345, 3
      %s347 = smul.addr %s346, 8
      %s348 = scalar_lea.vmem %s2, %s347
      %p349 = scmp.lt.s32.totalorder %s19, 1
      %s350 = scalar_select %p349, %s19, 1
      %s351 = smul.addr %s350, 8
      %s352 = scalar_lea.vmem %s3, %s351
      %p353 = scmp.lt.s32.totalorder %s19, 1
      %s354 = scalar_select %p353, %s19, 1
      %s355 = scalar_lea.vmem %s8, %s354
      %v356 = vld [vmem:[%s4] sm:$0xff]
      %v357 = vld [vmem:[%s4 + $0x8] sm:$0xff]
      %v358 = vld [vmem:[%s4 + $0x10] sm:$0xff]
      %v359 = vld [vmem:[%s4 + $0x18] sm:$0xff]
      %v360 = vld [vmem:[%s4 + $0x20] sm:$0xff]
      %v361 = vld [vmem:[%s4 + $0x28] sm:$0xff]
      %v362 = vld [vmem:[%s4 + $0x30] sm:$0xff]
      %v363 = vld [vmem:[%s4 + $0x38] sm:$0xff]
      %v364 = vld [vmem:[%s4 + $0x40] sm:$0xff]
      %v365 = vld [vmem:[%s4 + $0x48] sm:$0xff]
      %v366 = vld [vmem:[%s4 + $0x50] sm:$0xff]
      %v367 = vld [vmem:[%s4 + $0x58] sm:$0xff]
      %v368 = vld [vmem:[%s4 + $0x60] sm:$0xff]
      %v369 = vld [vmem:[%s4 + $0x68] sm:$0xff]
      %v370 = vld [vmem:[%s4 + $0x70] sm:$0xff]
      %v371 = vld [vmem:[%s4 + $0x78] sm:$0xff]
      %v372 = vld [vmem:[%s4 + $0x80] sm:$0xff]
      %v373 = vld [vmem:[%s4 + $0x88] sm:$0xff]
      %v374 = vld [vmem:[%s4 + $0x90] sm:$0xff]
      %v375 = vld [vmem:[%s4 + $0x98] sm:$0xff]
      %v376 = vld [vmem:[%s4 + $0xa0] sm:$0xff]
      %v377 = vld [vmem:[%s4 + $0xa8] sm:$0xff]
      %v378 = vld [vmem:[%s4 + $0xb0] sm:$0xff]
      %v379 = vld [vmem:[%s4 + $0xb8] sm:$0xff]
      %v380 = vld [vmem:[%s4 + $0xc0] sm:$0xff]
      %v381 = vld [vmem:[%s4 + $0xc8] sm:$0xff]
      %v382 = vld [vmem:[%s4 + $0xd0] sm:$0xff]
      %v383 = vld [vmem:[%s4 + $0xd8] sm:$0xff]
      %v384 = vld [vmem:[%s4 + $0xe0] sm:$0xff]
      %v385 = vld [vmem:[%s4 + $0xe8] sm:$0xff]
      %v386 = vld [vmem:[%s4 + $0xf0] sm:$0xff]
      %v387 = vld [vmem:[%s4 + $0xf8] sm:$0xff]
      %v388 = vld [vmem:[%s4 + $0x100] sm:$0xff]
      %v389 = vld [vmem:[%s4 + $0x108] sm:$0xff]
      %v390 = vld [vmem:[%s4 + $0x110] sm:$0xff]
      %v391 = vld [vmem:[%s4 + $0x118] sm:$0xff]
      %v392 = vld [vmem:[%s4 + $0x120] sm:$0xff]
      %v393 = vld [vmem:[%s4 + $0x128] sm:$0xff]
      %v394 = vld [vmem:[%s4 + $0x130] sm:$0xff]
      %v395 = vld [vmem:[%s4 + $0x138] sm:$0xff]
      %v396 = vld [vmem:[%s4 + $0x140] sm:$0xff]
      %v397 = vld [vmem:[%s4 + $0x148] sm:$0xff]
      %v398 = vld [vmem:[%s4 + $0x150] sm:$0xff]
      %v399 = vld [vmem:[%s4 + $0x158] sm:$0xff]
      %v400 = vld [vmem:[%s4 + $0x160] sm:$0xff]
      %v401 = vld [vmem:[%s4 + $0x168] sm:$0xff]
      %v402 = vld [vmem:[%s4 + $0x170] sm:$0xff]
      %v403 = vld [vmem:[%s4 + $0x178] sm:$0xff]
      %404 = vst [vmem:[#allocation2] sm:$0xff] %v356
      %405 = vst [vmem:[#allocation2 + $0x8] sm:$0xff] %v357
      %406 = vst [vmem:[#allocation2 + $0x10] sm:$0xff] %v358
      %407 = vst [vmem:[#allocation2 + $0x18] sm:$0xff] %v359
      %408 = vst [vmem:[#allocation2 + $0x20] sm:$0xff] %v360
      %409 = vst [vmem:[#allocation2 + $0x28] sm:$0xff] %v361
      %410 = vst [vmem:[#allocation2 + $0x30] sm:$0xff] %v362
      %411 = vst [vmem:[#allocation2 + $0x38] sm:$0xff] %v363
      %412 = vst [vmem:[#allocation2 + $0x40] sm:$0xff] %v364
      %413 = vst [vmem:[#allocation2 + $0x48] sm:$0xff] %v365
      %414 = vst [vmem:[#allocation2 + $0x50] sm:$0xff] %v366
      %415 = vst [vmem:[#allocation2 + $0x58] sm:$0xff] %v367
      %416 = vst [vmem:[#allocation2 + $0x60] sm:$0xff] %v368
      %417 = vst [vmem:[#allocation2 + $0x68] sm:$0xff] %v369
      %418 = vst [vmem:[#allocation2 + $0x70] sm:$0xff] %v370
      %419 = vst [vmem:[#allocation2 + $0x78] sm:$0xff] %v371
      %420 = vst [vmem:[#allocation2 + $0x80] sm:$0xff] %v372
      %421 = vst [vmem:[#allocation2 + $0x88] sm:$0xff] %v373
      %422 = vst [vmem:[#allocation2 + $0x90] sm:$0xff] %v374
      %423 = vst [vmem:[#allocation2 + $0x98] sm:$0xff] %v375
      %424 = vst [vmem:[#allocation2 + $0xa0] sm:$0xff] %v376
      %425 = vst [vmem:[#allocation2 + $0xa8] sm:$0xff] %v377
      %426 = vst [vmem:[#allocation2 + $0xb0] sm:$0xff] %v378
      %427 = vst [vmem:[#allocation2 + $0xb8] sm:$0xff] %v379
      %428 = vst [vmem:[#allocation2 + $0xc0] sm:$0xff] %v380
      %429 = vst [vmem:[#allocation2 + $0xc8] sm:$0xff] %v381
      %430 = vst [vmem:[#allocation2 + $0xd0] sm:$0xff] %v382
      %431 = vst [vmem:[#allocation2 + $0xd8] sm:$0xff] %v383
      %432 = vst [vmem:[#allocation2 + $0xe0] sm:$0xff] %v384
      %433 = vst [vmem:[#allocation2 + $0xe8] sm:$0xff] %v385
      %434 = vst [vmem:[#allocation2 + $0xf0] sm:$0xff] %v386
      %435 = vst [vmem:[#allocation2 + $0xf8] sm:$0xff] %v387
      %436 = vst [vmem:[#allocation2 + $0x100] sm:$0xff] %v388
      %437 = vst [vmem:[#allocation2 + $0x108] sm:$0xff] %v389
      %438 = vst [vmem:[#allocation2 + $0x110] sm:$0xff] %v390
      %439 = vst [vmem:[#allocation2 + $0x118] sm:$0xff] %v391
      %440 = vst [vmem:[#allocation2 + $0x120] sm:$0xff] %v392
      %441 = vst [vmem:[#allocation2 + $0x128] sm:$0xff] %v393
      %442 = vst [vmem:[#allocation2 + $0x130] sm:$0xff] %v394
      %443 = vst [vmem:[#allocation2 + $0x138] sm:$0xff] %v395
      %444 = vst [vmem:[#allocation2 + $0x140] sm:$0xff] %v396
      %445 = vst [vmem:[#allocation2 + $0x148] sm:$0xff] %v397
      %446 = vst [vmem:[#allocation2 + $0x150] sm:$0xff] %v398
      %447 = vst [vmem:[#allocation2 + $0x158] sm:$0xff] %v399
      %448 = vst [vmem:[#allocation2 + $0x160] sm:$0xff] %v400
      %449 = vst [vmem:[#allocation2 + $0x168] sm:$0xff] %v401
      %450 = vst [vmem:[#allocation2 + $0x170] sm:$0xff] %v402
      %451 = vst [vmem:[#allocation2 + $0x178] sm:$0xff] %v403
      %v452 = vld [vmem:[%s5] sm:$0x1]
      %453 = vst [vmem:[#allocation3] sm:$0x1] %v452
      %v454 = vld [vmem:[%s6] sm:$0xff]
      %v455 = vld [vmem:[%s6 + $0x8] sm:$0xff]
      %v456 = vld [vmem:[%s6 + $0x10] sm:$0xff]
      %v457 = vld [vmem:[%s6 + $0x18] sm:$0xff]
      %v458 = vld [vmem:[%s6 + $0x20] sm:$0xff]
      %v459 = vld [vmem:[%s6 + $0x28] sm:$0xff]
      %v460 = vld [vmem:[%s6 + $0x30] sm:$0xff]
      %v461 = vld [vmem:[%s6 + $0x38] sm:$0xff]
      %v462 = vld [vmem:[%s6 + $0x40] sm:$0xff]
      %v463 = vld [vmem:[%s6 + $0x48] sm:$0xff]
      %v464 = vld [vmem:[%s6 + $0x50] sm:$0xff]
      %v465 = vld [vmem:[%s6 + $0x58] sm:$0xff]
      %v466 = vld [vmem:[%s6 + $0x60] sm:$0xff]
      %v467 = vld [vmem:[%s6 + $0x68] sm:$0xff]
      %v468 = vld [vmem:[%s6 + $0x70] sm:$0xff]
      %v469 = vld [vmem:[%s6 + $0x78] sm:$0xff]
      %vm470 = vcmask 130048
      %471 = vst.msk [vmem:[#allocation4] sm:$0xff] %vm470, %v454
      %472 = vst.msk [vmem:[#allocation4 + $0x8] sm:$0xff] %vm470, %v455
      %473 = vst.msk [vmem:[#allocation4 + $0x10] sm:$0xff] %vm470, %v456
      %474 = vst.msk [vmem:[#allocation4 + $0x18] sm:$0xff] %vm470, %v457
      %475 = vst.msk [vmem:[#allocation4 + $0x20] sm:$0xff] %vm470, %v458
      %476 = vst.msk [vmem:[#allocation4 + $0x28] sm:$0xff] %vm470, %v459
      %477 = vst.msk [vmem:[#allocation4 + $0x30] sm:$0xff] %vm470, %v460
      %478 = vst.msk [vmem:[#allocation4 + $0x38] sm:$0xff] %vm470, %v461
      %479 = vst.msk [vmem:[#allocation4 + $0x40] sm:$0xff] %vm470, %v462
      %480 = vst.msk [vmem:[#allocation4 + $0x48] sm:$0xff] %vm470, %v463
      %481 = vst.msk [vmem:[#allocation4 + $0x50] sm:$0xff] %vm470, %v464
      %482 = vst.msk [vmem:[#allocation4 + $0x58] sm:$0xff] %vm470, %v465
      %483 = vst.msk [vmem:[#allocation4 + $0x60] sm:$0xff] %vm470, %v466
      %484 = vst.msk [vmem:[#allocation4 + $0x68] sm:$0xff] %vm470, %v467
      %485 = vst.msk [vmem:[#allocation4 + $0x70] sm:$0xff] %vm470, %v468
      %486 = vst.msk [vmem:[#allocation4 + $0x78] sm:$0xff] %vm470, %v469
      %v487 = vld [vmem:[%s7] sm:$0x1]
      %vm488 = vcmask 122880
      %489 = vst.msk [vmem:[#allocation5] sm:$0x1] %vm488, %v487
      %v490 = vld [vmem:[%s339] sm:$0xff]
      %v491 = vld [vmem:[%s339 + $0x8] sm:$0xff]
      %v492 = vld [vmem:[%s339 + $0x10] sm:$0xff]
      %v493 = vld [vmem:[%s343] sm:$0xff]
      %v494 = vld [vmem:[#allocation2] sm:$0xff]
      %v495 = vld [vmem:[#allocation2 + $0x8] sm:$0xff]
      %v496 = vld [vmem:[#allocation2 + $0x10] sm:$0xff]
      %v497 = vld [vmem:[#allocation2 + $0x18] sm:$0xff]
      %v498 = vld [vmem:[#allocation2 + $0x20] sm:$0xff]
      %v499 = vld [vmem:[#allocation2 + $0x28] sm:$0xff]
      %v500 = vld [vmem:[#allocation2 + $0x30] sm:$0xff]
      %v501 = vld [vmem:[#allocation2 + $0x38] sm:$0xff]
      %v502 = vld [vmem:[#allocation2 + $0x40] sm:$0xff]
      %v503 = vld [vmem:[#allocation2 + $0x48] sm:$0xff]
      %v504 = vld [vmem:[#allocation2 + $0x50] sm:$0xff]
      %v505 = vld [vmem:[#allocation2 + $0x58] sm:$0xff]
      %v506 = vld [vmem:[#allocation2 + $0x60] sm:$0xff]
      %v507 = vld [vmem:[#allocation2 + $0x68] sm:$0xff]
      %v508 = vld [vmem:[#allocation2 + $0x70] sm:$0xff]
      %v509 = vld [vmem:[#allocation2 + $0x78] sm:$0xff]
      %v510 = vld [vmem:[#allocation2 + $0x80] sm:$0xff]
      %v511 = vld [vmem:[#allocation2 + $0x88] sm:$0xff]
      %v512 = vld [vmem:[#allocation2 + $0x90] sm:$0xff]
      %v513 = vld [vmem:[#allocation2 + $0x98] sm:$0xff]
      %v514 = vld [vmem:[#allocation2 + $0xa0] sm:$0xff]
      %v515 = vld [vmem:[#allocation2 + $0xa8] sm:$0xff]
      %v516 = vld [vmem:[#allocation2 + $0xb0] sm:$0xff]
      %v517 = vld [vmem:[#allocation2 + $0xb8] sm:$0xff]
      %v518 = vld [vmem:[#allocation2 + $0xc0] sm:$0xff]
      %v519 = vld [vmem:[#allocation2 + $0xc8] sm:$0xff]
      %v520 = vld [vmem:[#allocation2 + $0xd0] sm:$0xff]
      %v521 = vld [vmem:[#allocation2 + $0xd8] sm:$0xff]
      %v522 = vld [vmem:[#allocation2 + $0xe0] sm:$0xff]
      %v523 = vld [vmem:[#allocation2 + $0xe8] sm:$0xff]
      %v524 = vld [vmem:[#allocation2 + $0xf0] sm:$0xff]
      %v525 = vld [vmem:[#allocation2 + $0xf8] sm:$0xff]
      %v526 = vld [vmem:[#allocation2 + $0x100] sm:$0xff]
      %v527 = vld [vmem:[#allocation2 + $0x108] sm:$0xff]
      %v528 = vld [vmem:[#allocation2 + $0x110] sm:$0xff]
      %v529 = vld [vmem:[#allocation2 + $0x118] sm:$0xff]
      %v530 = vld [vmem:[#allocation2 + $0x120] sm:$0xff]
      %v531 = vld [vmem:[#allocation2 + $0x128] sm:$0xff]
      %v532 = vld [vmem:[#allocation2 + $0x130] sm:$0xff]
      %v533 = vld [vmem:[#allocation2 + $0x138] sm:$0xff]
      %v534 = vld [vmem:[#allocation2 + $0x140] sm:$0xff]
      %v535 = vld [vmem:[#allocation2 + $0x148] sm:$0xff]
      %v536 = vld [vmem:[#allocation2 + $0x150] sm:$0xff]
      %v537 = vld [vmem:[#allocation2 + $0x158] sm:$0xff]
      %v538 = vld [vmem:[#allocation2 + $0x160] sm:$0xff]
      %v539 = vld [vmem:[#allocation2 + $0x168] sm:$0xff]
      %v540 = vld [vmem:[#allocation2 + $0x170] sm:$0xff]
      %v541 = vld [vmem:[#allocation2 + $0x178] sm:$0xff]
      %v542 = vld [vmem:[#allocation3] sm:$0x1]
      %v543 = vld [vmem:[#allocation4] sm:$0xff]
      %v544 = vld [vmem:[#allocation4 + $0x8] sm:$0xff]
      %v545 = vld [vmem:[#allocation4 + $0x10] sm:$0xff]
      %v546 = vld [vmem:[#allocation4 + $0x18] sm:$0xff]
      %v547 = vld [vmem:[#allocation4 + $0x20] sm:$0xff]
      %v548 = vld [vmem:[#allocation4 + $0x28] sm:$0xff]
      %v549 = vld [vmem:[#allocation4 + $0x30] sm:$0xff]
      %v550 = vld [vmem:[#allocation4 + $0x38] sm:$0xff]
      %v551 = vld [vmem:[#allocation4 + $0x40] sm:$0xff]
      %v552 = vld [vmem:[#allocation4 + $0x48] sm:$0xff]
      %v553 = vld [vmem:[#allocation4 + $0x50] sm:$0xff]
      %v554 = vld [vmem:[#allocation4 + $0x58] sm:$0xff]
      %v555 = vld [vmem:[#allocation4 + $0x60] sm:$0xff]
      %v556 = vld [vmem:[#allocation4 + $0x68] sm:$0xff]
      %v557 = vld [vmem:[#allocation4 + $0x70] sm:$0xff]
      %v558 = vld [vmem:[#allocation4 + $0x78] sm:$0xff]
      %v559 = vld [vmem:[#allocation5] sm:$0x1]
      %v561 = vlaneseq
      %v562 = vshrl.u32 %v561, 7
      %v563 = vsub.s32 0, %v562
      %v564 = vrot.slane %v542, %v563
      %566 = vmatprep.subr.mxu0 0.0
      %567 = vmatpush1.msra.mxu0 %v509
      %568 = vmatprep.subr.mxu0 0.0
      %569 = vmatpush1.msra.mxu0 %v508
      %570 = vmatprep.subr.mxu0 0.0
      %571 = vmatpush1.msra.mxu0 %v507
      %572 = vmatprep.subr.mxu0 0.0
      %573 = vmatpush1.msra.mxu0 %v506
      %574 = vmatprep.subr.mxu0 0.0
      %575 = vmatpush1.msra.mxu0 %v505
      %576 = vmatprep.subr.mxu0 0.0
      %577 = vmatpush1.msra.mxu0 %v504
      %578 = vmatprep.subr.mxu0 0.0
      %579 = vmatpush1.msra.mxu0 %v503
      %580 = vmatprep.subr.mxu0 0.0
      %581 = vmatpush1.msra.mxu0 %v502
      %582 = vmatprep.subr.mxu0 0.0
      %583 = vmatpush1.msra.mxu0 %v501
      %584 = vmatprep.subr.mxu0 0.0
      %585 = vmatpush1.msra.mxu0 %v500
      %586 = vmatprep.subr.mxu0 0.0
      %587 = vmatpush1.msra.mxu0 %v499
      %588 = vmatprep.subr.mxu0 0.0
      %589 = vmatpush1.msra.mxu0 %v498
      %590 = vmatprep.subr.mxu0 0.0
      %591 = vmatpush1.msra.mxu0 %v497
      %592 = vmatprep.subr.mxu0 0.0
      %593 = vmatpush1.msra.mxu0 %v496
      %594 = vmatprep.subr.mxu0 0.0
      %595 = vmatpush1.msra.mxu0 %v495
      %596 = vmatprep.subr.mxu0 0.0
      %597 = vmatpush1.msra.mxu0 %v494
      %598 = vmatprep.subr.mxu0 0.0
      %599 = vmatpush2.msra.mxu0 %v525
      %600 = vmatprep.subr.mxu0 0.0
      %601 = vmatpush2.msra.mxu0 %v524
      %602 = vmatprep.subr.mxu0 0.0
      %603 = vmatpush2.msra.mxu0 %v523
      %604 = vmatprep.subr.mxu0 0.0
      %605 = vmatpush2.msra.mxu0 %v522
      %606 = vmatprep.subr.mxu0 0.0
      %607 = vmatpush2.msra.mxu0 %v521
      %608 = vmatprep.subr.mxu0 0.0
      %609 = vmatpush2.msra.mxu0 %v520
      %610 = vmatprep.subr.mxu0 0.0
      %611 = vmatpush2.msra.mxu0 %v519
      %612 = vmatprep.subr.mxu0 0.0
      %613 = vmatpush2.msra.mxu0 %v518
      %614 = vmatprep.subr.mxu0 0.0
      %615 = vmatpush2.msra.mxu0 %v517
      %616 = vmatprep.subr.mxu0 0.0
      %617 = vmatpush2.msra.mxu0 %v516
      %618 = vmatprep.subr.mxu0 0.0
      %619 = vmatpush2.msra.mxu0 %v515
      %620 = vmatprep.subr.mxu0 0.0
      %621 = vmatpush2.msra.mxu0 %v514
      %622 = vmatprep.subr.mxu0 0.0
      %623 = vmatpush2.msra.mxu0 %v513
      %624 = vmatprep.subr.mxu0 0.0
      %625 = vmatpush2.msra.mxu0 %v512
      %626 = vmatprep.subr.mxu0 0.0
      %627 = vmatpush2.msra.mxu0 %v511
      %628 = vmatprep.subr.mxu0 0.0
      %629 = vmatpush2.msra.mxu0 %v510
      %630 = vmatprep.mubr.f32.mxu0 %v491
      %631 = vmatmul.mubr.f32.gmra.mxu0 %v490
      %v632 = vpop.f32.mrf.mxu0
      %v633 = vadd.f32 %v564, %v632
      %v634 = vpop.f32.mrf.mxu0
      %635 = vdwg.mxu0
      %636 = vmatprep.subr.mxu0 0.0
      %637 = vmatpush1.msra.mxu0 %v541
      %638 = vmatprep.subr.mxu0 0.0
      %639 = vmatpush1.msra.mxu0 %v540
      %640 = vmatprep.subr.mxu0 0.0
      %641 = vmatpush1.msra.mxu0 %v539
      %642 = vmatprep.subr.mxu0 0.0
      %643 = vmatpush1.msra.mxu0 %v538
      %644 = vmatprep.subr.mxu0 0.0
      %645 = vmatpush1.msra.mxu0 %v537
      %646 = vmatprep.subr.mxu0 0.0
      %647 = vmatpush1.msra.mxu0 %v536
      %648 = vmatprep.subr.mxu0 0.0
      %649 = vmatpush1.msra.mxu0 %v535
      %650 = vmatprep.subr.mxu0 0.0
      %651 = vmatpush1.msra.mxu0 %v534
      %652 = vmatprep.subr.mxu0 0.0
      %653 = vmatpush1.msra.mxu0 %v533
      %654 = vmatprep.subr.mxu0 0.0
      %655 = vmatpush1.msra.mxu0 %v532
      %656 = vmatprep.subr.mxu0 0.0
      %657 = vmatpush1.msra.mxu0 %v531
      %658 = vmatprep.subr.mxu0 0.0
      %659 = vmatpush1.msra.mxu0 %v530
      %660 = vmatprep.subr.mxu0 0.0
      %661 = vmatpush1.msra.mxu0 %v529
      %662 = vmatprep.subr.mxu0 0.0
      %663 = vmatpush1.msra.mxu0 %v528
      %664 = vmatprep.subr.mxu0 0.0
      %665 = vmatpush1.msra.mxu0 %v527
      %666 = vmatprep.subr.mxu0 0.0
      %667 = vmatpush1.msra.mxu0 %v526
      %668 = vmatprep.subr.mxu0 0.0
      %669 = vmatpush2.msra.mxu0 0.0
      %670 = vmatprep.subr.mxu0 0.0
      %671 = vmatpush2.msra.mxu0 0.0
      %672 = vmatprep.subr.mxu0 0.0
      %673 = vmatpush2.msra.mxu0 0.0
      %674 = vmatprep.subr.mxu0 0.0
      %675 = vmatpush2.msra.mxu0 0.0
      %676 = vmatprep.subr.mxu0 0.0
      %677 = vmatpush2.msra.mxu0 0.0
      %678 = vmatprep.subr.mxu0 0.0
      %679 = vmatpush2.msra.mxu0 0.0
      %680 = vmatprep.subr.mxu0 0.0
      %681 = vmatpush2.msra.mxu0 0.0
      %682 = vmatprep.subr.mxu0 0.0
      %683 = vmatpush2.msra.mxu0 0.0
      %684 = vmatprep.subr.mxu0 0.0
      %685 = vmatpush2.msra.mxu0 0.0
      %686 = vmatprep.subr.mxu0 0.0
      %687 = vmatpush2.msra.mxu0 0.0
      %688 = vmatprep.subr.mxu0 0.0
      %689 = vmatpush2.msra.mxu0 0.0
      %690 = vmatprep.subr.mxu0 0.0
      %691 = vmatpush2.msra.mxu0 0.0
      %692 = vmatprep.subr.mxu0 0.0
      %693 = vmatpush2.msra.mxu0 0.0
      %694 = vmatprep.subr.mxu0 0.0
      %695 = vmatpush2.msra.mxu0 0.0
      %696 = vmatprep.subr.mxu0 0.0
      %697 = vmatpush2.msra.mxu0 0.0
      %698 = vmatprep.subr.mxu0 0.0
      %699 = vmatpush2.msra.mxu0 0.0
      %700 = vmatprep.mubr.f32.mxu0 0.0
      %701 = vmatmul.mubr.f32.gmra.mxu0 %v492
      %v702 = vpop.f32.mrf.mxu0
      %v703 = vadd.f32 %v633, %v702
      %v704 = vpop.f32.mrf.mxu0
      %705 = vdwg.mxu0
      %v706 = vtanh.pop %v703
      %v708 = vlaneseq
      %v709 = vshrl.u32 %v708, 7
      %v710 = vsub.s32 0, %v709
      %v711 = vrot.slane %v559, %v710
      %713 = vmatprep.subr.mxu0 0.0
      %714 = vmatpush1.msra.mxu0 %v558
      %715 = vmatprep.subr.mxu0 0.0
      %716 = vmatpush1.msra.mxu0 %v557
      %717 = vmatprep.subr.mxu0 0.0
      %718 = vmatpush1.msra.mxu0 %v556
      %719 = vmatprep.subr.mxu0 0.0
      %720 = vmatpush1.msra.mxu0 %v555
      %721 = vmatprep.subr.mxu0 0.0
      %722 = vmatpush1.msra.mxu0 %v554
      %723 = vmatprep.subr.mxu0 0.0
      %724 = vmatpush1.msra.mxu0 %v553
      %725 = vmatprep.subr.mxu0 0.0
      %726 = vmatpush1.msra.mxu0 %v552
      %727 = vmatprep.subr.mxu0 0.0
      %728 = vmatpush1.msra.mxu0 %v551
      %729 = vmatprep.subr.mxu0 0.0
      %730 = vmatpush1.msra.mxu0 %v550
      %731 = vmatprep.subr.mxu0 0.0
      %732 = vmatpush1.msra.mxu0 %v549
      %733 = vmatprep.subr.mxu0 0.0
      %734 = vmatpush1.msra.mxu0 %v548
      %735 = vmatprep.subr.mxu0 0.0
      %736 = vmatpush1.msra.mxu0 %v547
      %737 = vmatprep.subr.mxu0 0.0
      %738 = vmatpush1.msra.mxu0 %v546
      %739 = vmatprep.subr.mxu0 0.0
      %740 = vmatpush1.msra.mxu0 %v545
      %741 = vmatprep.subr.mxu0 0.0
      %742 = vmatpush1.msra.mxu0 %v544
      %743 = vmatprep.subr.mxu0 0.0
      %744 = vmatpush1.msra.mxu0 %v543
      %745 = vmatprep.subr.mxu0 0.0
      %746 = vmatpush2.msra.mxu0 0.0
      %747 = vmatprep.subr.mxu0 0.0
      %748 = vmatpush2.msra.mxu0 0.0
      %749 = vmatprep.subr.mxu0 0.0
      %750 = vmatpush2.msra.mxu0 0.0
      %751 = vmatprep.subr.mxu0 0.0
      %752 = vmatpush2.msra.mxu0 0.0
      %753 = vmatprep.subr.mxu0 0.0
      %754 = vmatpush2.msra.mxu0 0.0
      %755 = vmatprep.subr.mxu0 0.0
      %756 = vmatpush2.msra.mxu0 0.0
      %757 = vmatprep.subr.mxu0 0.0
      %758 = vmatpush2.msra.mxu0 0.0
      %759 = vmatprep.subr.mxu0 0.0
      %760 = vmatpush2.msra.mxu0 0.0
      %761 = vmatprep.subr.mxu0 0.0
      %762 = vmatpush2.msra.mxu0 0.0
      %763 = vmatprep.subr.mxu0 0.0
      %764 = vmatpush2.msra.mxu0 0.0
      %765 = vmatprep.subr.mxu0 0.0
      %766 = vmatpush2.msra.mxu0 0.0
      %767 = vmatprep.subr.mxu0 0.0
      %768 = vmatpush2.msra.mxu0 0.0
      %769 = vmatprep.subr.mxu0 0.0
      %770 = vmatpush2.msra.mxu0 0.0
      %771 = vmatprep.subr.mxu0 0.0
      %772 = vmatpush2.msra.mxu0 0.0
      %773 = vmatprep.subr.mxu0 0.0
      %774 = vmatpush2.msra.mxu0 0.0
      %775 = vmatprep.subr.mxu0 0.0
      %776 = vmatpush2.msra.mxu0 0.0
      %777 = vmatprep.mubr.f32.mxu0 0.0
      %778 = vmatmul.mubr.f32.gmra.mxu0 %v706
      %v779 = vpop.f32.mrf.mxu0
      %v780 = vadd.f32 %v711, %v779
      %v781 = vpop.f32.mrf.mxu0
      %782 = vdwg.mxu0
      %v783 = vsub.f32 %v780, %v493
      %vm784 = vcmp.gt.f32.partialorder %v783, 0.0
      %vm785 = vcmp.lt.f32.partialorder %v783, 0.0
      %v786 = vsel %vm785, -1.0, 0.0
      %v787 = vsel %vm784, 1.0, %v786
      %v788 = vmul.f32 %v787, 0.0078125
      %789 = vxpose.xlu0.b32.start [1/16] %v706, 128
      %790 = vxpose.xlu0.b32.cont [2/16] 0.0, 128
      %791 = vxpose.xlu0.b32.cont [3/16] 0.0, 128
      %792 = vxpose.xlu0.b32.cont [4/16] 0.0, 128
      %793 = vxpose.xlu0.b32.cont [5/16] 0.0, 128
      %794 = vxpose.xlu0.b32.cont [6/16] 0.0, 128
      %795 = vxpose.xlu0.b32.cont [7/16] 0.0, 128
      %796 = vxpose.xlu0.b32.cont [8/16] 0.0, 128
      %797 = vxpose.xlu0.b32.cont [9/16] 0.0, 128
      %798 = vxpose.xlu0.b32.cont [10/16] 0.0, 128
      %799 = vxpose.xlu0.b32.cont [11/16] 0.0, 128
      %800 = vxpose.xlu0.b32.cont [12/16] 0.0, 128
      %801 = vxpose.xlu0.b32.cont [13/16] 0.0, 128
      %802 = vxpose.xlu0.b32.cont [14/16] 0.0, 128
      %803 = vxpose.xlu0.b32.cont [15/16] 0.0, 128
      %804 = vxpose.xlu0.b32.end [16/16] 0.0, 128
      %v805 = vpop.trf.xlu0
      %v806 = vpop.trf.xlu0
      %v807 = vpop.trf.xlu0
      %v808 = vpop.trf.xlu0
      %v809 = vpop.trf.xlu0
      %v810 = vpop.trf.xlu0
      %v811 = vpop.trf.xlu0
      %v812 = vpop.trf.xlu0
      %v813 = vpop.trf.xlu0
      %v814 = vpop.trf.xlu0
      %v815 = vpop.trf.xlu0
      %v816 = vpop.trf.xlu0
      %v817 = vpop.trf.xlu0
      %v818 = vpop.trf.xlu0
      %v819 = vpop.trf.xlu0
      %v820 = vpop.trf.xlu0
      %vm821 = vcmask 64512
      %v823 = vsel %vm821, %v805, 0
      %v826 = vsel %vm821, %v806, 0
      %v829 = vsel %vm821, %v807, 0
      %v832 = vsel %vm821, %v808, 0
      %v835 = vsel %vm821, %v809, 0
      %v838 = vsel %vm821, %v810, 0
      %v841 = vsel %vm821, %v811, 0
      %v844 = vsel %vm821, %v812, 0
      %v847 = vsel %vm821, %v813, 0
      %v850 = vsel %vm821, %v814, 0
      %v853 = vsel %vm821, %v815, 0
      %v856 = vsel %vm821, %v816, 0
      %v859 = vsel %vm821, %v817, 0
      %v862 = vsel %vm821, %v818, 0
      %v865 = vsel %vm821, %v819, 0
      %v868 = vsel %vm821, %v820, 0
      %870 = vmatprep.subr.mxu0 0.0
      %871 = vmatpush1.msra.mxu0 0.0
      %872 = vmatprep.subr.mxu0 0.0
      %873 = vmatpush1.msra.mxu0 0.0
      %874 = vmatprep.subr.mxu0 0.0
      %875 = vmatpush1.msra.mxu0 0.0
      %876 = vmatprep.subr.mxu0 0.0
      %877 = vmatpush1.msra.mxu0 0.0
      %878 = vmatprep.subr.mxu0 0.0
      %879 = vmatpush1.msra.mxu0 0.0
      %880 = vmatprep.subr.mxu0 0.0
      %881 = vmatpush1.msra.mxu0 0.0
      %882 = vmatprep.subr.mxu0 0.0
      %883 = vmatpush1.msra.mxu0 0.0
      %884 = vmatprep.subr.mxu0 0.0
      %885 = vmatpush1.msra.mxu0 0.0
      %886 = vmatprep.subr.mxu0 0.0
      %887 = vmatpush1.msra.mxu0 0.0
      %888 = vmatprep.subr.mxu0 0.0
      %889 = vmatpush1.msra.mxu0 0.0
      %890 = vmatprep.subr.mxu0 0.0
      %891 = vmatpush1.msra.mxu0 0.0
      %892 = vmatprep.subr.mxu0 0.0
      %893 = vmatpush1.msra.mxu0 0.0
      %894 = vmatprep.subr.mxu0 0.0
      %895 = vmatpush1.msra.mxu0 0.0
      %896 = vmatprep.subr.mxu0 0.0
      %897 = vmatpush1.msra.mxu0 0.0
      %898 = vmatprep.subr.mxu0 0.0
      %899 = vmatpush1.msra.mxu0 0.0
      %900 = vmatprep.subr.mxu0 0.0
      %901 = vmatpush1.msra.mxu0 %v788
      %902 = vmatprep.subr.mxu0 0.0
      %903 = vmatpush2.msra.mxu0 0.0
      %904 = vmatprep.subr.mxu0 0.0
      %905 = vmatpush2.msra.mxu0 0.0
      %906 = vmatprep.subr.mxu0 0.0
      %907 = vmatpush2.msra.mxu0 0.0
      %908 = vmatprep.subr.mxu0 0.0
      %909 = vmatpush2.msra.mxu0 0.0
      %910 = vmatprep.subr.mxu0 0.0
      %911 = vmatpush2.msra.mxu0 0.0
      %912 = vmatprep.subr.mxu0 0.0
      %913 = vmatpush2.msra.mxu0 0.0
      %914 = vmatprep.subr.mxu0 0.0
      %915 = vmatpush2.msra.mxu0 0.0
      %916 = vmatprep.subr.mxu0 0.0
      %917 = vmatpush2.msra.mxu0 0.0
      %918 = vmatprep.subr.mxu0 0.0
      %919 = vmatpush2.msra.mxu0 0.0
      %920 = vmatprep.subr.mxu0 0.0
      %921 = vmatpush2.msra.mxu0 0.0
      %922 = vmatprep.subr.mxu0 0.0
      %923 = vmatpush2.msra.mxu0 0.0
      %924 = vmatprep.subr.mxu0 0.0
      %925 = vmatpush2.msra.mxu0 0.0
      %926 = vmatprep.subr.mxu0 0.0
      %927 = vmatpush2.msra.mxu0 0.0
      %928 = vmatprep.subr.mxu0 0.0
      %929 = vmatpush2.msra.mxu0 0.0
      %930 = vmatprep.subr.mxu0 0.0
      %931 = vmatpush2.msra.mxu0 0.0
      %932 = vmatprep.subr.mxu0 0.0
      %933 = vmatpush2.msra.mxu0 0.0
      %934 = vmatprep.mubr.f32.mxu0 0.0
      %935 = vmatmul.mubr.f32.gmra.mxu0 %v823
      %v936 = vpop.f32.mrf.mxu0
      %v937 = vadd.f32 0.0, %v936
      %v938 = vpop.f32.mrf.mxu0
      %939 = vmatprep.mubr.f32.mxu0 0.0
      %940 = vmatmul.mubr.f32.gmra.mxu0 %v826
      %v941 = vpop.f32.mrf.mxu0
      %v942 = vadd.f32 0.0, %v941
      %v943 = vpop.f32.mrf.mxu0
      %944 = vmatprep.mubr.f32.mxu0 0.0
      %945 = vmatmul.mubr.f32.gmra.mxu0 %v829
      %v946 = vpop.f32.mrf.mxu0
      %v947 = vadd.f32 0.0, %v946
      %v948 = vpop.f32.mrf.mxu0
      %949 = vmatprep.mubr.f32.mxu0 0.0
      %950 = vmatmul.mubr.f32.gmra.mxu0 %v832
      %v951 = vpop.f32.mrf.mxu0
      %v952 = vadd.f32 0.0, %v951
      %v953 = vpop.f32.mrf.mxu0
      %954 = vmatprep.mubr.f32.mxu0 0.0
      %955 = vmatmul.mubr.f32.gmra.mxu0 %v835
      %v956 = vpop.f32.mrf.mxu0
      %v957 = vadd.f32 0.0, %v956
      %v958 = vpop.f32.mrf.mxu0
      %959 = vmatprep.mubr.f32.mxu0 0.0
      %960 = vmatmul.mubr.f32.gmra.mxu0 %v838
      %v961 = vpop.f32.mrf.mxu0
      %v962 = vadd.f32 0.0, %v961
      %v963 = vpop.f32.mrf.mxu0
      %964 = vmatprep.mubr.f32.mxu0 0.0
      %965 = vmatmul.mubr.f32.gmra.mxu0 %v841
      %v966 = vpop.f32.mrf.mxu0
      %v967 = vadd.f32 0.0, %v966
      %v968 = vpop.f32.mrf.mxu0
      %969 = vmatprep.mubr.f32.mxu0 0.0
      %970 = vmatmul.mubr.f32.gmra.mxu0 %v844
      %v971 = vpop.f32.mrf.mxu0
      %v972 = vadd.f32 0.0, %v971
      %v973 = vpop.f32.mrf.mxu0
      %974 = vmatprep.mubr.f32.mxu0 0.0
      %975 = vmatmul.mubr.f32.gmra.mxu0 %v847
      %v976 = vpop.f32.mrf.mxu0
      %v977 = vadd.f32 0.0, %v976
      %v978 = vpop.f32.mrf.mxu0
      %979 = vmatprep.mubr.f32.mxu0 0.0
      %980 = vmatmul.mubr.f32.gmra.mxu0 %v850
      %v981 = vpop.f32.mrf.mxu0
      %v982 = vadd.f32 0.0, %v981
      %v983 = vpop.f32.mrf.mxu0
      %984 = vmatprep.mubr.f32.mxu0 0.0
      %985 = vmatmul.mubr.f32.gmra.mxu0 %v853
      %v986 = vpop.f32.mrf.mxu0
      %v987 = vadd.f32 0.0, %v986
      %v988 = vpop.f32.mrf.mxu0
      %989 = vmatprep.mubr.f32.mxu0 0.0
      %990 = vmatmul.mubr.f32.gmra.mxu0 %v856
      %v991 = vpop.f32.mrf.mxu0
      %v992 = vadd.f32 0.0, %v991
      %v993 = vpop.f32.mrf.mxu0
      %994 = vmatprep.mubr.f32.mxu0 0.0
      %995 = vmatmul.mubr.f32.gmra.mxu0 %v859
      %v996 = vpop.f32.mrf.mxu0
      %v997 = vadd.f32 0.0, %v996
      %v998 = vpop.f32.mrf.mxu0
      %999 = vmatprep.mubr.f32.mxu0 0.0
      %1000 = vmatmul.mubr.f32.gmra.mxu0 %v862
      %v1001 = vpop.f32.mrf.mxu0
      %v1002 = vadd.f32 0.0, %v1001
      %v1003 = vpop.f32.mrf.mxu0
      %1004 = vmatprep.mubr.f32.mxu0 0.0
      %1005 = vmatmul.mubr.f32.gmra.mxu0 %v865
      %v1006 = vpop.f32.mrf.mxu0
      %v1007 = vadd.f32 0.0, %v1006
      %v1008 = vpop.f32.mrf.mxu0
      %1009 = vmatprep.mubr.f32.mxu0 0.0
      %1010 = vmatmul.mubr.f32.gmra.mxu0 %v868
      %v1011 = vpop.f32.mrf.mxu0
      %v1012 = vadd.f32 0.0, %v1011
      %v1013 = vpop.f32.mrf.mxu0
      %1014 = vdwg.mxu0
      %v1015 = vsel %vm470, %v788, 0.0
      %v1016 = vrot.slane %v1015, 4
      %v1017 = vadd.f32 %v1015, %v1016
      %v1018 = vrot.slane %v1017, 2
      %v1019 = vadd.f32 %v1017, %v1018
      %v1020 = vrot.slane %v1019, 1
      %v1021 = vadd.f32 %v1019, %v1020
      %v1023 = vsel %vm470, %v788, 0
      %v1026 = vsel %vm470, %v543, 0
      %v1029 = vsel %vm470, %v544, 0
      %v1032 = vsel %vm470, %v545, 0
      %v1035 = vsel %vm470, %v546, 0
      %v1038 = vsel %vm470, %v547, 0
      %v1041 = vsel %vm470, %v548, 0
      %v1044 = vsel %vm470, %v549, 0
      %v1047 = vsel %vm470, %v550, 0
      %v1050 = vsel %vm470, %v551, 0
      %v1053 = vsel %vm470, %v552, 0
      %v1056 = vsel %vm470, %v553, 0
      %v1059 = vsel %vm470, %v554, 0
      %v1062 = vsel %vm470, %v555, 0
      %v1065 = vsel %vm470, %v556, 0
      %v1068 = vsel %vm470, %v557, 0
      %v1071 = vsel %vm470, %v558, 0
      %1073 = vmatprep.subr.mxu0 0.0
      %1074 = vmatpush1.xpose.msra.mxu0 %v1071
      %1075 = vmatprep.subr.mxu0 0.0
      %1076 = vmatpush1.xpose.msra.mxu0 %v1068
      %1077 = vmatprep.subr.mxu0 0.0
      %1078 = vmatpush1.xpose.msra.mxu0 %v1065
      %1079 = vmatprep.subr.mxu0 0.0
      %1080 = vmatpush1.xpose.msra.mxu0 %v1062
      %1081 = vmatprep.subr.mxu0 0.0
      %1082 = vmatpush1.xpose.msra.mxu0 %v1059
      %1083 = vmatprep.subr.mxu0 0.0
      %1084 = vmatpush1.xpose.msra.mxu0 %v1056
      %1085 = vmatprep.subr.mxu0 0.0
      %1086 = vmatpush1.xpose.msra.mxu0 %v1053
      %1087 = vmatprep.subr.mxu0 0.0
      %1088 = vmatpush1.xpose.msra.mxu0 %v1050
      %1089 = vmatprep.subr.mxu0 0.0
      %1090 = vmatpush1.xpose.msra.mxu0 %v1047
      %1091 = vmatprep.subr.mxu0 0.0
      %1092 = vmatpush1.xpose.msra.mxu0 %v1044
      %1093 = vmatprep.subr.mxu0 0.0
      %1094 = vmatpush1.xpose.msra.mxu0 %v1041
      %1095 = vmatprep.subr.mxu0 0.0
      %1096 = vmatpush1.xpose.msra.mxu0 %v1038
      %1097 = vmatprep.subr.mxu0 0.0
      %1098 = vmatpush1.xpose.msra.mxu0 %v1035
      %1099 = vmatprep.subr.mxu0 0.0
      %1100 = vmatpush1.xpose.msra.mxu0 %v1032
      %1101 = vmatprep.subr.mxu0 0.0
      %1102 = vmatpush1.xpose.msra.mxu0 %v1029
      %1103 = vmatprep.subr.mxu0 0.0
      %1104 = vmatpush1.xpose.msra.mxu0 %v1026
      %1105 = vmatprep.subr.mxu0 0.0
      %1106 = vmatpush2.xpose.msra.mxu0 0.0
      %1107 = vmatprep.subr.mxu0 0.0
      %1108 = vmatpush2.xpose.msra.mxu0 0.0
      %1109 = vmatprep.subr.mxu0 0.0
      %1110 = vmatpush2.xpose.msra.mxu0 0.0
      %1111 = vmatprep.subr.mxu0 0.0
      %1112 = vmatpush2.xpose.msra.mxu0 0.0
      %1113 = vmatprep.subr.mxu0 0.0
      %1114 = vmatpush2.xpose.msra.mxu0 0.0
      %1115 = vmatprep.subr.mxu0 0.0
      %1116 = vmatpush2.xpose.msra.mxu0 0.0
      %1117 = vmatprep.subr.mxu0 0.0
      %1118 = vmatpush2.xpose.msra.mxu0 0.0
      %1119 = vmatprep.subr.mxu0 0.0
      %1120 = vmatpush2.xpose.msra.mxu0 0.0
      %1121 = vmatprep.subr.mxu0 0.0
      %1122 = vmatpush2.xpose.msra.mxu0 0.0
      %1123 = vmatprep.subr.mxu0 0.0
      %1124 = vmatpush2.xpose.msra.mxu0 0.0
      %1125 = vmatprep.subr.mxu0 0.0
      %1126 = vmatpush2.xpose.msra.mxu0 0.0
      %1127 = vmatprep.subr.mxu0 0.0
      %1128 = vmatpush2.xpose.msra.mxu0 0.0
      %1129 = vmatprep.subr.mxu0 0.0
      %1130 = vmatpush2.xpose.msra.mxu0 0.0
      %1131 = vmatprep.subr.mxu0 0.0
      %1132 = vmatpush2.xpose.msra.mxu0 0.0
      %1133 = vmatprep.subr.mxu0 0.0
      %1134 = vmatpush2.xpose.msra.mxu0 0.0
      %1135 = vmatprep.subr.mxu0 0.0
      %1136 = vmatpush2.xpose.msra.mxu0 0.0
      %1137 = vmatprep.mubr.f32.mxu0 0.0
      %1138 = vmatmul.mubr.f32.gmra.mxu0 %v1023
      %v1139 = vpop.f32.mrf.mxu0
      %v1140 = vadd.f32 0.0, %v1139
      %v1141 = vpop.f32.mrf.mxu0
      %1142 = vdwg.mxu0
      %v1143 = vmul.f32 %v706, %v706
      %v1144 = vsub.f32 1.0, %v1143
      %v1145 = vmul.f32 %v1140, %v1144
      %1146 = vxpose.xlu0.b32.start [1/16] %v490, 128
      %1147 = vxpose.xlu0.b32.cont [2/16] 0.0, 128
      %1148 = vxpose.xlu0.b32.cont [3/16] 0.0, 128
      %1149 = vxpose.xlu0.b32.cont [4/16] 0.0, 128
      %1150 = vxpose.xlu0.b32.cont [5/16] 0.0, 128
      %1151 = vxpose.xlu0.b32.cont [6/16] 0.0, 128
      %1152 = vxpose.xlu0.b32.cont [7/16] 0.0, 128
      %1153 = vxpose.xlu0.b32.cont [8/16] 0.0, 128
      %1154 = vxpose.xlu0.b32.cont [9/16] 0.0, 128
      %1155 = vxpose.xlu0.b32.cont [10/16] 0.0, 128
      %1156 = vxpose.xlu0.b32.cont [11/16] 0.0, 128
      %1157 = vxpose.xlu0.b32.cont [12/16] 0.0, 128
      %1158 = vxpose.xlu0.b32.cont [13/16] 0.0, 128
      %1159 = vxpose.xlu0.b32.cont [14/16] 0.0, 128
      %1160 = vxpose.xlu0.b32.cont [15/16] 0.0, 128
      %1161 = vxpose.xlu0.b32.end [16/16] 0.0, 128
      %v1162 = vpop.trf.xlu0
      %v1163 = vpop.trf.xlu0
      %v1164 = vpop.trf.xlu0
      %v1165 = vpop.trf.xlu0
      %v1166 = vpop.trf.xlu0
      %v1167 = vpop.trf.xlu0
      %v1168 = vpop.trf.xlu0
      %v1169 = vpop.trf.xlu0
      %v1170 = vpop.trf.xlu0
      %v1171 = vpop.trf.xlu0
      %v1172 = vpop.trf.xlu0
      %v1173 = vpop.trf.xlu0
      %v1174 = vpop.trf.xlu0
      %v1175 = vpop.trf.xlu0
      %v1176 = vpop.trf.xlu0
      %v1177 = vpop.trf.xlu0
      %1178 = vxpose.xlu0.b32.start [1/16] %v491, 128
      %1179 = vxpose.xlu0.b32.cont [2/16] 0.0, 128
      %1180 = vxpose.xlu0.b32.cont [3/16] 0.0, 128
      %1181 = vxpose.xlu0.b32.cont [4/16] 0.0, 128
      %1182 = vxpose.xlu0.b32.cont [5/16] 0.0, 128
      %1183 = vxpose.xlu0.b32.cont [6/16] 0.0, 128
      %1184 = vxpose.xlu0.b32.cont [7/16] 0.0, 128
      %1185 = vxpose.xlu0.b32.cont [8/16] 0.0, 128
      %1186 = vxpose.xlu0.b32.cont [9/16] 0.0, 128
      %1187 = vxpose.xlu0.b32.cont [10/16] 0.0, 128
      %1188 = vxpose.xlu0.b32.cont [11/16] 0.0, 128
      %1189 = vxpose.xlu0.b32.cont [12/16] 0.0, 128
      %1190 = vxpose.xlu0.b32.cont [13/16] 0.0, 128
      %1191 = vxpose.xlu0.b32.cont [14/16] 0.0, 128
      %1192 = vxpose.xlu0.b32.cont [15/16] 0.0, 128
      %1193 = vxpose.xlu0.b32.end [16/16] 0.0, 128
      %v1194 = vpop.trf.xlu0
      %v1195 = vpop.trf.xlu0
      %v1196 = vpop.trf.xlu0
      %v1197 = vpop.trf.xlu0
      %v1198 = vpop.trf.xlu0
      %v1199 = vpop.trf.xlu0
      %v1200 = vpop.trf.xlu0
      %v1201 = vpop.trf.xlu0
      %v1202 = vpop.trf.xlu0
      %v1203 = vpop.trf.xlu0
      %v1204 = vpop.trf.xlu0
      %v1205 = vpop.trf.xlu0
      %v1206 = vpop.trf.xlu0
      %v1207 = vpop.trf.xlu0
      %v1208 = vpop.trf.xlu0
      %v1209 = vpop.trf.xlu0
      %1210 = vxpose.xlu0.b32.start [1/16] %v492, 128
      %1211 = vxpose.xlu0.b32.cont [2/16] 0.0, 128
      %1212 = vxpose.xlu0.b32.cont [3/16] 0.0, 128
      %1213 = vxpose.xlu0.b32.cont [4/16] 0.0, 128
      %1214 = vxpose.xlu0.b32.cont [5/16] 0.0, 128
      %1215 = vxpose.xlu0.b32.cont [6/16] 0.0, 128
      %1216 = vxpose.xlu0.b32.cont [7/16] 0.0, 128
      %1217 = vxpose.xlu0.b32.cont [8/16] 0.0, 128
      %1218 = vxpose.xlu0.b32.cont [9/16] 0.0, 128
      %1219 = vxpose.xlu0.b32.cont [10/16] 0.0, 128
      %1220 = vxpose.xlu0.b32.cont [11/16] 0.0, 128
      %1221 = vxpose.xlu0.b32.cont [12/16] 0.0, 128
      %1222 = vxpose.xlu0.b32.cont [13/16] 0.0, 128
      %1223 = vxpose.xlu0.b32.cont [14/16] 0.0, 128
      %1224 = vxpose.xlu0.b32.cont [15/16] 0.0, 128
      %1225 = vxpose.xlu0.b32.end [16/16] 0.0, 128
      %v1226 = vpop.trf.xlu0
      %v1227 = vpop.trf.xlu0
      %v1228 = vpop.trf.xlu0
      %v1229 = vpop.trf.xlu0
      %v1230 = vpop.trf.xlu0
      %v1231 = vpop.trf.xlu0
      %v1232 = vpop.trf.xlu0
      %v1233 = vpop.trf.xlu0
      %v1234 = vpop.trf.xlu0
      %v1235 = vpop.trf.xlu0
      %v1236 = vpop.trf.xlu0
      %v1237 = vpop.trf.xlu0
      %v1238 = vpop.trf.xlu0
      %v1239 = vpop.trf.xlu0
      %v1240 = vpop.trf.xlu0
      %v1241 = vpop.trf.xlu0
      %v1243 = vsel %vm821, %v1162, 0
      %v1246 = vsel %vm821, %v1163, 0
      %v1249 = vsel %vm821, %v1164, 0
      %v1252 = vsel %vm821, %v1165, 0
      %v1255 = vsel %vm821, %v1166, 0
      %v1258 = vsel %vm821, %v1167, 0
      %v1261 = vsel %vm821, %v1168, 0
      %v1264 = vsel %vm821, %v1169, 0
      %v1267 = vsel %vm821, %v1170, 0
      %v1270 = vsel %vm821, %v1171, 0
      %v1273 = vsel %vm821, %v1172, 0
      %v1276 = vsel %vm821, %v1173, 0
      %v1279 = vsel %vm821, %v1174, 0
      %v1282 = vsel %vm821, %v1175, 0
      %v1285 = vsel %vm821, %v1176, 0
      %v1288 = vsel %vm821, %v1177, 0
      %v1291 = vsel %vm821, %v1194, 0
      %v1294 = vsel %vm821, %v1195, 0
      %v1297 = vsel %vm821, %v1196, 0
      %v1300 = vsel %vm821, %v1197, 0
      %v1303 = vsel %vm821, %v1198, 0
      %v1306 = vsel %vm821, %v1199, 0
      %v1309 = vsel %vm821, %v1200, 0
      %v1312 = vsel %vm821, %v1201, 0
      %v1315 = vsel %vm821, %v1202, 0
      %v1318 = vsel %vm821, %v1203, 0
      %v1321 = vsel %vm821, %v1204, 0
      %v1324 = vsel %vm821, %v1205, 0
      %v1327 = vsel %vm821, %v1206, 0
      %v1330 = vsel %vm821, %v1207, 0
      %v1333 = vsel %vm821, %v1208, 0
      %v1336 = vsel %vm821, %v1209, 0
      %v1339 = vsel %vm821, %v1226, 0
      %v1342 = vsel %vm821, %v1227, 0
      %v1345 = vsel %vm821, %v1228, 0
      %v1348 = vsel %vm821, %v1229, 0
      %v1351 = vsel %vm821, %v1230, 0
      %v1354 = vsel %vm821, %v1231, 0
      %v1357 = vsel %vm821, %v1232, 0
      %v1360 = vsel %vm821, %v1233, 0
      %v1363 = vsel %vm821, %v1234, 0
      %v1366 = vsel %vm821, %v1235, 0
      %v1369 = vsel %vm821, %v1236, 0
      %v1372 = vsel %vm821, %v1237, 0
      %v1375 = vsel %vm821, %v1238, 0
      %v1378 = vsel %vm821, %v1239, 0
      %v1381 = vsel %vm821, %v1240, 0
      %v1384 = vsel %vm821, %v1241, 0
      %1386 = vmatprep.subr.mxu0 0.0
      %1387 = vmatpush1.msra.mxu0 0.0
      %1388 = vmatprep.subr.mxu0 0.0
      %1389 = vmatpush1.msra.mxu0 0.0
      %1390 = vmatprep.subr.mxu0 0.0
      %1391 = vmatpush1.msra.mxu0 0.0
      %1392 = vmatprep.subr.mxu0 0.0
      %1393 = vmatpush1.msra.mxu0 0.0
      %1394 = vmatprep.subr.mxu0 0.0
      %1395 = vmatpush1.msra.mxu0 0.0
      %1396 = vmatprep.subr.mxu0 0.0
      %1397 = vmatpush1.msra.mxu0 0.0
      %1398 = vmatprep.subr.mxu0 0.0
      %1399 = vmatpush1.msra.mxu0 0.0
      %1400 = vmatprep.subr.mxu0 0.0
      %1401 = vmatpush1.msra.mxu0 0.0
      %1402 = vmatprep.subr.mxu0 0.0
      %1403 = vmatpush1.msra.mxu0 0.0
      %1404 = vmatprep.subr.mxu0 0.0
      %1405 = vmatpush1.msra.mxu0 0.0
      %1406 = vmatprep.subr.mxu0 0.0
      %1407 = vmatpush1.msra.mxu0 0.0
      %1408 = vmatprep.subr.mxu0 0.0
      %1409 = vmatpush1.msra.mxu0 0.0
      %1410 = vmatprep.subr.mxu0 0.0
      %1411 = vmatpush1.msra.mxu0 0.0
      %1412 = vmatprep.subr.mxu0 0.0
      %1413 = vmatpush1.msra.mxu0 0.0
      %1414 = vmatprep.subr.mxu0 0.0
      %1415 = vmatpush1.msra.mxu0 0.0
      %1416 = vmatprep.subr.mxu0 0.0
      %1417 = vmatpush1.msra.mxu0 %v1145
      %1418 = vmatprep.subr.mxu0 0.0
      %1419 = vmatpush2.msra.mxu0 0.0
      %1420 = vmatprep.subr.mxu0 0.0
      %1421 = vmatpush2.msra.mxu0 0.0
      %1422 = vmatprep.subr.mxu0 0.0
      %1423 = vmatpush2.msra.mxu0 0.0
      %1424 = vmatprep.subr.mxu0 0.0
      %1425 = vmatpush2.msra.mxu0 0.0
      %1426 = vmatprep.subr.mxu0 0.0
      %1427 = vmatpush2.msra.mxu0 0.0
      %1428 = vmatprep.subr.mxu0 0.0
      %1429 = vmatpush2.msra.mxu0 0.0
      %1430 = vmatprep.subr.mxu0 0.0
      %1431 = vmatpush2.msra.mxu0 0.0
      %1432 = vmatprep.subr.mxu0 0.0
      %1433 = vmatpush2.msra.mxu0 0.0
      %1434 = vmatprep.subr.mxu0 0.0
      %1435 = vmatpush2.msra.mxu0 0.0
      %1436 = vmatprep.subr.mxu0 0.0
      %1437 = vmatpush2.msra.mxu0 0.0
      %1438 = vmatprep.subr.mxu0 0.0
      %1439 = vmatpush2.msra.mxu0 0.0
      %1440 = vmatprep.subr.mxu0 0.0
      %1441 = vmatpush2.msra.mxu0 0.0
      %1442 = vmatprep.subr.mxu0 0.0
      %1443 = vmatpush2.msra.mxu0 0.0
      %1444 = vmatprep.subr.mxu0 0.0
      %1445 = vmatpush2.msra.mxu0 0.0
      %1446 = vmatprep.subr.mxu0 0.0
      %1447 = vmatpush2.msra.mxu0 0.0
      %1448 = vmatprep.subr.mxu0 0.0
      %1449 = vmatpush2.msra.mxu0 0.0
      %1450 = vmatprep.mubr.f32.mxu0 0.0
      %1451 = vmatmul.mubr.f32.gmra.mxu0 %v1243
      %v1452 = vpop.f32.mrf.mxu0
      %v1453 = vadd.f32 0.0, %v1452
      %v1454 = vpop.f32.mrf.mxu0
      %1455 = vmatprep.mubr.f32.mxu0 0.0
      %1456 = vmatmul.mubr.f32.gmra.mxu0 %v1246
      %v1457 = vpop.f32.mrf.mxu0
      %v1458 = vadd.f32 0.0, %v1457
      %v1459 = vpop.f32.mrf.mxu0
      %1460 = vmatprep.mubr.f32.mxu0 0.0
      %1461 = vmatmul.mubr.f32.gmra.mxu0 %v1249
      %v1462 = vpop.f32.mrf.mxu0
      %v1463 = vadd.f32 0.0, %v1462
      %v1464 = vpop.f32.mrf.mxu0
      %1465 = vmatprep.mubr.f32.mxu0 0.0
      %1466 = vmatmul.mubr.f32.gmra.mxu0 %v1252
      %v1467 = vpop.f32.mrf.mxu0
      %v1468 = vadd.f32 0.0, %v1467
      %v1469 = vpop.f32.mrf.mxu0
      %1470 = vmatprep.mubr.f32.mxu0 0.0
      %1471 = vmatmul.mubr.f32.gmra.mxu0 %v1255
      %v1472 = vpop.f32.mrf.mxu0
      %v1473 = vadd.f32 0.0, %v1472
      %v1474 = vpop.f32.mrf.mxu0
      %1475 = vmatprep.mubr.f32.mxu0 0.0
      %1476 = vmatmul.mubr.f32.gmra.mxu0 %v1258
      %v1477 = vpop.f32.mrf.mxu0
      %v1478 = vadd.f32 0.0, %v1477
      %v1479 = vpop.f32.mrf.mxu0
      %1480 = vmatprep.mubr.f32.mxu0 0.0
      %1481 = vmatmul.mubr.f32.gmra.mxu0 %v1261
      %v1482 = vpop.f32.mrf.mxu0
      %v1483 = vadd.f32 0.0, %v1482
      %v1484 = vpop.f32.mrf.mxu0
      %1485 = vmatprep.mubr.f32.mxu0 0.0
      %1486 = vmatmul.mubr.f32.gmra.mxu0 %v1264
      %v1487 = vpop.f32.mrf.mxu0
      %v1488 = vadd.f32 0.0, %v1487
      %v1489 = vpop.f32.mrf.mxu0
      %1490 = vmatprep.mubr.f32.mxu0 0.0
      %1491 = vmatmul.mubr.f32.gmra.mxu0 %v1267
      %v1492 = vpop.f32.mrf.mxu0
      %v1493 = vadd.f32 0.0, %v1492
      %v1494 = vpop.f32.mrf.mxu0
      %1495 = vmatprep.mubr.f32.mxu0 0.0
      %1496 = vmatmul.mubr.f32.gmra.mxu0 %v1270
      %v1497 = vpop.f32.mrf.mxu0
      %v1498 = vadd.f32 0.0, %v1497
      %v1499 = vpop.f32.mrf.mxu0
      %1500 = vmatprep.mubr.f32.mxu0 0.0
      %1501 = vmatmul.mubr.f32.gmra.mxu0 %v1273
      %v1502 = vpop.f32.mrf.mxu0
      %v1503 = vadd.f32 0.0, %v1502
      %v1504 = vpop.f32.mrf.mxu0
      %1505 = vmatprep.mubr.f32.mxu0 0.0
      %1506 = vmatmul.mubr.f32.gmra.mxu0 %v1276
      %v1507 = vpop.f32.mrf.mxu0
      %v1508 = vadd.f32 0.0, %v1507
      %v1509 = vpop.f32.mrf.mxu0
      %1510 = vmatprep.mubr.f32.mxu0 0.0
      %1511 = vmatmul.mubr.f32.gmra.mxu0 %v1279
      %v1512 = vpop.f32.mrf.mxu0
      %v1513 = vadd.f32 0.0, %v1512
      %v1514 = vpop.f32.mrf.mxu0
      %1515 = vmatprep.mubr.f32.mxu0 0.0
      %1516 = vmatmul.mubr.f32.gmra.mxu0 %v1282
      %v1517 = vpop.f32.mrf.mxu0
      %v1518 = vadd.f32 0.0, %v1517
      %v1519 = vpop.f32.mrf.mxu0
      %1520 = vmatprep.mubr.f32.mxu0 0.0
      %1521 = vmatmul.mubr.f32.gmra.mxu0 %v1285
      %v1522 = vpop.f32.mrf.mxu0
      %v1523 = vadd.f32 0.0, %v1522
      %v1524 = vpop.f32.mrf.mxu0
      %1525 = vmatprep.mubr.f32.mxu0 0.0
      %1526 = vmatmul.mubr.f32.gmra.mxu0 %v1288
      %v1527 = vpop.f32.mrf.mxu0
      %v1528 = vadd.f32 0.0, %v1527
      %v1529 = vpop.f32.mrf.mxu0
      %1530 = vmatprep.mubr.f32.mxu0 0.0
      %1531 = vmatmul.mubr.f32.gmra.mxu0 %v1291
      %v1532 = vpop.f32.mrf.mxu0
      %v1533 = vadd.f32 0.0, %v1532
      %v1534 = vpop.f32.mrf.mxu0
      %1535 = vmatprep.mubr.f32.mxu0 0.0
      %1536 = vmatmul.mubr.f32.gmra.mxu0 %v1294
      %v1537 = vpop.f32.mrf.mxu0
      %v1538 = vadd.f32 0.0, %v1537
      %v1539 = vpop.f32.mrf.mxu0
      %1540 = vmatprep.mubr.f32.mxu0 0.0
      %1541 = vmatmul.mubr.f32.gmra.mxu0 %v1297
      %v1542 = vpop.f32.mrf.mxu0
      %v1543 = vadd.f32 0.0, %v1542
      %v1544 = vpop.f32.mrf.mxu0
      %1545 = vmatprep.mubr.f32.mxu0 0.0
      %1546 = vmatmul.mubr.f32.gmra.mxu0 %v1300
      %v1547 = vpop.f32.mrf.mxu0
      %v1548 = vadd.f32 0.0, %v1547
      %v1549 = vpop.f32.mrf.mxu0
      %1550 = vmatprep.mubr.f32.mxu0 0.0
      %1551 = vmatmul.mubr.f32.gmra.mxu0 %v1303
      %v1552 = vpop.f32.mrf.mxu0
      %v1553 = vadd.f32 0.0, %v1552
      %v1554 = vpop.f32.mrf.mxu0
      %1555 = vmatprep.mubr.f32.mxu0 0.0
      %1556 = vmatmul.mubr.f32.gmra.mxu0 %v1306
      %v1557 = vpop.f32.mrf.mxu0
      %v1558 = vadd.f32 0.0, %v1557
      %v1559 = vpop.f32.mrf.mxu0
      %1560 = vmatprep.mubr.f32.mxu0 0.0
      %1561 = vmatmul.mubr.f32.gmra.mxu0 %v1309
      %v1562 = vpop.f32.mrf.mxu0
      %v1563 = vadd.f32 0.0, %v1562
      %v1564 = vpop.f32.mrf.mxu0
      %1565 = vmatprep.mubr.f32.mxu0 0.0
      %1566 = vmatmul.mubr.f32.gmra.mxu0 %v1312
      %v1567 = vpop.f32.mrf.mxu0
      %v1568 = vadd.f32 0.0, %v1567
      %v1569 = vpop.f32.mrf.mxu0
      %1570 = vmatprep.mubr.f32.mxu0 0.0
      %1571 = vmatmul.mubr.f32.gmra.mxu0 %v1315
      %v1572 = vpop.f32.mrf.mxu0
      %v1573 = vadd.f32 0.0, %v1572
      %v1574 = vpop.f32.mrf.mxu0
      %1575 = vmatprep.mubr.f32.mxu0 0.0
      %1576 = vmatmul.mubr.f32.gmra.mxu0 %v1318
      %v1577 = vpop.f32.mrf.mxu0
      %v1578 = vadd.f32 0.0, %v1577
      %v1579 = vpop.f32.mrf.mxu0
      %1580 = vmatprep.mubr.f32.mxu0 0.0
      %1581 = vmatmul.mubr.f32.gmra.mxu0 %v1321
      %v1582 = vpop.f32.mrf.mxu0
      %v1583 = vadd.f32 0.0, %v1582
      %v1584 = vpop.f32.mrf.mxu0
      %1585 = vmatprep.mubr.f32.mxu0 0.0
      %1586 = vmatmul.mubr.f32.gmra.mxu0 %v1324
      %v1587 = vpop.f32.mrf.mxu0
      %v1588 = vadd.f32 0.0, %v1587
      %v1589 = vpop.f32.mrf.mxu0
      %1590 = vmatprep.mubr.f32.mxu0 0.0
      %1591 = vmatmul.mubr.f32.gmra.mxu0 %v1327
      %v1592 = vpop.f32.mrf.mxu0
      %v1593 = vadd.f32 0.0, %v1592
      %v1594 = vpop.f32.mrf.mxu0
      %1595 = vmatprep.mubr.f32.mxu0 0.0
      %1596 = vmatmul.mubr.f32.gmra.mxu0 %v1330
      %v1597 = vpop.f32.mrf.mxu0
      %v1598 = vadd.f32 0.0, %v1597
      %v1599 = vpop.f32.mrf.mxu0
      %1600 = vmatprep.mubr.f32.mxu0 0.0
      %1601 = vmatmul.mubr.f32.gmra.mxu0 %v1333
      %v1602 = vpop.f32.mrf.mxu0
      %v1603 = vadd.f32 0.0, %v1602
      %v1604 = vpop.f32.mrf.mxu0
      %1605 = vmatprep.mubr.f32.mxu0 0.0
      %1606 = vmatmul.mubr.f32.gmra.mxu0 %v1336
      %v1607 = vpop.f32.mrf.mxu0
      %v1608 = vadd.f32 0.0, %v1607
      %v1609 = vpop.f32.mrf.mxu0
      %1610 = vmatprep.mubr.f32.mxu0 0.0
      %1611 = vmatmul.mubr.f32.gmra.mxu0 %v1339
      %v1612 = vpop.f32.mrf.mxu0
      %v1613 = vadd.f32 0.0, %v1612
      %v1614 = vpop.f32.mrf.mxu0
      %1615 = vmatprep.mubr.f32.mxu0 0.0
      %1616 = vmatmul.mubr.f32.gmra.mxu0 %v1342
      %v1617 = vpop.f32.mrf.mxu0
      %v1618 = vadd.f32 0.0, %v1617
      %v1619 = vpop.f32.mrf.mxu0
      %1620 = vmatprep.mubr.f32.mxu0 0.0
      %1621 = vmatmul.mubr.f32.gmra.mxu0 %v1345
      %v1622 = vpop.f32.mrf.mxu0
      %v1623 = vadd.f32 0.0, %v1622
      %v1624 = vpop.f32.mrf.mxu0
      %1625 = vmatprep.mubr.f32.mxu0 0.0
      %1626 = vmatmul.mubr.f32.gmra.mxu0 %v1348
      %v1627 = vpop.f32.mrf.mxu0
      %v1628 = vadd.f32 0.0, %v1627
      %v1629 = vpop.f32.mrf.mxu0
      %1630 = vmatprep.mubr.f32.mxu0 0.0
      %1631 = vmatmul.mubr.f32.gmra.mxu0 %v1351
      %v1632 = vpop.f32.mrf.mxu0
      %v1633 = vadd.f32 0.0, %v1632
      %v1634 = vpop.f32.mrf.mxu0
      %1635 = vmatprep.mubr.f32.mxu0 0.0
      %1636 = vmatmul.mubr.f32.gmra.mxu0 %v1354
      %v1637 = vpop.f32.mrf.mxu0
      %v1638 = vadd.f32 0.0, %v1637
      %v1639 = vpop.f32.mrf.mxu0
      %1640 = vmatprep.mubr.f32.mxu0 0.0
      %1641 = vmatmul.mubr.f32.gmra.mxu0 %v1357
      %v1642 = vpop.f32.mrf.mxu0
      %v1643 = vadd.f32 0.0, %v1642
      %v1644 = vpop.f32.mrf.mxu0
      %1645 = vmatprep.mubr.f32.mxu0 0.0
      %1646 = vmatmul.mubr.f32.gmra.mxu0 %v1360
      %v1647 = vpop.f32.mrf.mxu0
      %v1648 = vadd.f32 0.0, %v1647
      %v1649 = vpop.f32.mrf.mxu0
      %1650 = vmatprep.mubr.f32.mxu0 0.0
      %1651 = vmatmul.mubr.f32.gmra.mxu0 %v1363
      %v1652 = vpop.f32.mrf.mxu0
      %v1653 = vadd.f32 0.0, %v1652
      %v1654 = vpop.f32.mrf.mxu0
      %1655 = vmatprep.mubr.f32.mxu0 0.0
      %1656 = vmatmul.mubr.f32.gmra.mxu0 %v1366
      %v1657 = vpop.f32.mrf.mxu0
      %v1658 = vadd.f32 0.0, %v1657
      %v1659 = vpop.f32.mrf.mxu0
      %1660 = vmatprep.mubr.f32.mxu0 0.0
      %1661 = vmatmul.mubr.f32.gmra.mxu0 %v1369
      %v1662 = vpop.f32.mrf.mxu0
      %v1663 = vadd.f32 0.0, %v1662
      %v1664 = vpop.f32.mrf.mxu0
      %1665 = vmatprep.mubr.f32.mxu0 0.0
      %1666 = vmatmul.mubr.f32.gmra.mxu0 %v1372
      %v1667 = vpop.f32.mrf.mxu0
      %v1668 = vadd.f32 0.0, %v1667
      %v1669 = vpop.f32.mrf.mxu0
      %1670 = vmatprep.mubr.f32.mxu0 0.0
      %1671 = vmatmul.mubr.f32.gmra.mxu0 %v1375
      %v1672 = vpop.f32.mrf.mxu0
      %v1673 = vadd.f32 0.0, %v1672
      %v1674 = vpop.f32.mrf.mxu0
      %1675 = vmatprep.mubr.f32.mxu0 0.0
      %1676 = vmatmul.mubr.f32.gmra.mxu0 %v1378
      %v1677 = vpop.f32.mrf.mxu0
      %v1678 = vadd.f32 0.0, %v1677
      %v1679 = vpop.f32.mrf.mxu0
      %1680 = vmatprep.mubr.f32.mxu0 0.0
      %1681 = vmatmul.mubr.f32.gmra.mxu0 %v1381
      %v1682 = vpop.f32.mrf.mxu0
      %v1683 = vadd.f32 0.0, %v1682
      %v1684 = vpop.f32.mrf.mxu0
      %1685 = vmatprep.mubr.f32.mxu0 0.0
      %1686 = vmatmul.mubr.f32.gmra.mxu0 %v1384
      %v1687 = vpop.f32.mrf.mxu0
      %v1688 = vadd.f32 0.0, %v1687
      %v1689 = vpop.f32.mrf.mxu0
      %1690 = vdwg.mxu0
      %v1691 = vrot.slane %v1145, 4
      %v1692 = vadd.f32 %v1145, %v1691
      %v1693 = vrot.slane %v1692, 2
      %v1694 = vadd.f32 %v1692, %v1693
      %v1695 = vrot.slane %v1694, 1
      %v1696 = vadd.f32 %v1694, %v1695
      %v1697 = vmul.f32 %v1453, 0.01
      %v1698 = vmul.f32 %v1458, 0.01
      %v1699 = vmul.f32 %v1463, 0.01
      %v1700 = vmul.f32 %v1468, 0.01
      %v1701 = vmul.f32 %v1473, 0.01
      %v1702 = vmul.f32 %v1478, 0.01
      %v1703 = vmul.f32 %v1483, 0.01
      %v1704 = vmul.f32 %v1488, 0.01
      %v1705 = vmul.f32 %v1493, 0.01
      %v1706 = vmul.f32 %v1498, 0.01
      %v1707 = vmul.f32 %v1503, 0.01
      %v1708 = vmul.f32 %v1508, 0.01
      %v1709 = vmul.f32 %v1513, 0.01
      %v1710 = vmul.f32 %v1518, 0.01
      %v1711 = vmul.f32 %v1523, 0.01
      %v1712 = vmul.f32 %v1528, 0.01
      %v1713 = vmul.f32 %v1533, 0.01
      %v1714 = vmul.f32 %v1538, 0.01
      %v1715 = vmul.f32 %v1543, 0.01
      %v1716 = vmul.f32 %v1548, 0.01
      %v1717 = vmul.f32 %v1553, 0.01
      %v1718 = vmul.f32 %v1558, 0.01
      %v1719 = vmul.f32 %v1563, 0.01
      %v1720 = vmul.f32 %v1568, 0.01
      %v1721 = vmul.f32 %v1573, 0.01
      %v1722 = vmul.f32 %v1578, 0.01
      %v1723 = vmul.f32 %v1583, 0.01
      %v1724 = vmul.f32 %v1588, 0.01
      %v1725 = vmul.f32 %v1593, 0.01
      %v1726 = vmul.f32 %v1598, 0.01
      %v1727 = vmul.f32 %v1603, 0.01
      %v1728 = vmul.f32 %v1608, 0.01
      %v1729 = vmul.f32 %v1613, 0.01
      %v1730 = vmul.f32 %v1618, 0.01
      %v1731 = vmul.f32 %v1623, 0.01
      %v1732 = vmul.f32 %v1628, 0.01
      %v1733 = vmul.f32 %v1633, 0.01
      %v1734 = vmul.f32 %v1638, 0.01
      %v1735 = vmul.f32 %v1643, 0.01
      %v1736 = vmul.f32 %v1648, 0.01
      %v1737 = vmul.f32 %v1653, 0.01
      %v1738 = vmul.f32 %v1658, 0.01
      %v1739 = vmul.f32 %v1663, 0.01
      %v1740 = vmul.f32 %v1668, 0.01
      %v1741 = vmul.f32 %v1673, 0.01
      %v1742 = vmul.f32 %v1678, 0.01
      %v1743 = vmul.f32 %v1683, 0.01
      %v1744 = vmul.f32 %v1688, 0.01
      %v1745 = vsub.f32 %v494, %v1697
      %v1746 = vsub.f32 %v495, %v1698
      %v1747 = vsub.f32 %v496, %v1699
      %v1748 = vsub.f32 %v497, %v1700
      %v1749 = vsub.f32 %v498, %v1701
      %v1750 = vsub.f32 %v499, %v1702
      %v1751 = vsub.f32 %v500, %v1703
      %v1752 = vsub.f32 %v501, %v1704
      %v1753 = vsub.f32 %v502, %v1705
      %v1754 = vsub.f32 %v503, %v1706
      %v1755 = vsub.f32 %v504, %v1707
      %v1756 = vsub.f32 %v505, %v1708
      %v1757 = vsub.f32 %v506, %v1709
      %v1758 = vsub.f32 %v507, %v1710
      %v1759 = vsub.f32 %v508, %v1711
      %v1760 = vsub.f32 %v509, %v1712
      %v1761 = vsub.f32 %v510, %v1713
      %v1762 = vsub.f32 %v511, %v1714
      %v1763 = vsub.f32 %v512, %v1715
      %v1764 = vsub.f32 %v513, %v1716
      %v1765 = vsub.f32 %v514, %v1717
      %v1766 = vsub.f32 %v515, %v1718
      %v1767 = vsub.f32 %v516, %v1719
      %v1768 = vsub.f32 %v517, %v1720
      %v1769 = vsub.f32 %v518, %v1721
      %v1770 = vsub.f32 %v519, %v1722
      %v1771 = vsub.f32 %v520, %v1723
      %v1772 = vsub.f32 %v521, %v1724
      %v1773 = vsub.f32 %v522, %v1725
      %v1774 = vsub.f32 %v523, %v1726
      %v1775 = vsub.f32 %v524, %v1727
      %v1776 = vsub.f32 %v525, %v1728
      %v1777 = vsub.f32 %v526, %v1729
      %v1778 = vsub.f32 %v527, %v1730
      %v1779 = vsub.f32 %v528, %v1731
      %v1780 = vsub.f32 %v529, %v1732
      %v1781 = vsub.f32 %v530, %v1733
      %v1782 = vsub.f32 %v531, %v1734
      %v1783 = vsub.f32 %v532, %v1735
      %v1784 = vsub.f32 %v533, %v1736
      %v1785 = vsub.f32 %v534, %v1737
      %v1786 = vsub.f32 %v535, %v1738
      %v1787 = vsub.f32 %v536, %v1739
      %v1788 = vsub.f32 %v537, %v1740
      %v1789 = vsub.f32 %v538, %v1741
      %v1790 = vsub.f32 %v539, %v1742
      %v1791 = vsub.f32 %v540, %v1743
      %v1792 = vsub.f32 %v541, %v1744
      %1793 = vst [vmem:[#allocation2] sm:$0xff] %v1745
      %1794 = vst [vmem:[#allocation2 + $0x8] sm:$0xff] %v1746
      %1795 = vst [vmem:[#allocation2 + $0x10] sm:$0xff] %v1747
      %1796 = vst [vmem:[#allocation2 + $0x18] sm:$0xff] %v1748
      %1797 = vst [vmem:[#allocation2 + $0x20] sm:$0xff] %v1749
      %1798 = vst [vmem:[#allocation2 + $0x28] sm:$0xff] %v1750
      %1799 = vst [vmem:[#allocation2 + $0x30] sm:$0xff] %v1751
      %1800 = vst [vmem:[#allocation2 + $0x38] sm:$0xff] %v1752
      %1801 = vst [vmem:[#allocation2 + $0x40] sm:$0xff] %v1753
      %1802 = vst [vmem:[#allocation2 + $0x48] sm:$0xff] %v1754
      %1803 = vst [vmem:[#allocation2 + $0x50] sm:$0xff] %v1755
      %1804 = vst [vmem:[#allocation2 + $0x58] sm:$0xff] %v1756
      %1805 = vst [vmem:[#allocation2 + $0x60] sm:$0xff] %v1757
      %1806 = vst [vmem:[#allocation2 + $0x68] sm:$0xff] %v1758
      %1807 = vst [vmem:[#allocation2 + $0x70] sm:$0xff] %v1759
      %1808 = vst [vmem:[#allocation2 + $0x78] sm:$0xff] %v1760
      %1809 = vst [vmem:[#allocation2 + $0x80] sm:$0xff] %v1761
      %1810 = vst [vmem:[#allocation2 + $0x88] sm:$0xff] %v1762
      %1811 = vst [vmem:[#allocation2 + $0x90] sm:$0xff] %v1763
      %1812 = vst [vmem:[#allocation2 + $0x98] sm:$0xff] %v1764
      %1813 = vst [vmem:[#allocation2 + $0xa0] sm:$0xff] %v1765
      %1814 = vst [vmem:[#allocation2 + $0xa8] sm:$0xff] %v1766
      %1815 = vst [vmem:[#allocation2 + $0xb0] sm:$0xff] %v1767
      %1816 = vst [vmem:[#allocation2 + $0xb8] sm:$0xff] %v1768
      %1817 = vst [vmem:[#allocation2 + $0xc0] sm:$0xff] %v1769
      %1818 = vst [vmem:[#allocation2 + $0xc8] sm:$0xff] %v1770
      %1819 = vst [vmem:[#allocation2 + $0xd0] sm:$0xff] %v1771
      %1820 = vst [vmem:[#allocation2 + $0xd8] sm:$0xff] %v1772
      %1821 = vst [vmem:[#allocation2 + $0xe0] sm:$0xff] %v1773
      %1822 = vst [vmem:[#allocation2 + $0xe8] sm:$0xff] %v1774
      %1823 = vst [vmem:[#allocation2 + $0xf0] sm:$0xff] %v1775
      %1824 = vst [vmem:[#allocation2 + $0xf8] sm:$0xff] %v1776
      %1825 = vst [vmem:[#allocation2 + $0x100] sm:$0xff] %v1777
      %1826 = vst [vmem:[#allocation2 + $0x108] sm:$0xff] %v1778
      %1827 = vst [vmem:[#allocation2 + $0x110] sm:$0xff] %v1779
      %1828 = vst [vmem:[#allocation2 + $0x118] sm:$0xff] %v1780
      %1829 = vst [vmem:[#allocation2 + $0x120] sm:$0xff] %v1781
      %1830 = vst [vmem:[#allocation2 + $0x128] sm:$0xff] %v1782
      %1831 = vst [vmem:[#allocation2 + $0x130] sm:$0xff] %v1783
      %1832 = vst [vmem:[#allocation2 + $0x138] sm:$0xff] %v1784
      %1833 = vst [vmem:[#allocation2 + $0x140] sm:$0xff] %v1785
      %1834 = vst [vmem:[#allocation2 + $0x148] sm:$0xff] %v1786
      %1835 = vst [vmem:[#allocation2 + $0x150] sm:$0xff] %v1787
      %1836 = vst [vmem:[#allocation2 + $0x158] sm:$0xff] %v1788
      %1837 = vst [vmem:[#allocation2 + $0x160] sm:$0xff] %v1789
      %1838 = vst [vmem:[#allocation2 + $0x168] sm:$0xff] %v1790
      %1839 = vst [vmem:[#allocation2 + $0x170] sm:$0xff] %v1791
      %1840 = vst [vmem:[#allocation2 + $0x178] sm:$0xff] %v1792
      %v1841 = vmul.f32 %v1696, 0.01
      %v1842 = vsub.f32 %v542, %v1841
      %1843 = vst [vmem:[#allocation3] sm:$0x1] %v1842
      %v1844 = vmul.f32 %v937, 0.01
      %v1845 = vmul.f32 %v942, 0.01
      %v1846 = vmul.f32 %v947, 0.01
      %v1847 = vmul.f32 %v952, 0.01
      %v1848 = vmul.f32 %v957, 0.01
      %v1849 = vmul.f32 %v962, 0.01
      %v1850 = vmul.f32 %v967, 0.01
      %v1851 = vmul.f32 %v972, 0.01
      %v1852 = vmul.f32 %v977, 0.01
      %v1853 = vmul.f32 %v982, 0.01
      %v1854 = vmul.f32 %v987, 0.01
      %v1855 = vmul.f32 %v992, 0.01
      %v1856 = vmul.f32 %v997, 0.01
      %v1857 = vmul.f32 %v1002, 0.01
      %v1858 = vmul.f32 %v1007, 0.01
      %v1859 = vmul.f32 %v1012, 0.01
      %v1860 = vsub.f32 %v543, %v1844
      %v1861 = vsub.f32 %v544, %v1845
      %v1862 = vsub.f32 %v545, %v1846
      %v1863 = vsub.f32 %v546, %v1847
      %v1864 = vsub.f32 %v547, %v1848
      %v1865 = vsub.f32 %v548, %v1849
      %v1866 = vsub.f32 %v549, %v1850
      %v1867 = vsub.f32 %v550, %v1851
      %v1868 = vsub.f32 %v551, %v1852
      %v1869 = vsub.f32 %v552, %v1853
      %v1870 = vsub.f32 %v553, %v1854
      %v1871 = vsub.f32 %v554, %v1855
      %v1872 = vsub.f32 %v555, %v1856
      %v1873 = vsub.f32 %v556, %v1857
      %v1874 = vsub.f32 %v557, %v1858
      %v1875 = vsub.f32 %v558, %v1859
      %1876 = vst.msk [vmem:[#allocation4] sm:$0xff] %vm470, %v1860
      %1877 = vst.msk [vmem:[#allocation4 + $0x8] sm:$0xff] %vm470, %v1861
      %1878 = vst.msk [vmem:[#allocation4 + $0x10] sm:$0xff] %vm470, %v1862
      %1879 = vst.msk [vmem:[#allocation4 + $0x18] sm:$0xff] %vm470, %v1863
      %1880 = vst.msk [vmem:[#allocation4 + $0x20] sm:$0xff] %vm470, %v1864
      %1881 = vst.msk [vmem:[#allocation4 + $0x28] sm:$0xff] %vm470, %v1865
      %1882 = vst.msk [vmem:[#allocation4 + $0x30] sm:$0xff] %vm470, %v1866
      %1883 = vst.msk [vmem:[#allocation4 + $0x38] sm:$0xff] %vm470, %v1867
      %1884 = vst.msk [vmem:[#allocation4 + $0x40] sm:$0xff] %vm470, %v1868
      %1885 = vst.msk [vmem:[#allocation4 + $0x48] sm:$0xff] %vm470, %v1869
      %1886 = vst.msk [vmem:[#allocation4 + $0x50] sm:$0xff] %vm470, %v1870
      %1887 = vst.msk [vmem:[#allocation4 + $0x58] sm:$0xff] %vm470, %v1871
      %1888 = vst.msk [vmem:[#allocation4 + $0x60] sm:$0xff] %vm470, %v1872
      %1889 = vst.msk [vmem:[#allocation4 + $0x68] sm:$0xff] %vm470, %v1873
      %1890 = vst.msk [vmem:[#allocation4 + $0x70] sm:$0xff] %vm470, %v1874
      %1891 = vst.msk [vmem:[#allocation4 + $0x78] sm:$0xff] %vm470, %v1875
      %v1892 = vmul.f32 %v1021, 0.01
      %v1893 = vsub.f32 %v559, %v1892
      %1894 = vst.msk [vmem:[#allocation5] sm:$0x1] %vm488, %v1893
      %v1895 = vld [vmem:[#allocation2] sm:$0xff]
      %v1896 = vld [vmem:[#allocation2 + $0x8] sm:$0xff]
      %v1897 = vld [vmem:[#allocation2 + $0x10] sm:$0xff]
      %v1898 = vld [vmem:[#allocation2 + $0x18] sm:$0xff]
      %v1899 = vld [vmem:[#allocation2 + $0x20] sm:$0xff]
      %v1900 = vld [vmem:[#allocation2 + $0x28] sm:$0xff]
      %v1901 = vld [vmem:[#allocation2 + $0x30] sm:$0xff]
      %v1902 = vld [vmem:[#allocation2 + $0x38] sm:$0xff]
      %v1903 = vld [vmem:[#allocation2 + $0x40] sm:$0xff]
      %v1904 = vld [vmem:[#allocation2 + $0x48] sm:$0xff]
      %v1905 = vld [vmem:[#allocation2 + $0x50] sm:$0xff]
      %v1906 = vld [vmem:[#allocation2 + $0x58] sm:$0xff]
      %v1907 = vld [vmem:[#allocation2 + $0x60] sm:$0xff]
      %v1908 = vld [vmem:[#allocation2 + $0x68] sm:$0xff]
      %v1909 = vld [vmem:[#allocation2 + $0x70] sm:$0xff]
      %v1910 = vld [vmem:[#allocation2 + $0x78] sm:$0xff]
      %v1911 = vld [vmem:[#allocation2 + $0x80] sm:$0xff]
      %v1912 = vld [vmem:[#allocation2 + $0x88] sm:$0xff]
      %v1913 = vld [vmem:[#allocation2 + $0x90] sm:$0xff]
      %v1914 = vld [vmem:[#allocation2 + $0x98] sm:$0xff]
      %v1915 = vld [vmem:[#allocation2 + $0xa0] sm:$0xff]
      %v1916 = vld [vmem:[#allocation2 + $0xa8] sm:$0xff]
      %v1917 = vld [vmem:[#allocation2 + $0xb0] sm:$0xff]
      %v1918 = vld [vmem:[#allocation2 + $0xb8] sm:$0xff]
      %v1919 = vld [vmem:[#allocation2 + $0xc0] sm:$0xff]
      %v1920 = vld [vmem:[#allocation2 + $0xc8] sm:$0xff]
      %v1921 = vld [vmem:[#allocation2 + $0xd0] sm:$0xff]
      %v1922 = vld [vmem:[#allocation2 + $0xd8] sm:$0xff]
      %v1923 = vld [vmem:[#allocation2 + $0xe0] sm:$0xff]
      %v1924 = vld [vmem:[#allocation2 + $0xe8] sm:$0xff]
      %v1925 = vld [vmem:[#allocation2 + $0xf0] sm:$0xff]
      %v1926 = vld [vmem:[#allocation2 + $0xf8] sm:$0xff]
      %v1927 = vld [vmem:[#allocation2 + $0x100] sm:$0xff]
      %v1928 = vld [vmem:[#allocation2 + $0x108] sm:$0xff]
      %v1929 = vld [vmem:[#allocation2 + $0x110] sm:$0xff]
      %v1930 = vld [vmem:[#allocation2 + $0x118] sm:$0xff]
      %v1931 = vld [vmem:[#allocation2 + $0x120] sm:$0xff]
      %v1932 = vld [vmem:[#allocation2 + $0x128] sm:$0xff]
      %v1933 = vld [vmem:[#allocation2 + $0x130] sm:$0xff]
      %v1934 = vld [vmem:[#allocation2 + $0x138] sm:$0xff]
      %v1935 = vld [vmem:[#allocation2 + $0x140] sm:$0xff]
      %v1936 = vld [vmem:[#allocation2 + $0x148] sm:$0xff]
      %v1937 = vld [vmem:[#allocation2 + $0x150] sm:$0xff]
      %v1938 = vld [vmem:[#allocation2 + $0x158] sm:$0xff]
      %v1939 = vld [vmem:[#allocation2 + $0x160] sm:$0xff]
      %v1940 = vld [vmem:[#allocation2 + $0x168] sm:$0xff]
      %v1941 = vld [vmem:[#allocation2 + $0x170] sm:$0xff]
      %v1942 = vld [vmem:[#allocation2 + $0x178] sm:$0xff]
      %v1943 = vld [vmem:[#allocation3] sm:$0x1]
      %v1944 = vld [vmem:[#allocation4] sm:$0xff]
      %v1945 = vld [vmem:[#allocation4 + $0x8] sm:$0xff]
      %v1946 = vld [vmem:[#allocation4 + $0x10] sm:$0xff]
      %v1947 = vld [vmem:[#allocation4 + $0x18] sm:$0xff]
      %v1948 = vld [vmem:[#allocation4 + $0x20] sm:$0xff]
      %v1949 = vld [vmem:[#allocation4 + $0x28] sm:$0xff]
      %v1950 = vld [vmem:[#allocation4 + $0x30] sm:$0xff]
      %v1951 = vld [vmem:[#allocation4 + $0x38] sm:$0xff]
      %v1952 = vld [vmem:[#allocation4 + $0x40] sm:$0xff]
      %v1953 = vld [vmem:[#allocation4 + $0x48] sm:$0xff]
      %v1954 = vld [vmem:[#allocation4 + $0x50] sm:$0xff]
      %v1955 = vld [vmem:[#allocation4 + $0x58] sm:$0xff]
      %v1956 = vld [vmem:[#allocation4 + $0x60] sm:$0xff]
      %v1957 = vld [vmem:[#allocation4 + $0x68] sm:$0xff]
      %v1958 = vld [vmem:[#allocation4 + $0x70] sm:$0xff]
      %v1959 = vld [vmem:[#allocation4 + $0x78] sm:$0xff]
      %v1960 = vld [vmem:[#allocation5] sm:$0x1]
      %v1962 = vlaneseq
      %v1963 = vshrl.u32 %v1962, 7
      %v1964 = vsub.s32 0, %v1963
      %v1965 = vrot.slane %v1943, %v1964
      %1967 = vmatprep.subr.mxu0 0.0
      %1968 = vmatpush1.msra.mxu0 %v1910
      %1969 = vmatprep.subr.mxu0 0.0
      %1970 = vmatpush1.msra.mxu0 %v1909
      %1971 = vmatprep.subr.mxu0 0.0
      %1972 = vmatpush1.msra.mxu0 %v1908
      %1973 = vmatprep.subr.mxu0 0.0
      %1974 = vmatpush1.msra.mxu0 %v1907
      %1975 = vmatprep.subr.mxu0 0.0
      %1976 = vmatpush1.msra.mxu0 %v1906
      %1977 = vmatprep.subr.mxu0 0.0
      %1978 = vmatpush1.msra.mxu0 %v1905
      %1979 = vmatprep.subr.mxu0 0.0
      %1980 = vmatpush1.msra.mxu0 %v1904
      %1981 = vmatprep.subr.mxu0 0.0
      %1982 = vmatpush1.msra.mxu0 %v1903
      %1983 = vmatprep.subr.mxu0 0.0
      %1984 = vmatpush1.msra.mxu0 %v1902
      %1985 = vmatprep.subr.mxu0 0.0
      %1986 = vmatpush1.msra.mxu0 %v1901
      %1987 = vmatprep.subr.mxu0 0.0
      %1988 = vmatpush1.msra.mxu0 %v1900
      %1989 = vmatprep.subr.mxu0 0.0
      %1990 = vmatpush1.msra.mxu0 %v1899
      %1991 = vmatprep.subr.mxu0 0.0
      %1992 = vmatpush1.msra.mxu0 %v1898
      %1993 = vmatprep.subr.mxu0 0.0
      %1994 = vmatpush1.msra.mxu0 %v1897
      %1995 = vmatprep.subr.mxu0 0.0
      %1996 = vmatpush1.msra.mxu0 %v1896
      %1997 = vmatprep.subr.mxu0 0.0
      %1998 = vmatpush1.msra.mxu0 %v1895
      %1999 = vmatprep.subr.mxu0 0.0
      %2000 = vmatpush2.msra.mxu0 %v1926
      %2001 = vmatprep.subr.mxu0 0.0
      %2002 = vmatpush2.msra.mxu0 %v1925
      %2003 = vmatprep.subr.mxu0 0.0
      %2004 = vmatpush2.msra.mxu0 %v1924
      %2005 = vmatprep.subr.mxu0 0.0
      %2006 = vmatpush2.msra.mxu0 %v1923
      %2007 = vmatprep.subr.mxu0 0.0
      %2008 = vmatpush2.msra.mxu0 %v1922
      %2009 = vmatprep.subr.mxu0 0.0
      %2010 = vmatpush2.msra.mxu0 %v1921
      %2011 = vmatprep.subr.mxu0 0.0
      %2012 = vmatpush2.msra.mxu0 %v1920
      %2013 = vmatprep.subr.mxu0 0.0
      %2014 = vmatpush2.msra.mxu0 %v1919
      %2015 = vmatprep.subr.mxu0 0.0
      %2016 = vmatpush2.msra.mxu0 %v1918
      %2017 = vmatprep.subr.mxu0 0.0
      %2018 = vmatpush2.msra.mxu0 %v1917
      %2019 = vmatprep.subr.mxu0 0.0
      %2020 = vmatpush2.msra.mxu0 %v1916
      %2021 = vmatprep.subr.mxu0 0.0
      %2022 = vmatpush2.msra.mxu0 %v1915
      %2023 = vmatprep.subr.mxu0 0.0
      %2024 = vmatpush2.msra.mxu0 %v1914
      %2025 = vmatprep.subr.mxu0 0.0
      %2026 = vmatpush2.msra.mxu0 %v1913
      %2027 = vmatprep.subr.mxu0 0.0
      %2028 = vmatpush2.msra.mxu0 %v1912
      %2029 = vmatprep.subr.mxu0 0.0
      %2030 = vmatpush2.msra.mxu0 %v1911
      %2031 = vmatprep.mubr.f32.mxu0 %v491
      %2032 = vmatmul.mubr.f32.gmra.mxu0 %v490
      %v2033 = vpop.f32.mrf.mxu0
      %v2034 = vadd.f32 %v1965, %v2033
      %v2035 = vpop.f32.mrf.mxu0
      %2036 = vdwg.mxu0
      %2037 = vmatprep.subr.mxu0 0.0
      %2038 = vmatpush1.msra.mxu0 %v1942
      %2039 = vmatprep.subr.mxu0 0.0
      %2040 = vmatpush1.msra.mxu0 %v1941
      %2041 = vmatprep.subr.mxu0 0.0
      %2042 = vmatpush1.msra.mxu0 %v1940
      %2043 = vmatprep.subr.mxu0 0.0
      %2044 = vmatpush1.msra.mxu0 %v1939
      %2045 = vmatprep.subr.mxu0 0.0
      %2046 = vmatpush1.msra.mxu0 %v1938
      %2047 = vmatprep.subr.mxu0 0.0
      %2048 = vmatpush1.msra.mxu0 %v1937
      %2049 = vmatprep.subr.mxu0 0.0
      %2050 = vmatpush1.msra.mxu0 %v1936
      %2051 = vmatprep.subr.mxu0 0.0
      %2052 = vmatpush1.msra.mxu0 %v1935
      %2053 = vmatprep.subr.mxu0 0.0
      %2054 = vmatpush1.msra.mxu0 %v1934
      %2055 = vmatprep.subr.mxu0 0.0
      %2056 = vmatpush1.msra.mxu0 %v1933
      %2057 = vmatprep.subr.mxu0 0.0
      %2058 = vmatpush1.msra.mxu0 %v1932
      %2059 = vmatprep.subr.mxu0 0.0
      %2060 = vmatpush1.msra.mxu0 %v1931
      %2061 = vmatprep.subr.mxu0 0.0
      %2062 = vmatpush1.msra.mxu0 %v1930
      %2063 = vmatprep.subr.mxu0 0.0
      %2064 = vmatpush1.msra.mxu0 %v1929
      %2065 = vmatprep.subr.mxu0 0.0
      %2066 = vmatpush1.msra.mxu0 %v1928
      %2067 = vmatprep.subr.mxu0 0.0
      %2068 = vmatpush1.msra.mxu0 %v1927
      %2069 = vmatprep.subr.mxu0 0.0
      %2070 = vmatpush2.msra.mxu0 0.0
      %2071 = vmatprep.subr.mxu0 0.0
      %2072 = vmatpush2.msra.mxu0 0.0
      %2073 = vmatprep.subr.mxu0 0.0
      %2074 = vmatpush2.msra.mxu0 0.0
      %2075 = vmatprep.subr.mxu0 0.0
      %2076 = vmatpush2.msra.mxu0 0.0
      %2077 = vmatprep.subr.mxu0 0.0
      %2078 = vmatpush2.msra.mxu0 0.0
      %2079 = vmatprep.subr.mxu0 0.0
      %2080 = vmatpush2.msra.mxu0 0.0
      %2081 = vmatprep.subr.mxu0 0.0
      %2082 = vmatpush2.msra.mxu0 0.0
      %2083 = vmatprep.subr.mxu0 0.0
      %2084 = vmatpush2.msra.mxu0 0.0
      %2085 = vmatprep.subr.mxu0 0.0
      %2086 = vmatpush2.msra.mxu0 0.0
      %2087 = vmatprep.subr.mxu0 0.0
      %2088 = vmatpush2.msra.mxu0 0.0
      %2089 = vmatprep.subr.mxu0 0.0
      %2090 = vmatpush2.msra.mxu0 0.0
      %2091 = vmatprep.subr.mxu0 0.0
      %2092 = vmatpush2.msra.mxu0 0.0
      %2093 = vmatprep.subr.mxu0 0.0
      %2094 = vmatpush2.msra.mxu0 0.0
      %2095 = vmatprep.subr.mxu0 0.0
      %2096 = vmatpush2.msra.mxu0 0.0
      %2097 = vmatprep.subr.mxu0 0.0
      %2098 = vmatpush2.msra.mxu0 0.0
      %2099 = vmatprep.subr.mxu0 0.0
      %2100 = vmatpush2.msra.mxu0 0.0
      %2101 = vmatprep.mubr.f32.mxu0 0.0
      %2102 = vmatmul.mubr.f32.gmra.mxu0 %v492
      %v2103 = vpop.f32.mrf.mxu0
      %v2104 = vadd.f32 %v2034, %v2103
      %v2105 = vpop.f32.mrf.mxu0
      %2106 = vdwg.mxu0
      %v2107 = vtanh.pop %v2104
      %v2109 = vlaneseq
      %v2110 = vshrl.u32 %v2109, 7
      %v2111 = vsub.s32 0, %v2110
      %v2112 = vrot.slane %v1960, %v2111
      %2114 = vmatprep.subr.mxu0 0.0
      %2115 = vmatpush1.msra.mxu0 %v1959
      %2116 = vmatprep.subr.mxu0 0.0
      %2117 = vmatpush1.msra.mxu0 %v1958
      %2118 = vmatprep.subr.mxu0 0.0
      %2119 = vmatpush1.msra.mxu0 %v1957
      %2120 = vmatprep.subr.mxu0 0.0
      %2121 = vmatpush1.msra.mxu0 %v1956
      %2122 = vmatprep.subr.mxu0 0.0
      %2123 = vmatpush1.msra.mxu0 %v1955
      %2124 = vmatprep.subr.mxu0 0.0
      %2125 = vmatpush1.msra.mxu0 %v1954
      %2126 = vmatprep.subr.mxu0 0.0
      %2127 = vmatpush1.msra.mxu0 %v1953
      %2128 = vmatprep.subr.mxu0 0.0
      %2129 = vmatpush1.msra.mxu0 %v1952
      %2130 = vmatprep.subr.mxu0 0.0
      %2131 = vmatpush1.msra.mxu0 %v1951
      %2132 = vmatprep.subr.mxu0 0.0
      %2133 = vmatpush1.msra.mxu0 %v1950
      %2134 = vmatprep.subr.mxu0 0.0
      %2135 = vmatpush1.msra.mxu0 %v1949
      %2136 = vmatprep.subr.mxu0 0.0
      %2137 = vmatpush1.msra.mxu0 %v1948
      %2138 = vmatprep.subr.mxu0 0.0
      %2139 = vmatpush1.msra.mxu0 %v1947
      %2140 = vmatprep.subr.mxu0 0.0
      %2141 = vmatpush1.msra.mxu0 %v1946
      %2142 = vmatprep.subr.mxu0 0.0
      %2143 = vmatpush1.msra.mxu0 %v1945
      %2144 = vmatprep.subr.mxu0 0.0
      %2145 = vmatpush1.msra.mxu0 %v1944
      %2146 = vmatprep.subr.mxu0 0.0
      %2147 = vmatpush2.msra.mxu0 0.0
      %2148 = vmatprep.subr.mxu0 0.0
      %2149 = vmatpush2.msra.mxu0 0.0
      %2150 = vmatprep.subr.mxu0 0.0
      %2151 = vmatpush2.msra.mxu0 0.0
      %2152 = vmatprep.subr.mxu0 0.0
      %2153 = vmatpush2.msra.mxu0 0.0
      %2154 = vmatprep.subr.mxu0 0.0
      %2155 = vmatpush2.msra.mxu0 0.0
      %2156 = vmatprep.subr.mxu0 0.0
      %2157 = vmatpush2.msra.mxu0 0.0
      %2158 = vmatprep.subr.mxu0 0.0
      %2159 = vmatpush2.msra.mxu0 0.0
      %2160 = vmatprep.subr.mxu0 0.0
      %2161 = vmatpush2.msra.mxu0 0.0
      %2162 = vmatprep.subr.mxu0 0.0
      %2163 = vmatpush2.msra.mxu0 0.0
      %2164 = vmatprep.subr.mxu0 0.0
      %2165 = vmatpush2.msra.mxu0 0.0
      %2166 = vmatprep.subr.mxu0 0.0
      %2167 = vmatpush2.msra.mxu0 0.0
      %2168 = vmatprep.subr.mxu0 0.0
      %2169 = vmatpush2.msra.mxu0 0.0
      %2170 = vmatprep.subr.mxu0 0.0
      %2171 = vmatpush2.msra.mxu0 0.0
      %2172 = vmatprep.subr.mxu0 0.0
      %2173 = vmatpush2.msra.mxu0 0.0
      %2174 = vmatprep.subr.mxu0 0.0
      %2175 = vmatpush2.msra.mxu0 0.0
      %2176 = vmatprep.subr.mxu0 0.0
      %2177 = vmatpush2.msra.mxu0 0.0
      %2178 = vmatprep.mubr.f32.mxu0 0.0
      %2179 = vmatmul.mubr.f32.gmra.mxu0 %v2107
      %v2180 = vpop.f32.mrf.mxu0
      %v2181 = vadd.f32 %v2112, %v2180
      %v2182 = vpop.f32.mrf.mxu0
      %2183 = vdwg.mxu0
      %v2184 = vsub.f32 %v2181, %v493
      %vm2185 = vcmp.gt.f32.partialorder %v2184, 0.0
      %vm2186 = vcmp.lt.f32.partialorder %v2184, 0.0
      %v2187 = vsel %vm2186, -1.0, 0.0
      %v2188 = vsel %vm2185, 1.0, %v2187
      %v2189 = vmul.f32 %v2188, 0.0078125
      %2190 = vxpose.xlu0.b32.start [1/16] %v2107, 128
      %2191 = vxpose.xlu0.b32.cont [2/16] 0.0, 128
      %2192 = vxpose.xlu0.b32.cont [3/16] 0.0, 128
      %2193 = vxpose.xlu0.b32.cont [4/16] 0.0, 128
      %2194 = vxpose.xlu0.b32.cont [5/16] 0.0, 128
      %2195 = vxpose.xlu0.b32.cont [6/16] 0.0, 128
      %2196 = vxpose.xlu0.b32.cont [7/16] 0.0, 128
      %2197 = vxpose.xlu0.b32.cont [8/16] 0.0, 128
      %2198 = vxpose.xlu0.b32.cont [9/16] 0.0, 128
      %2199 = vxpose.xlu0.b32.cont [10/16] 0.0, 128
      %2200 = vxpose.xlu0.b32.cont [11/16] 0.0, 128
      %2201 = vxpose.xlu0.b32.cont [12/16] 0.0, 128
      %2202 = vxpose.xlu0.b32.cont [13/16] 0.0, 128
      %2203 = vxpose.xlu0.b32.cont [14/16] 0.0, 128
      %2204 = vxpose.xlu0.b32.cont [15/16] 0.0, 128
      %2205 = vxpose.xlu0.b32.end [16/16] 0.0, 128
      %v2206 = vpop.trf.xlu0
      %v2207 = vpop.trf.xlu0
      %v2208 = vpop.trf.xlu0
      %v2209 = vpop.trf.xlu0
      %v2210 = vpop.trf.xlu0
      %v2211 = vpop.trf.xlu0
      %v2212 = vpop.trf.xlu0
      %v2213 = vpop.trf.xlu0
      %v2214 = vpop.trf.xlu0
      %v2215 = vpop.trf.xlu0
      %v2216 = vpop.trf.xlu0
      %v2217 = vpop.trf.xlu0
      %v2218 = vpop.trf.xlu0
      %v2219 = vpop.trf.xlu0
      %v2220 = vpop.trf.xlu0
      %v2221 = vpop.trf.xlu0
      %v2223 = vsel %vm821, %v2206, 0
      %v2226 = vsel %vm821, %v2207, 0
      %v2229 = vsel %vm821, %v2208, 0
      %v2232 = vsel %vm821, %v2209, 0
      %v2235 = vsel %vm821, %v2210, 0
      %v2238 = vsel %vm821, %v2211, 0
      %v2241 = vsel %vm821, %v2212, 0
      %v2244 = vsel %vm821, %v2213, 0
      %v2247 = vsel %vm821, %v2214, 0
      %v2250 = vsel %vm821, %v2215, 0
      %v2253 = vsel %vm821, %v2216, 0
      %v2256 = vsel %vm821, %v2217, 0
      %v2259 = vsel %vm821, %v2218, 0
      %v2262 = vsel %vm821, %v2219, 0
      %v2265 = vsel %vm821, %v2220, 0
      %v2268 = vsel %vm821, %v2221, 0
      %2270 = vmatprep.subr.mxu0 0.0
      %2271 = vmatpush1.msra.mxu0 0.0
      %2272 = vmatprep.subr.mxu0 0.0
      %2273 = vmatpush1.msra.mxu0 0.0
      %2274 = vmatprep.subr.mxu0 0.0
      %2275 = vmatpush1.msra.mxu0 0.0
      %2276 = vmatprep.subr.mxu0 0.0
      %2277 = vmatpush1.msra.mxu0 0.0
      %2278 = vmatprep.subr.mxu0 0.0
      %2279 = vmatpush1.msra.mxu0 0.0
      %2280 = vmatprep.subr.mxu0 0.0
      %2281 = vmatpush1.msra.mxu0 0.0
      %2282 = vmatprep.subr.mxu0 0.0
      %2283 = vmatpush1.msra.mxu0 0.0
      %2284 = vmatprep.subr.mxu0 0.0
      %2285 = vmatpush1.msra.mxu0 0.0
      %2286 = vmatprep.subr.mxu0 0.0
      %2287 = vmatpush1.msra.mxu0 0.0
      %2288 = vmatprep.subr.mxu0 0.0
      %2289 = vmatpush1.msra.mxu0 0.0
      %2290 = vmatprep.subr.mxu0 0.0
      %2291 = vmatpush1.msra.mxu0 0.0
      %2292 = vmatprep.subr.mxu0 0.0
      %2293 = vmatpush1.msra.mxu0 0.0
      %2294 = vmatprep.subr.mxu0 0.0
      %2295 = vmatpush1.msra.mxu0 0.0
      %2296 = vmatprep.subr.mxu0 0.0
      %2297 = vmatpush1.msra.mxu0 0.0
      %2298 = vmatprep.subr.mxu0 0.0
      %2299 = vmatpush1.msra.mxu0 0.0
      %2300 = vmatprep.subr.mxu0 0.0
      %2301 = vmatpush1.msra.mxu0 %v2189
      %2302 = vmatprep.subr.mxu0 0.0
      %2303 = vmatpush2.msra.mxu0 0.0
      %2304 = vmatprep.subr.mxu0 0.0
      %2305 = vmatpush2.msra.mxu0 0.0
      %2306 = vmatprep.subr.mxu0 0.0
      %2307 = vmatpush2.msra.mxu0 0.0
      %2308 = vmatprep.subr.mxu0 0.0
      %2309 = vmatpush2.msra.mxu0 0.0
      %2310 = vmatprep.subr.mxu0 0.0
      %2311 = vmatpush2.msra.mxu0 0.0
      %2312 = vmatprep.subr.mxu0 0.0
      %2313 = vmatpush2.msra.mxu0 0.0
      %2314 = vmatprep.subr.mxu0 0.0
      %2315 = vmatpush2.msra.mxu0 0.0
      %2316 = vmatprep.subr.mxu0 0.0
      %2317 = vmatpush2.msra.mxu0 0.0
      %2318 = vmatprep.subr.mxu0 0.0
      %2319 = vmatpush2.msra.mxu0 0.0
      %2320 = vmatprep.subr.mxu0 0.0
      %2321 = vmatpush2.msra.mxu0 0.0
      %2322 = vmatprep.subr.mxu0 0.0
      %2323 = vmatpush2.msra.mxu0 0.0
      %2324 = vmatprep.subr.mxu0 0.0
      %2325 = vmatpush2.msra.mxu0 0.0
      %2326 = vmatprep.subr.mxu0 0.0
      %2327 = vmatpush2.msra.mxu0 0.0
      %2328 = vmatprep.subr.mxu0 0.0
      %2329 = vmatpush2.msra.mxu0 0.0
      %2330 = vmatprep.subr.mxu0 0.0
      %2331 = vmatpush2.msra.mxu0 0.0
      %2332 = vmatprep.subr.mxu0 0.0
      %2333 = vmatpush2.msra.mxu0 0.0
      %2334 = vmatprep.mubr.f32.mxu0 0.0
      %2335 = vmatmul.mubr.f32.gmra.mxu0 %v2223
      %v2336 = vpop.f32.mrf.mxu0
      %v2337 = vadd.f32 0.0, %v2336
      %v2338 = vpop.f32.mrf.mxu0
      %2339 = vmatprep.mubr.f32.mxu0 0.0
      %2340 = vmatmul.mubr.f32.gmra.mxu0 %v2226
      %v2341 = vpop.f32.mrf.mxu0
      %v2342 = vadd.f32 0.0, %v2341
      %v2343 = vpop.f32.mrf.mxu0
      %2344 = vmatprep.mubr.f32.mxu0 0.0
      %2345 = vmatmul.mubr.f32.gmra.mxu0 %v2229
      %v2346 = vpop.f32.mrf.mxu0
      %v2347 = vadd.f32 0.0, %v2346
      %v2348 = vpop.f32.mrf.mxu0
      %2349 = vmatprep.mubr.f32.mxu0 0.0
      %2350 = vmatmul.mubr.f32.gmra.mxu0 %v2232
      %v2351 = vpop.f32.mrf.mxu0
      %v2352 = vadd.f32 0.0, %v2351
      %v2353 = vpop.f32.mrf.mxu0
      %2354 = vmatprep.mubr.f32.mxu0 0.0
      %2355 = vmatmul.mubr.f32.gmra.mxu0 %v2235
      %v2356 = vpop.f32.mrf.mxu0
      %v2357 = vadd.f32 0.0, %v2356
      %v2358 = vpop.f32.mrf.mxu0
      %2359 = vmatprep.mubr.f32.mxu0 0.0
      %2360 = vmatmul.mubr.f32.gmra.mxu0 %v2238
      %v2361 = vpop.f32.mrf.mxu0
      %v2362 = vadd.f32 0.0, %v2361
      %v2363 = vpop.f32.mrf.mxu0
      %2364 = vmatprep.mubr.f32.mxu0 0.0
      %2365 = vmatmul.mubr.f32.gmra.mxu0 %v2241
      %v2366 = vpop.f32.mrf.mxu0
      %v2367 = vadd.f32 0.0, %v2366
      %v2368 = vpop.f32.mrf.mxu0
      %2369 = vmatprep.mubr.f32.mxu0 0.0
      %2370 = vmatmul.mubr.f32.gmra.mxu0 %v2244
      %v2371 = vpop.f32.mrf.mxu0
      %v2372 = vadd.f32 0.0, %v2371
      %v2373 = vpop.f32.mrf.mxu0
      %2374 = vmatprep.mubr.f32.mxu0 0.0
      %2375 = vmatmul.mubr.f32.gmra.mxu0 %v2247
      %v2376 = vpop.f32.mrf.mxu0
      %v2377 = vadd.f32 0.0, %v2376
      %v2378 = vpop.f32.mrf.mxu0
      %2379 = vmatprep.mubr.f32.mxu0 0.0
      %2380 = vmatmul.mubr.f32.gmra.mxu0 %v2250
      %v2381 = vpop.f32.mrf.mxu0
      %v2382 = vadd.f32 0.0, %v2381
      %v2383 = vpop.f32.mrf.mxu0
      %2384 = vmatprep.mubr.f32.mxu0 0.0
      %2385 = vmatmul.mubr.f32.gmra.mxu0 %v2253
      %v2386 = vpop.f32.mrf.mxu0
      %v2387 = vadd.f32 0.0, %v2386
      %v2388 = vpop.f32.mrf.mxu0
      %2389 = vmatprep.mubr.f32.mxu0 0.0
      %2390 = vmatmul.mubr.f32.gmra.mxu0 %v2256
      %v2391 = vpop.f32.mrf.mxu0
      %v2392 = vadd.f32 0.0, %v2391
      %v2393 = vpop.f32.mrf.mxu0
      %2394 = vmatprep.mubr.f32.mxu0 0.0
      %2395 = vmatmul.mubr.f32.gmra.mxu0 %v2259
      %v2396 = vpop.f32.mrf.mxu0
      %v2397 = vadd.f32 0.0, %v2396
      %v2398 = vpop.f32.mrf.mxu0
      %2399 = vmatprep.mubr.f32.mxu0 0.0
      %2400 = vmatmul.mubr.f32.gmra.mxu0 %v2262
      %v2401 = vpop.f32.mrf.mxu0
      %v2402 = vadd.f32 0.0, %v2401
      %v2403 = vpop.f32.mrf.mxu0
      %2404 = vmatprep.mubr.f32.mxu0 0.0
      %2405 = vmatmul.mubr.f32.gmra.mxu0 %v2265
      %v2406 = vpop.f32.mrf.mxu0
      %v2407 = vadd.f32 0.0, %v2406
      %v2408 = vpop.f32.mrf.mxu0
      %2409 = vmatprep.mubr.f32.mxu0 0.0
      %2410 = vmatmul.mubr.f32.gmra.mxu0 %v2268
      %v2411 = vpop.f32.mrf.mxu0
      %v2412 = vadd.f32 0.0, %v2411
      %v2413 = vpop.f32.mrf.mxu0
      %2414 = vdwg.mxu0
      %v2415 = vsel %vm470, %v2189, 0.0
      %v2416 = vrot.slane %v2415, 4
      %v2417 = vadd.f32 %v2415, %v2416
      %v2418 = vrot.slane %v2417, 2
      %v2419 = vadd.f32 %v2417, %v2418
      %v2420 = vrot.slane %v2419, 1
      %v2421 = vadd.f32 %v2419, %v2420
      %v2423 = vsel %vm470, %v2189, 0
      %v2426 = vsel %vm470, %v1944, 0
      %v2429 = vsel %vm470, %v1945, 0
      %v2432 = vsel %vm470, %v1946, 0
      %v2435 = vsel %vm470, %v1947, 0
      %v2438 = vsel %vm470, %v1948, 0
      %v2441 = vsel %vm470, %v1949, 0
      %v2444 = vsel %vm470, %v1950, 0
      %v2447 = vsel %vm470, %v1951, 0
      %v2450 = vsel %vm470, %v1952, 0
      %v2453 = vsel %vm470, %v1953, 0
      %v2456 = vsel %vm470, %v1954, 0
      %v2459 = vsel %vm470, %v1955, 0
      %v2462 = vsel %vm470, %v1956, 0
      %v2465 = vsel %vm470, %v1957, 0
      %v2468 = vsel %vm470, %v1958, 0
      %v2471 = vsel %vm470, %v1959, 0
      %2473 = vmatprep.subr.mxu0 0.0
      %2474 = vmatpush1.xpose.msra.mxu0 %v2471
      %2475 = vmatprep.subr.mxu0 0.0
      %2476 = vmatpush1.xpose.msra.mxu0 %v2468
      %2477 = vmatprep.subr.mxu0 0.0
      %2478 = vmatpush1.xpose.msra.mxu0 %v2465
      %2479 = vmatprep.subr.mxu0 0.0
      %2480 = vmatpush1.xpose.msra.mxu0 %v2462
      %2481 = vmatprep.subr.mxu0 0.0
      %2482 = vmatpush1.xpose.msra.mxu0 %v2459
      %2483 = vmatprep.subr.mxu0 0.0
      %2484 = vmatpush1.xpose.msra.mxu0 %v2456
      %2485 = vmatprep.subr.mxu0 0.0
      %2486 = vmatpush1.xpose.msra.mxu0 %v2453
      %2487 = vmatprep.subr.mxu0 0.0
      %2488 = vmatpush1.xpose.msra.mxu0 %v2450
      %2489 = vmatprep.subr.mxu0 0.0
      %2490 = vmatpush1.xpose.msra.mxu0 %v2447
      %2491 = vmatprep.subr.mxu0 0.0
      %2492 = vmatpush1.xpose.msra.mxu0 %v2444
      %2493 = vmatprep.subr.mxu0 0.0
      %2494 = vmatpush1.xpose.msra.mxu0 %v2441
      %2495 = vmatprep.subr.mxu0 0.0
      %2496 = vmatpush1.xpose.msra.mxu0 %v2438
      %2497 = vmatprep.subr.mxu0 0.0
      %2498 = vmatpush1.xpose.msra.mxu0 %v2435
      %2499 = vmatprep.subr.mxu0 0.0
      %2500 = vmatpush1.xpose.msra.mxu0 %v2432
      %2501 = vmatprep.subr.mxu0 0.0
      %2502 = vmatpush1.xpose.msra.mxu0 %v2429
      %2503 = vmatprep.subr.mxu0 0.0
      %2504 = vmatpush1.xpose.msra.mxu0 %v2426
      %2505 = vmatprep.subr.mxu0 0.0
      %2506 = vmatpush2.xpose.msra.mxu0 0.0
      %2507 = vmatprep.subr.mxu0 0.0
      %2508 = vmatpush2.xpose.msra.mxu0 0.0
      %2509 = vmatprep.subr.mxu0 0.0
      %2510 = vmatpush2.xpose.msra.mxu0 0.0
      %2511 = vmatprep.subr.mxu0 0.0
      %2512 = vmatpush2.xpose.msra.mxu0 0.0
      %2513 = vmatprep.subr.mxu0 0.0
      %2514 = vmatpush2.xpose.msra.mxu0 0.0
      %2515 = vmatprep.subr.mxu0 0.0
      %2516 = vmatpush2.xpose.msra.mxu0 0.0
      %2517 = vmatprep.subr.mxu0 0.0
      %2518 = vmatpush2.xpose.msra.mxu0 0.0
      %2519 = vmatprep.subr.mxu0 0.0
      %2520 = vmatpush2.xpose.msra.mxu0 0.0
      %2521 = vmatprep.subr.mxu0 0.0
      %2522 = vmatpush2.xpose.msra.mxu0 0.0
      %2523 = vmatprep.subr.mxu0 0.0
      %2524 = vmatpush2.xpose.msra.mxu0 0.0
      %2525 = vmatprep.subr.mxu0 0.0
      %2526 = vmatpush2.xpose.msra.mxu0 0.0
      %2527 = vmatprep.subr.mxu0 0.0
      %2528 = vmatpush2.xpose.msra.mxu0 0.0
      %2529 = vmatprep.subr.mxu0 0.0
      %2530 = vmatpush2.xpose.msra.mxu0 0.0
      %2531 = vmatprep.subr.mxu0 0.0
      %2532 = vmatpush2.xpose.msra.mxu0 0.0
      %2533 = vmatprep.subr.mxu0 0.0
      %2534 = vmatpush2.xpose.msra.mxu0 0.0
      %2535 = vmatprep.subr.mxu0 0.0
      %2536 = vmatpush2.xpose.msra.mxu0 0.0
      %2537 = vmatprep.mubr.f32.mxu0 0.0
      %2538 = vmatmul.mubr.f32.gmra.mxu0 %v2423
      %v2539 = vpop.f32.mrf.mxu0
      %v2540 = vadd.f32 0.0, %v2539
      %v2541 = vpop.f32.mrf.mxu0
      %2542 = vdwg.mxu0
      %v2543 = vmul.f32 %v2107, %v2107
      %v2544 = vsub.f32 1.0, %v2543
      %v2545 = vmul.f32 %v2540, %v2544
      %2546 = vmatprep.subr.mxu0 0.0
      %2547 = vmatpush1.msra.mxu0 0.0
      %2548 = vmatprep.subr.mxu0 0.0
      %2549 = vmatpush1.msra.mxu0 0.0
      %2550 = vmatprep.subr.mxu0 0.0
      %2551 = vmatpush1.msra.mxu0 0.0
      %2552 = vmatprep.subr.mxu0 0.0
      %2553 = vmatpush1.msra.mxu0 0.0
      %2554 = vmatprep.subr.mxu0 0.0
      %2555 = vmatpush1.msra.mxu0 0.0
      %2556 = vmatprep.subr.mxu0 0.0
      %2557 = vmatpush1.msra.mxu0 0.0
      %2558 = vmatprep.subr.mxu0 0.0
      %2559 = vmatpush1.msra.mxu0 0.0
      %2560 = vmatprep.subr.mxu0 0.0
      %2561 = vmatpush1.msra.mxu0 0.0
      %2562 = vmatprep.subr.mxu0 0.0
      %2563 = vmatpush1.msra.mxu0 0.0
      %2564 = vmatprep.subr.mxu0 0.0
      %2565 = vmatpush1.msra.mxu0 0.0
      %2566 = vmatprep.subr.mxu0 0.0
      %2567 = vmatpush1.msra.mxu0 0.0
      %2568 = vmatprep.subr.mxu0 0.0
      %2569 = vmatpush1.msra.mxu0 0.0
      %2570 = vmatprep.subr.mxu0 0.0
      %2571 = vmatpush1.msra.mxu0 0.0
      %2572 = vmatprep.subr.mxu0 0.0
      %2573 = vmatpush1.msra.mxu0 0.0
      %2574 = vmatprep.subr.mxu0 0.0
      %2575 = vmatpush1.msra.mxu0 0.0
      %2576 = vmatprep.subr.mxu0 0.0
      %2577 = vmatpush1.msra.mxu0 %v2545
      %2578 = vmatprep.subr.mxu0 0.0
      %2579 = vmatpush2.msra.mxu0 0.0
      %2580 = vmatprep.subr.mxu0 0.0
      %2581 = vmatpush2.msra.mxu0 0.0
      %2582 = vmatprep.subr.mxu0 0.0
      %2583 = vmatpush2.msra.mxu0 0.0
      %2584 = vmatprep.subr.mxu0 0.0
      %2585 = vmatpush2.msra.mxu0 0.0
      %2586 = vmatprep.subr.mxu0 0.0
      %2587 = vmatpush2.msra.mxu0 0.0
      %2588 = vmatprep.subr.mxu0 0.0
      %2589 = vmatpush2.msra.mxu0 0.0
      %2590 = vmatprep.subr.mxu0 0.0
      %2591 = vmatpush2.msra.mxu0 0.0
      %2592 = vmatprep.subr.mxu0 0.0
      %2593 = vmatpush2.msra.mxu0 0.0
      %2594 = vmatprep.subr.mxu0 0.0
      %2595 = vmatpush2.msra.mxu0 0.0
      %2596 = vmatprep.subr.mxu0 0.0
      %2597 = vmatpush2.msra.mxu0 0.0
      %2598 = vmatprep.subr.mxu0 0.0
      %2599 = vmatpush2.msra.mxu0 0.0
      %2600 = vmatprep.subr.mxu0 0.0
      %2601 = vmatpush2.msra.mxu0 0.0
      %2602 = vmatprep.subr.mxu0 0.0
      %2603 = vmatpush2.msra.mxu0 0.0
      %2604 = vmatprep.subr.mxu0 0.0
      %2605 = vmatpush2.msra.mxu0 0.0
      %2606 = vmatprep.subr.mxu0 0.0
      %2607 = vmatpush2.msra.mxu0 0.0
      %2608 = vmatprep.subr.mxu0 0.0
      %2609 = vmatpush2.msra.mxu0 0.0
      %2610 = vmatprep.mubr.f32.mxu0 0.0
      %2611 = vmatmul.mubr.f32.gmra.mxu0 %v1243
      %v2612 = vpop.f32.mrf.mxu0
      %v2613 = vadd.f32 0.0, %v2612
      %v2614 = vpop.f32.mrf.mxu0
      %2615 = vmatprep.mubr.f32.mxu0 0.0
      %2616 = vmatmul.mubr.f32.gmra.mxu0 %v1246
      %v2617 = vpop.f32.mrf.mxu0
      %v2618 = vadd.f32 0.0, %v2617
      %v2619 = vpop.f32.mrf.mxu0
      %2620 = vmatprep.mubr.f32.mxu0 0.0
      %2621 = vmatmul.mubr.f32.gmra.mxu0 %v1249
      %v2622 = vpop.f32.mrf.mxu0
      %v2623 = vadd.f32 0.0, %v2622
      %v2624 = vpop.f32.mrf.mxu0
      %2625 = vmatprep.mubr.f32.mxu0 0.0
      %2626 = vmatmul.mubr.f32.gmra.mxu0 %v1252
      %v2627 = vpop.f32.mrf.mxu0
      %v2628 = vadd.f32 0.0, %v2627
      %v2629 = vpop.f32.mrf.mxu0
      %2630 = vmatprep.mubr.f32.mxu0 0.0
      %2631 = vmatmul.mubr.f32.gmra.mxu0 %v1255
      %v2632 = vpop.f32.mrf.mxu0
      %v2633 = vadd.f32 0.0, %v2632
      %v2634 = vpop.f32.mrf.mxu0
      %2635 = vmatprep.mubr.f32.mxu0 0.0
      %2636 = vmatmul.mubr.f32.gmra.mxu0 %v1258
      %v2637 = vpop.f32.mrf.mxu0
      %v2638 = vadd.f32 0.0, %v2637
      %v2639 = vpop.f32.mrf.mxu0
      %2640 = vmatprep.mubr.f32.mxu0 0.0
      %2641 = vmatmul.mubr.f32.gmra.mxu0 %v1261
      %v2642 = vpop.f32.mrf.mxu0
      %v2643 = vadd.f32 0.0, %v2642
      %v2644 = vpop.f32.mrf.mxu0
      %2645 = vmatprep.mubr.f32.mxu0 0.0
      %2646 = vmatmul.mubr.f32.gmra.mxu0 %v1264
      %v2647 = vpop.f32.mrf.mxu0
      %v2648 = vadd.f32 0.0, %v2647
      %v2649 = vpop.f32.mrf.mxu0
      %2650 = vmatprep.mubr.f32.mxu0 0.0
      %2651 = vmatmul.mubr.f32.gmra.mxu0 %v1267
      %v2652 = vpop.f32.mrf.mxu0
      %v2653 = vadd.f32 0.0, %v2652
      %v2654 = vpop.f32.mrf.mxu0
      %2655 = vmatprep.mubr.f32.mxu0 0.0
      %2656 = vmatmul.mubr.f32.gmra.mxu0 %v1270
      %v2657 = vpop.f32.mrf.mxu0
      %v2658 = vadd.f32 0.0, %v2657
      %v2659 = vpop.f32.mrf.mxu0
      %2660 = vmatprep.mubr.f32.mxu0 0.0
      %2661 = vmatmul.mubr.f32.gmra.mxu0 %v1273
      %v2662 = vpop.f32.mrf.mxu0
      %v2663 = vadd.f32 0.0, %v2662
      %v2664 = vpop.f32.mrf.mxu0
      %2665 = vmatprep.mubr.f32.mxu0 0.0
      %2666 = vmatmul.mubr.f32.gmra.mxu0 %v1276
      %v2667 = vpop.f32.mrf.mxu0
      %v2668 = vadd.f32 0.0, %v2667
      %v2669 = vpop.f32.mrf.mxu0
      %2670 = vmatprep.mubr.f32.mxu0 0.0
      %2671 = vmatmul.mubr.f32.gmra.mxu0 %v1279
      %v2672 = vpop.f32.mrf.mxu0
      %v2673 = vadd.f32 0.0, %v2672
      %v2674 = vpop.f32.mrf.mxu0
      %2675 = vmatprep.mubr.f32.mxu0 0.0
      %2676 = vmatmul.mubr.f32.gmra.mxu0 %v1282
      %v2677 = vpop.f32.mrf.mxu0
      %v2678 = vadd.f32 0.0, %v2677
      %v2679 = vpop.f32.mrf.mxu0
      %2680 = vmatprep.mubr.f32.mxu0 0.0
      %2681 = vmatmul.mubr.f32.gmra.mxu0 %v1285
      %v2682 = vpop.f32.mrf.mxu0
      %v2683 = vadd.f32 0.0, %v2682
      %v2684 = vpop.f32.mrf.mxu0
      %2685 = vmatprep.mubr.f32.mxu0 0.0
      %2686 = vmatmul.mubr.f32.gmra.mxu0 %v1288
      %v2687 = vpop.f32.mrf.mxu0
      %v2688 = vadd.f32 0.0, %v2687
      %v2689 = vpop.f32.mrf.mxu0
      %2690 = vmatprep.mubr.f32.mxu0 0.0
      %2691 = vmatmul.mubr.f32.gmra.mxu0 %v1291
      %v2692 = vpop.f32.mrf.mxu0
      %v2693 = vadd.f32 0.0, %v2692
      %v2694 = vpop.f32.mrf.mxu0
      %2695 = vmatprep.mubr.f32.mxu0 0.0
      %2696 = vmatmul.mubr.f32.gmra.mxu0 %v1294
      %v2697 = vpop.f32.mrf.mxu0
      %v2698 = vadd.f32 0.0, %v2697
      %v2699 = vpop.f32.mrf.mxu0
      %2700 = vmatprep.mubr.f32.mxu0 0.0
      %2701 = vmatmul.mubr.f32.gmra.mxu0 %v1297
      %v2702 = vpop.f32.mrf.mxu0
      %v2703 = vadd.f32 0.0, %v2702
      %v2704 = vpop.f32.mrf.mxu0
      %2705 = vmatprep.mubr.f32.mxu0 0.0
      %2706 = vmatmul.mubr.f32.gmra.mxu0 %v1300
      %v2707 = vpop.f32.mrf.mxu0
      %v2708 = vadd.f32 0.0, %v2707
      %v2709 = vpop.f32.mrf.mxu0
      %2710 = vmatprep.mubr.f32.mxu0 0.0
      %2711 = vmatmul.mubr.f32.gmra.mxu0 %v1303
      %v2712 = vpop.f32.mrf.mxu0
      %v2713 = vadd.f32 0.0, %v2712
      %v2714 = vpop.f32.mrf.mxu0
      %2715 = vmatprep.mubr.f32.mxu0 0.0
      %2716 = vmatmul.mubr.f32.gmra.mxu0 %v1306
      %v2717 = vpop.f32.mrf.mxu0
      %v2718 = vadd.f32 0.0, %v2717
      %v2719 = vpop.f32.mrf.mxu0
      %2720 = vmatprep.mubr.f32.mxu0 0.0
      %2721 = vmatmul.mubr.f32.gmra.mxu0 %v1309
      %v2722 = vpop.f32.mrf.mxu0
      %v2723 = vadd.f32 0.0, %v2722
      %v2724 = vpop.f32.mrf.mxu0
      %2725 = vmatprep.mubr.f32.mxu0 0.0
      %2726 = vmatmul.mubr.f32.gmra.mxu0 %v1312
      %v2727 = vpop.f32.mrf.mxu0
      %v2728 = vadd.f32 0.0, %v2727
      %v2729 = vpop.f32.mrf.mxu0
      %2730 = vmatprep.mubr.f32.mxu0 0.0
      %2731 = vmatmul.mubr.f32.gmra.mxu0 %v1315
      %v2732 = vpop.f32.mrf.mxu0
      %v2733 = vadd.f32 0.0, %v2732
      %v2734 = vpop.f32.mrf.mxu0
      %2735 = vmatprep.mubr.f32.mxu0 0.0
      %2736 = vmatmul.mubr.f32.gmra.mxu0 %v1318
      %v2737 = vpop.f32.mrf.mxu0
      %v2738 = vadd.f32 0.0, %v2737
      %v2739 = vpop.f32.mrf.mxu0
      %2740 = vmatprep.mubr.f32.mxu0 0.0
      %2741 = vmatmul.mubr.f32.gmra.mxu0 %v1321
      %v2742 = vpop.f32.mrf.mxu0
      %v2743 = vadd.f32 0.0, %v2742
      %v2744 = vpop.f32.mrf.mxu0
      %2745 = vmatprep.mubr.f32.mxu0 0.0
      %2746 = vmatmul.mubr.f32.gmra.mxu0 %v1324
      %v2747 = vpop.f32.mrf.mxu0
      %v2748 = vadd.f32 0.0, %v2747
      %v2749 = vpop.f32.mrf.mxu0
      %2750 = vmatprep.mubr.f32.mxu0 0.0
      %2751 = vmatmul.mubr.f32.gmra.mxu0 %v1327
      %v2752 = vpop.f32.mrf.mxu0
      %v2753 = vadd.f32 0.0, %v2752
      %v2754 = vpop.f32.mrf.mxu0
      %2755 = vmatprep.mubr.f32.mxu0 0.0
      %2756 = vmatmul.mubr.f32.gmra.mxu0 %v1330
      %v2757 = vpop.f32.mrf.mxu0
      %v2758 = vadd.f32 0.0, %v2757
      %v2759 = vpop.f32.mrf.mxu0
      %2760 = vmatprep.mubr.f32.mxu0 0.0
      %2761 = vmatmul.mubr.f32.gmra.mxu0 %v1333
      %v2762 = vpop.f32.mrf.mxu0
      %v2763 = vadd.f32 0.0, %v2762
      %v2764 = vpop.f32.mrf.mxu0
      %2765 = vmatprep.mubr.f32.mxu0 0.0
      %2766 = vmatmul.mubr.f32.gmra.mxu0 %v1336
      %v2767 = vpop.f32.mrf.mxu0
      %v2768 = vadd.f32 0.0, %v2767
      %v2769 = vpop.f32.mrf.mxu0
      %2770 = vmatprep.mubr.f32.mxu0 0.0
      %2771 = vmatmul.mubr.f32.gmra.mxu0 %v1339
      %v2772 = vpop.f32.mrf.mxu0
      %v2773 = vadd.f32 0.0, %v2772
      %v2774 = vpop.f32.mrf.mxu0
      %2775 = vmatprep.mubr.f32.mxu0 0.0
      %2776 = vmatmul.mubr.f32.gmra.mxu0 %v1342
      %v2777 = vpop.f32.mrf.mxu0
      %v2778 = vadd.f32 0.0, %v2777
      %v2779 = vpop.f32.mrf.mxu0
      %2780 = vmatprep.mubr.f32.mxu0 0.0
      %2781 = vmatmul.mubr.f32.gmra.mxu0 %v1345
      %v2782 = vpop.f32.mrf.mxu0
      %v2783 = vadd.f32 0.0, %v2782
      %v2784 = vpop.f32.mrf.mxu0
      %2785 = vmatprep.mubr.f32.mxu0 0.0
      %2786 = vmatmul.mubr.f32.gmra.mxu0 %v1348
      %v2787 = vpop.f32.mrf.mxu0
      %v2788 = vadd.f32 0.0, %v2787
      %v2789 = vpop.f32.mrf.mxu0
      %2790 = vmatprep.mubr.f32.mxu0 0.0
      %2791 = vmatmul.mubr.f32.gmra.mxu0 %v1351
      %v2792 = vpop.f32.mrf.mxu0
      %v2793 = vadd.f32 0.0, %v2792
      %v2794 = vpop.f32.mrf.mxu0
      %2795 = vmatprep.mubr.f32.mxu0 0.0
      %2796 = vmatmul.mubr.f32.gmra.mxu0 %v1354
      %v2797 = vpop.f32.mrf.mxu0
      %v2798 = vadd.f32 0.0, %v2797
      %v2799 = vpop.f32.mrf.mxu0
      %2800 = vmatprep.mubr.f32.mxu0 0.0
      %2801 = vmatmul.mubr.f32.gmra.mxu0 %v1357
      %v2802 = vpop.f32.mrf.mxu0
      %v2803 = vadd.f32 0.0, %v2802
      %v2804 = vpop.f32.mrf.mxu0
      %2805 = vmatprep.mubr.f32.mxu0 0.0
      %2806 = vmatmul.mubr.f32.gmra.mxu0 %v1360
      %v2807 = vpop.f32.mrf.mxu0
      %v2808 = vadd.f32 0.0, %v2807
      %v2809 = vpop.f32.mrf.mxu0
      %2810 = vmatprep.mubr.f32.mxu0 0.0
      %2811 = vmatmul.mubr.f32.gmra.mxu0 %v1363
      %v2812 = vpop.f32.mrf.mxu0
      %v2813 = vadd.f32 0.0, %v2812
      %v2814 = vpop.f32.mrf.mxu0
      %2815 = vmatprep.mubr.f32.mxu0 0.0
      %2816 = vmatmul.mubr.f32.gmra.mxu0 %v1366
      %v2817 = vpop.f32.mrf.mxu0
      %v2818 = vadd.f32 0.0, %v2817
      %v2819 = vpop.f32.mrf.mxu0
      %2820 = vmatprep.mubr.f32.mxu0 0.0
      %2821 = vmatmul.mubr.f32.gmra.mxu0 %v1369
      %v2822 = vpop.f32.mrf.mxu0
      %v2823 = vadd.f32 0.0, %v2822
      %v2824 = vpop.f32.mrf.mxu0
      %2825 = vmatprep.mubr.f32.mxu0 0.0
      %2826 = vmatmul.mubr.f32.gmra.mxu0 %v1372
      %v2827 = vpop.f32.mrf.mxu0
      %v2828 = vadd.f32 0.0, %v2827
      %v2829 = vpop.f32.mrf.mxu0
      %2830 = vmatprep.mubr.f32.mxu0 0.0
      %2831 = vmatmul.mubr.f32.gmra.mxu0 %v1375
      %v2832 = vpop.f32.mrf.mxu0
      %v2833 = vadd.f32 0.0, %v2832
      %v2834 = vpop.f32.mrf.mxu0
      %2835 = vmatprep.mubr.f32.mxu0 0.0
      %2836 = vmatmul.mubr.f32.gmra.mxu0 %v1378
      %v2837 = vpop.f32.mrf.mxu0
      %v2838 = vadd.f32 0.0, %v2837
      %v2839 = vpop.f32.mrf.mxu0
      %2840 = vmatprep.mubr.f32.mxu0 0.0
      %2841 = vmatmul.mubr.f32.gmra.mxu0 %v1381
      %v2842 = vpop.f32.mrf.mxu0
      %v2843 = vadd.f32 0.0, %v2842
      %v2844 = vpop.f32.mrf.mxu0
      %2845 = vmatprep.mubr.f32.mxu0 0.0
      %2846 = vmatmul.mubr.f32.gmra.mxu0 %v1384
      %v2847 = vpop.f32.mrf.mxu0
      %v2848 = vadd.f32 0.0, %v2847
      %v2849 = vpop.f32.mrf.mxu0
      %2850 = vdwg.mxu0
      %v2851 = vrot.slane %v2545, 4
      %v2852 = vadd.f32 %v2545, %v2851
      %v2853 = vrot.slane %v2852, 2
      %v2854 = vadd.f32 %v2852, %v2853
      %v2855 = vrot.slane %v2854, 1
      %v2856 = vadd.f32 %v2854, %v2855
      %v2857 = vmul.f32 %v2613, 0.01
      %v2858 = vmul.f32 %v2618, 0.01
      %v2859 = vmul.f32 %v2623, 0.01
      %v2860 = vmul.f32 %v2628, 0.01
      %v2861 = vmul.f32 %v2633, 0.01
      %v2862 = vmul.f32 %v2638, 0.01
      %v2863 = vmul.f32 %v2643, 0.01
      %v2864 = vmul.f32 %v2648, 0.01
      %v2865 = vmul.f32 %v2653, 0.01
      %v2866 = vmul.f32 %v2658, 0.01
      %v2867 = vmul.f32 %v2663, 0.01
      %v2868 = vmul.f32 %v2668, 0.01
      %v2869 = vmul.f32 %v2673, 0.01
      %v2870 = vmul.f32 %v2678, 0.01
      %v2871 = vmul.f32 %v2683, 0.01
      %v2872 = vmul.f32 %v2688, 0.01
      %v2873 = vmul.f32 %v2693, 0.01
      %v2874 = vmul.f32 %v2698, 0.01
      %v2875 = vmul.f32 %v2703, 0.01
      %v2876 = vmul.f32 %v2708, 0.01
      %v2877 = vmul.f32 %v2713, 0.01
      %v2878 = vmul.f32 %v2718, 0.01
      %v2879 = vmul.f32 %v2723, 0.01
      %v2880 = vmul.f32 %v2728, 0.01
      %v2881 = vmul.f32 %v2733, 0.01
      %v2882 = vmul.f32 %v2738, 0.01
      %v2883 = vmul.f32 %v2743, 0.01
      %v2884 = vmul.f32 %v2748, 0.01
      %v2885 = vmul.f32 %v2753, 0.01
      %v2886 = vmul.f32 %v2758, 0.01
      %v2887 = vmul.f32 %v2763, 0.01
      %v2888 = vmul.f32 %v2768, 0.01
      %v2889 = vmul.f32 %v2773, 0.01
      %v2890 = vmul.f32 %v2778, 0.01
      %v2891 = vmul.f32 %v2783, 0.01
      %v2892 = vmul.f32 %v2788, 0.01
      %v2893 = vmul.f32 %v2793, 0.01
      %v2894 = vmul.f32 %v2798, 0.01
      %v2895 = vmul.f32 %v2803, 0.01
      %v2896 = vmul.f32 %v2808, 0.01
      %v2897 = vmul.f32 %v2813, 0.01
      %v2898 = vmul.f32 %v2818, 0.01
      %v2899 = vmul.f32 %v2823, 0.01
      %v2900 = vmul.f32 %v2828, 0.01
      %v2901 = vmul.f32 %v2833, 0.01
      %v2902 = vmul.f32 %v2838, 0.01
      %v2903 = vmul.f32 %v2843, 0.01
      %v2904 = vmul.f32 %v2848, 0.01
      %v2905 = vsub.f32 %v1895, %v2857
      %v2906 = vsub.f32 %v1896, %v2858
      %v2907 = vsub.f32 %v1897, %v2859
      %v2908 = vsub.f32 %v1898, %v2860
      %v2909 = vsub.f32 %v1899, %v2861
      %v2910 = vsub.f32 %v1900, %v2862
      %v2911 = vsub.f32 %v1901, %v2863
      %v2912 = vsub.f32 %v1902, %v2864
      %v2913 = vsub.f32 %v1903, %v2865
      %v2914 = vsub.f32 %v1904, %v2866
      %v2915 = vsub.f32 %v1905, %v2867
      %v2916 = vsub.f32 %v1906, %v2868
      %v2917 = vsub.f32 %v1907, %v2869
      %v2918 = vsub.f32 %v1908, %v2870
      %v2919 = vsub.f32 %v1909, %v2871
      %v2920 = vsub.f32 %v1910, %v2872
      %v2921 = vsub.f32 %v1911, %v2873
      %v2922 = vsub.f32 %v1912, %v2874
      %v2923 = vsub.f32 %v1913, %v2875
      %v2924 = vsub.f32 %v1914, %v2876
      %v2925 = vsub.f32 %v1915, %v2877
      %v2926 = vsub.f32 %v1916, %v2878
      %v2927 = vsub.f32 %v1917, %v2879
      %v2928 = vsub.f32 %v1918, %v2880
      %v2929 = vsub.f32 %v1919, %v2881
      %v2930 = vsub.f32 %v1920, %v2882
      %v2931 = vsub.f32 %v1921, %v2883
      %v2932 = vsub.f32 %v1922, %v2884
      %v2933 = vsub.f32 %v1923, %v2885
      %v2934 = vsub.f32 %v1924, %v2886
      %v2935 = vsub.f32 %v1925, %v2887
      %v2936 = vsub.f32 %v1926, %v2888
      %v2937 = vsub.f32 %v1927, %v2889
      %v2938 = vsub.f32 %v1928, %v2890
      %v2939 = vsub.f32 %v1929, %v2891
      %v2940 = vsub.f32 %v1930, %v2892
      %v2941 = vsub.f32 %v1931, %v2893
      %v2942 = vsub.f32 %v1932, %v2894
      %v2943 = vsub.f32 %v1933, %v2895
      %v2944 = vsub.f32 %v1934, %v2896
      %v2945 = vsub.f32 %v1935, %v2897
      %v2946 = vsub.f32 %v1936, %v2898
      %v2947 = vsub.f32 %v1937, %v2899
      %v2948 = vsub.f32 %v1938, %v2900
      %v2949 = vsub.f32 %v1939, %v2901
      %v2950 = vsub.f32 %v1940, %v2902
      %v2951 = vsub.f32 %v1941, %v2903
      %v2952 = vsub.f32 %v1942, %v2904
      %2953 = vst [vmem:[#allocation2] sm:$0xff] %v2905
      %2954 = vst [vmem:[#allocation2 + $0x8] sm:$0xff] %v2906
      %2955 = vst [vmem:[#allocation2 + $0x10] sm:$0xff] %v2907
      %2956 = vst [vmem:[#allocation2 + $0x18] sm:$0xff] %v2908
      %2957 = vst [vmem:[#allocation2 + $0x20] sm:$0xff] %v2909
      %2958 = vst [vmem:[#allocation2 + $0x28] sm:$0xff] %v2910
      %2959 = vst [vmem:[#allocation2 + $0x30] sm:$0xff] %v2911
      %2960 = vst [vmem:[#allocation2 + $0x38] sm:$0xff] %v2912
      %2961 = vst [vmem:[#allocation2 + $0x40] sm:$0xff] %v2913
      %2962 = vst [vmem:[#allocation2 + $0x48] sm:$0xff] %v2914
      %2963 = vst [vmem:[#allocation2 + $0x50] sm:$0xff] %v2915
      %2964 = vst [vmem:[#allocation2 + $0x58] sm:$0xff] %v2916
      %2965 = vst [vmem:[#allocation2 + $0x60] sm:$0xff] %v2917
      %2966 = vst [vmem:[#allocation2 + $0x68] sm:$0xff] %v2918
      %2967 = vst [vmem:[#allocation2 + $0x70] sm:$0xff] %v2919
      %2968 = vst [vmem:[#allocation2 + $0x78] sm:$0xff] %v2920
      %2969 = vst [vmem:[#allocation2 + $0x80] sm:$0xff] %v2921
      %2970 = vst [vmem:[#allocation2 + $0x88] sm:$0xff] %v2922
      %2971 = vst [vmem:[#allocation2 + $0x90] sm:$0xff] %v2923
      %2972 = vst [vmem:[#allocation2 + $0x98] sm:$0xff] %v2924
      %2973 = vst [vmem:[#allocation2 + $0xa0] sm:$0xff] %v2925
      %2974 = vst [vmem:[#allocation2 + $0xa8] sm:$0xff] %v2926
      %2975 = vst [vmem:[#allocation2 + $0xb0] sm:$0xff] %v2927
      %2976 = vst [vmem:[#allocation2 + $0xb8] sm:$0xff] %v2928
      %2977 = vst [vmem:[#allocation2 + $0xc0] sm:$0xff] %v2929
      %2978 = vst [vmem:[#allocation2 + $0xc8] sm:$0xff] %v2930
      %2979 = vst [vmem:[#allocation2 + $0xd0] sm:$0xff] %v2931
      %2980 = vst [vmem:[#allocation2 + $0xd8] sm:$0xff] %v2932
      %2981 = vst [vmem:[#allocation2 + $0xe0] sm:$0xff] %v2933
      %2982 = vst [vmem:[#allocation2 + $0xe8] sm:$0xff] %v2934
      %2983 = vst [vmem:[#allocation2 + $0xf0] sm:$0xff] %v2935
      %2984 = vst [vmem:[#allocation2 + $0xf8] sm:$0xff] %v2936
      %2985 = vst [vmem:[#allocation2 + $0x100] sm:$0xff] %v2937
      %2986 = vst [vmem:[#allocation2 + $0x108] sm:$0xff] %v2938
      %2987 = vst [vmem:[#allocation2 + $0x110] sm:$0xff] %v2939
      %2988 = vst [vmem:[#allocation2 + $0x118] sm:$0xff] %v2940
      %2989 = vst [vmem:[#allocation2 + $0x120] sm:$0xff] %v2941
      %2990 = vst [vmem:[#allocation2 + $0x128] sm:$0xff] %v2942
      %2991 = vst [vmem:[#allocation2 + $0x130] sm:$0xff] %v2943
      %2992 = vst [vmem:[#allocation2 + $0x138] sm:$0xff] %v2944
      %2993 = vst [vmem:[#allocation2 + $0x140] sm:$0xff] %v2945
      %2994 = vst [vmem:[#allocation2 + $0x148] sm:$0xff] %v2946
      %2995 = vst [vmem:[#allocation2 + $0x150] sm:$0xff] %v2947
      %2996 = vst [vmem:[#allocation2 + $0x158] sm:$0xff] %v2948
      %2997 = vst [vmem:[#allocation2 + $0x160] sm:$0xff] %v2949
      %2998 = vst [vmem:[#allocation2 + $0x168] sm:$0xff] %v2950
      %2999 = vst [vmem:[#allocation2 + $0x170] sm:$0xff] %v2951
      %3000 = vst [vmem:[#allocation2 + $0x178] sm:$0xff] %v2952
      %v3001 = vmul.f32 %v2856, 0.01
      %v3002 = vsub.f32 %v1943, %v3001
      %3003 = vst [vmem:[#allocation3] sm:$0x1] %v3002
      %v3004 = vmul.f32 %v2337, 0.01
      %v3005 = vmul.f32 %v2342, 0.01
      %v3006 = vmul.f32 %v2347, 0.01
      %v3007 = vmul.f32 %v2352, 0.01
      %v3008 = vmul.f32 %v2357, 0.01
      %v3009 = vmul.f32 %v2362, 0.01
      %v3010 = vmul.f32 %v2367, 0.01
      %v3011 = vmul.f32 %v2372, 0.01
      %v3012 = vmul.f32 %v2377, 0.01
      %v3013 = vmul.f32 %v2382, 0.01
      %v3014 = vmul.f32 %v2387, 0.01
      %v3015 = vmul.f32 %v2392, 0.01
      %v3016 = vmul.f32 %v2397, 0.01
      %v3017 = vmul.f32 %v2402, 0.01
      %v3018 = vmul.f32 %v2407, 0.01
      %v3019 = vmul.f32 %v2412, 0.01
      %v3020 = vsub.f32 %v1944, %v3004
      %v3021 = vsub.f32 %v1945, %v3005
      %v3022 = vsub.f32 %v1946, %v3006
      %v3023 = vsub.f32 %v1947, %v3007
      %v3024 = vsub.f32 %v1948, %v3008
      %v3025 = vsub.f32 %v1949, %v3009
      %v3026 = vsub.f32 %v1950, %v3010
      %v3027 = vsub.f32 %v1951, %v3011
      %v3028 = vsub.f32 %v1952, %v3012
      %v3029 = vsub.f32 %v1953, %v3013
      %v3030 = vsub.f32 %v1954, %v3014
      %v3031 = vsub.f32 %v1955, %v3015
      %v3032 = vsub.f32 %v1956, %v3016
      %v3033 = vsub.f32 %v1957, %v3017
      %v3034 = vsub.f32 %v1958, %v3018
      %v3035 = vsub.f32 %v1959, %v3019
      %3036 = vst.msk [vmem:[#allocation4] sm:$0xff] %vm470, %v3020
      %3037 = vst.msk [vmem:[#allocation4 + $0x8] sm:$0xff] %vm470, %v3021
      %3038 = vst.msk [vmem:[#allocation4 + $0x10] sm:$0xff] %vm470, %v3022
      %3039 = vst.msk [vmem:[#allocation4 + $0x18] sm:$0xff] %vm470, %v3023
      %3040 = vst.msk [vmem:[#allocation4 + $0x20] sm:$0xff] %vm470, %v3024
      %3041 = vst.msk [vmem:[#allocation4 + $0x28] sm:$0xff] %vm470, %v3025
      %3042 = vst.msk [vmem:[#allocation4 + $0x30] sm:$0xff] %vm470, %v3026
      %3043 = vst.msk [vmem:[#allocation4 + $0x38] sm:$0xff] %vm470, %v3027
      %3044 = vst.msk [vmem:[#allocation4 + $0x40] sm:$0xff] %vm470, %v3028
      %3045 = vst.msk [vmem:[#allocation4 + $0x48] sm:$0xff] %vm470, %v3029
      %3046 = vst.msk [vmem:[#allocation4 + $0x50] sm:$0xff] %vm470, %v3030
      %3047 = vst.msk [vmem:[#allocation4 + $0x58] sm:$0xff] %vm470, %v3031
      %3048 = vst.msk [vmem:[#allocation4 + $0x60] sm:$0xff] %vm470, %v3032
      %3049 = vst.msk [vmem:[#allocation4 + $0x68] sm:$0xff] %vm470, %v3033
      %3050 = vst.msk [vmem:[#allocation4 + $0x70] sm:$0xff] %vm470, %v3034
      %3051 = vst.msk [vmem:[#allocation4 + $0x78] sm:$0xff] %vm470, %v3035
      %v3052 = vmul.f32 %v2421, 0.01
      %v3053 = vsub.f32 %v1960, %v3052
      %3054 = vst.msk [vmem:[#allocation5] sm:$0x1] %vm488, %v3053
      %v3055 = vld [vmem:[#allocation2] sm:$0xff]
      %v3056 = vld [vmem:[#allocation2 + $0x8] sm:$0xff]
      %v3057 = vld [vmem:[#allocation2 + $0x10] sm:$0xff]
      %v3058 = vld [vmem:[#allocation2 + $0x18] sm:$0xff]
      %v3059 = vld [vmem:[#allocation2 + $0x20] sm:$0xff]
      %v3060 = vld [vmem:[#allocation2 + $0x28] sm:$0xff]
      %v3061 = vld [vmem:[#allocation2 + $0x30] sm:$0xff]
      %v3062 = vld [vmem:[#allocation2 + $0x38] sm:$0xff]
      %v3063 = vld [vmem:[#allocation2 + $0x40] sm:$0xff]
      %v3064 = vld [vmem:[#allocation2 + $0x48] sm:$0xff]
      %v3065 = vld [vmem:[#allocation2 + $0x50] sm:$0xff]
      %v3066 = vld [vmem:[#allocation2 + $0x58] sm:$0xff]
      %v3067 = vld [vmem:[#allocation2 + $0x60] sm:$0xff]
      %v3068 = vld [vmem:[#allocation2 + $0x68] sm:$0xff]
      %v3069 = vld [vmem:[#allocation2 + $0x70] sm:$0xff]
      %v3070 = vld [vmem:[#allocation2 + $0x78] sm:$0xff]
      %v3071 = vld [vmem:[#allocation2 + $0x80] sm:$0xff]
      %v3072 = vld [vmem:[#allocation2 + $0x88] sm:$0xff]
      %v3073 = vld [vmem:[#allocation2 + $0x90] sm:$0xff]
      %v3074 = vld [vmem:[#allocation2 + $0x98] sm:$0xff]
      %v3075 = vld [vmem:[#allocation2 + $0xa0] sm:$0xff]
      %v3076 = vld [vmem:[#allocation2 + $0xa8] sm:$0xff]
      %v3077 = vld [vmem:[#allocation2 + $0xb0] sm:$0xff]
      %v3078 = vld [vmem:[#allocation2 + $0xb8] sm:$0xff]
      %v3079 = vld [vmem:[#allocation2 + $0xc0] sm:$0xff]
      %v3080 = vld [vmem:[#allocation2 + $0xc8] sm:$0xff]
      %v3081 = vld [vmem:[#allocation2 + $0xd0] sm:$0xff]
      %v3082 = vld [vmem:[#allocation2 + $0xd8] sm:$0xff]
      %v3083 = vld [vmem:[#allocation2 + $0xe0] sm:$0xff]
      %v3084 = vld [vmem:[#allocation2 + $0xe8] sm:$0xff]
      %v3085 = vld [vmem:[#allocation2 + $0xf0] sm:$0xff]
      %v3086 = vld [vmem:[#allocation2 + $0xf8] sm:$0xff]
      %v3087 = vld [vmem:[#allocation2 + $0x100] sm:$0xff]
      %v3088 = vld [vmem:[#allocation2 + $0x108] sm:$0xff]
      %v3089 = vld [vmem:[#allocation2 + $0x110] sm:$0xff]
      %v3090 = vld [vmem:[#allocation2 + $0x118] sm:$0xff]
      %v3091 = vld [vmem:[#allocation2 + $0x120] sm:$0xff]
      %v3092 = vld [vmem:[#allocation2 + $0x128] sm:$0xff]
      %v3093 = vld [vmem:[#allocation2 + $0x130] sm:$0xff]
      %v3094 = vld [vmem:[#allocation2 + $0x138] sm:$0xff]
      %v3095 = vld [vmem:[#allocation2 + $0x140] sm:$0xff]
      %v3096 = vld [vmem:[#allocation2 + $0x148] sm:$0xff]
      %v3097 = vld [vmem:[#allocation2 + $0x150] sm:$0xff]
      %v3098 = vld [vmem:[#allocation2 + $0x158] sm:$0xff]
      %v3099 = vld [vmem:[#allocation2 + $0x160] sm:$0xff]
      %v3100 = vld [vmem:[#allocation2 + $0x168] sm:$0xff]
      %v3101 = vld [vmem:[#allocation2 + $0x170] sm:$0xff]
      %v3102 = vld [vmem:[#allocation2 + $0x178] sm:$0xff]
      %v3103 = vld [vmem:[#allocation3] sm:$0x1]
      %v3104 = vld [vmem:[#allocation4] sm:$0xff]
      %v3105 = vld [vmem:[#allocation4 + $0x8] sm:$0xff]
      %v3106 = vld [vmem:[#allocation4 + $0x10] sm:$0xff]
      %v3107 = vld [vmem:[#allocation4 + $0x18] sm:$0xff]
      %v3108 = vld [vmem:[#allocation4 + $0x20] sm:$0xff]
      %v3109 = vld [vmem:[#allocation4 + $0x28] sm:$0xff]
      %v3110 = vld [vmem:[#allocation4 + $0x30] sm:$0xff]
      %v3111 = vld [vmem:[#allocation4 + $0x38] sm:$0xff]
      %v3112 = vld [vmem:[#allocation4 + $0x40] sm:$0xff]
      %v3113 = vld [vmem:[#allocation4 + $0x48] sm:$0xff]
      %v3114 = vld [vmem:[#allocation4 + $0x50] sm:$0xff]
      %v3115 = vld [vmem:[#allocation4 + $0x58] sm:$0xff]
      %v3116 = vld [vmem:[#allocation4 + $0x60] sm:$0xff]
      %v3117 = vld [vmem:[#allocation4 + $0x68] sm:$0xff]
      %v3118 = vld [vmem:[#allocation4 + $0x70] sm:$0xff]
      %v3119 = vld [vmem:[#allocation4 + $0x78] sm:$0xff]
      %v3120 = vld [vmem:[#allocation5] sm:$0x1]
      %v3122 = vlaneseq
      %v3123 = vshrl.u32 %v3122, 7
      %v3124 = vsub.s32 0, %v3123
      %v3125 = vrot.slane %v3103, %v3124
      %3127 = vmatprep.subr.mxu0 0.0
      %3128 = vmatpush1.msra.mxu0 %v3070
      %3129 = vmatprep.subr.mxu0 0.0
      %3130 = vmatpush1.msra.mxu0 %v3069
      %3131 = vmatprep.subr.mxu0 0.0
      %3132 = vmatpush1.msra.mxu0 %v3068
      %3133 = vmatprep.subr.mxu0 0.0
      %3134 = vmatpush1.msra.mxu0 %v3067
      %3135 = vmatprep.subr.mxu0 0.0
      %3136 = vmatpush1.msra.mxu0 %v3066
      %3137 = vmatprep.subr.mxu0 0.0
      %3138 = vmatpush1.msra.mxu0 %v3065
      %3139 = vmatprep.subr.mxu0 0.0
      %3140 = vmatpush1.msra.mxu0 %v3064
      %3141 = vmatprep.subr.mxu0 0.0
      %3142 = vmatpush1.msra.mxu0 %v3063
      %3143 = vmatprep.subr.mxu0 0.0
      %3144 = vmatpush1.msra.mxu0 %v3062
      %3145 = vmatprep.subr.mxu0 0.0
      %3146 = vmatpush1.msra.mxu0 %v3061
      %3147 = vmatprep.subr.mxu0 0.0
      %3148 = vmatpush1.msra.mxu0 %v3060
      %3149 = vmatprep.subr.mxu0 0.0
      %3150 = vmatpush1.msra.mxu0 %v3059
      %3151 = vmatprep.subr.mxu0 0.0
      %3152 = vmatpush1.msra.mxu0 %v3058
      %3153 = vmatprep.subr.mxu0 0.0
      %3154 = vmatpush1.msra.mxu0 %v3057
      %3155 = vmatprep.subr.mxu0 0.0
      %3156 = vmatpush1.msra.mxu0 %v3056
      %3157 = vmatprep.subr.mxu0 0.0
      %3158 = vmatpush1.msra.mxu0 %v3055
      %3159 = vmatprep.subr.mxu0 0.0
      %3160 = vmatpush2.msra.mxu0 %v3086
      %3161 = vmatprep.subr.mxu0 0.0
      %3162 = vmatpush2.msra.mxu0 %v3085
      %3163 = vmatprep.subr.mxu0 0.0
      %3164 = vmatpush2.msra.mxu0 %v3084
      %3165 = vmatprep.subr.mxu0 0.0
      %3166 = vmatpush2.msra.mxu0 %v3083
      %3167 = vmatprep.subr.mxu0 0.0
      %3168 = vmatpush2.msra.mxu0 %v3082
      %3169 = vmatprep.subr.mxu0 0.0
      %3170 = vmatpush2.msra.mxu0 %v3081
      %3171 = vmatprep.subr.mxu0 0.0
      %3172 = vmatpush2.msra.mxu0 %v3080
      %3173 = vmatprep.subr.mxu0 0.0
      %3174 = vmatpush2.msra.mxu0 %v3079
      %3175 = vmatprep.subr.mxu0 0.0
      %3176 = vmatpush2.msra.mxu0 %v3078
      %3177 = vmatprep.subr.mxu0 0.0
      %3178 = vmatpush2.msra.mxu0 %v3077
      %3179 = vmatprep.subr.mxu0 0.0
      %3180 = vmatpush2.msra.mxu0 %v3076
      %3181 = vmatprep.subr.mxu0 0.0
      %3182 = vmatpush2.msra.mxu0 %v3075
      %3183 = vmatprep.subr.mxu0 0.0
      %3184 = vmatpush2.msra.mxu0 %v3074
      %3185 = vmatprep.subr.mxu0 0.0
      %3186 = vmatpush2.msra.mxu0 %v3073
      %3187 = vmatprep.subr.mxu0 0.0
      %3188 = vmatpush2.msra.mxu0 %v3072
      %3189 = vmatprep.subr.mxu0 0.0
      %3190 = vmatpush2.msra.mxu0 %v3071
      %3191 = vmatprep.mubr.f32.mxu0 %v491
      %3192 = vmatmul.mubr.f32.gmra.mxu0 %v490
      %v3193 = vpop.f32.mrf.mxu0
      %v3194 = vadd.f32 %v3125, %v3193
      %v3195 = vpop.f32.mrf.mxu0
      %3196 = vdwg.mxu0
      %3197 = vmatprep.subr.mxu0 0.0
      %3198 = vmatpush1.msra.mxu0 %v3102
      %3199 = vmatprep.subr.mxu0 0.0
      %3200 = vmatpush1.msra.mxu0 %v3101
      %3201 = vmatprep.subr.mxu0 0.0
      %3202 = vmatpush1.msra.mxu0 %v3100
      %3203 = vmatprep.subr.mxu0 0.0
      %3204 = vmatpush1.msra.mxu0 %v3099
      %3205 = vmatprep.subr.mxu0 0.0
      %3206 = vmatpush1.msra.mxu0 %v3098
      %3207 = vmatprep.subr.mxu0 0.0
      %3208 = vmatpush1.msra.mxu0 %v3097
      %3209 = vmatprep.subr.mxu0 0.0
      %3210 = vmatpush1.msra.mxu0 %v3096
      %3211 = vmatprep.subr.mxu0 0.0
      %3212 = vmatpush1.msra.mxu0 %v3095
      %3213 = vmatprep.subr.mxu0 0.0
      %3214 = vmatpush1.msra.mxu0 %v3094
      %3215 = vmatprep.subr.mxu0 0.0
      %3216 = vmatpush1.msra.mxu0 %v3093
      %3217 = vmatprep.subr.mxu0 0.0
      %3218 = vmatpush1.msra.mxu0 %v3092
      %3219 = vmatprep.subr.mxu0 0.0
      %3220 = vmatpush1.msra.mxu0 %v3091
      %3221 = vmatprep.subr.mxu0 0.0
      %3222 = vmatpush1.msra.mxu0 %v3090
      %3223 = vmatprep.subr.mxu0 0.0
      %3224 = vmatpush1.msra.mxu0 %v3089
      %3225 = vmatprep.subr.mxu0 0.0
      %3226 = vmatpush1.msra.mxu0 %v3088
      %3227 = vmatprep.subr.mxu0 0.0
      %3228 = vmatpush1.msra.mxu0 %v3087
      %3229 = vmatprep.subr.mxu0 0.0
      %3230 = vmatpush2.msra.mxu0 0.0
      %3231 = vmatprep.subr.mxu0 0.0
      %3232 = vmatpush2.msra.mxu0 0.0
      %3233 = vmatprep.subr.mxu0 0.0
      %3234 = vmatpush2.msra.mxu0 0.0
      %3235 = vmatprep.subr.mxu0 0.0
      %3236 = vmatpush2.msra.mxu0 0.0
      %3237 = vmatprep.subr.mxu0 0.0
      %3238 = vmatpush2.msra.mxu0 0.0
      %3239 = vmatprep.subr.mxu0 0.0
      %3240 = vmatpush2.msra.mxu0 0.0
      %3241 = vmatprep.subr.mxu0 0.0
      %3242 = vmatpush2.msra.mxu0 0.0
      %3243 = vmatprep.subr.mxu0 0.0
      %3244 = vmatpush2.msra.mxu0 0.0
      %3245 = vmatprep.subr.mxu0 0.0
      %3246 = vmatpush2.msra.mxu0 0.0
      %3247 = vmatprep.subr.mxu0 0.0
      %3248 = vmatpush2.msra.mxu0 0.0
      %3249 = vmatprep.subr.mxu0 0.0
      %3250 = vmatpush2.msra.mxu0 0.0
      %3251 = vmatprep.subr.mxu0 0.0
      %3252 = vmatpush2.msra.mxu0 0.0
      %3253 = vmatprep.subr.mxu0 0.0
      %3254 = vmatpush2.msra.mxu0 0.0
      %3255 = vmatprep.subr.mxu0 0.0
      %3256 = vmatpush2.msra.mxu0 0.0
      %3257 = vmatprep.subr.mxu0 0.0
      %3258 = vmatpush2.msra.mxu0 0.0
      %3259 = vmatprep.subr.mxu0 0.0
      %3260 = vmatpush2.msra.mxu0 0.0
      %3261 = vmatprep.mubr.f32.mxu0 0.0
      %3262 = vmatmul.mubr.f32.gmra.mxu0 %v492
      %v3263 = vpop.f32.mrf.mxu0
      %v3264 = vadd.f32 %v3194, %v3263
      %v3265 = vpop.f32.mrf.mxu0
      %3266 = vdwg.mxu0
      %v3267 = vtanh.pop %v3264
      %v3269 = vlaneseq
      %v3270 = vshrl.u32 %v3269, 7
      %v3271 = vsub.s32 0, %v3270
      %v3272 = vrot.slane %v3120, %v3271
      %3274 = vmatprep.subr.mxu0 0.0
      %3275 = vmatpush1.msra.mxu0 %v3119
      %3276 = vmatprep.subr.mxu0 0.0
      %3277 = vmatpush1.msra.mxu0 %v3118
      %3278 = vmatprep.subr.mxu0 0.0
      %3279 = vmatpush1.msra.mxu0 %v3117
      %3280 = vmatprep.subr.mxu0 0.0
      %3281 = vmatpush1.msra.mxu0 %v3116
      %3282 = vmatprep.subr.mxu0 0.0
      %3283 = vmatpush1.msra.mxu0 %v3115
      %3284 = vmatprep.subr.mxu0 0.0
      %3285 = vmatpush1.msra.mxu0 %v3114
      %3286 = vmatprep.subr.mxu0 0.0
      %3287 = vmatpush1.msra.mxu0 %v3113
      %3288 = vmatprep.subr.mxu0 0.0
      %3289 = vmatpush1.msra.mxu0 %v3112
      %3290 = vmatprep.subr.mxu0 0.0
      %3291 = vmatpush1.msra.mxu0 %v3111
      %3292 = vmatprep.subr.mxu0 0.0
      %3293 = vmatpush1.msra.mxu0 %v3110
      %3294 = vmatprep.subr.mxu0 0.0
      %3295 = vmatpush1.msra.mxu0 %v3109
      %3296 = vmatprep.subr.mxu0 0.0
      %3297 = vmatpush1.msra.mxu0 %v3108
      %3298 = vmatprep.subr.mxu0 0.0
      %3299 = vmatpush1.msra.mxu0 %v3107
      %3300 = vmatprep.subr.mxu0 0.0
      %3301 = vmatpush1.msra.mxu0 %v3106
      %3302 = vmatprep.subr.mxu0 0.0
      %3303 = vmatpush1.msra.mxu0 %v3105
      %3304 = vmatprep.subr.mxu0 0.0
      %3305 = vmatpush1.msra.mxu0 %v3104
      %3306 = vmatprep.subr.mxu0 0.0
      %3307 = vmatpush2.msra.mxu0 0.0
      %3308 = vmatprep.subr.mxu0 0.0
      %3309 = vmatpush2.msra.mxu0 0.0
      %3310 = vmatprep.subr.mxu0 0.0
      %3311 = vmatpush2.msra.mxu0 0.0
      %3312 = vmatprep.subr.mxu0 0.0
      %3313 = vmatpush2.msra.mxu0 0.0
      %3314 = vmatprep.subr.mxu0 0.0
      %3315 = vmatpush2.msra.mxu0 0.0
      %3316 = vmatprep.subr.mxu0 0.0
      %3317 = vmatpush2.msra.mxu0 0.0
      %3318 = vmatprep.subr.mxu0 0.0
      %3319 = vmatpush2.msra.mxu0 0.0
      %3320 = vmatprep.subr.mxu0 0.0
      %3321 = vmatpush2.msra.mxu0 0.0
      %3322 = vmatprep.subr.mxu0 0.0
      %3323 = vmatpush2.msra.mxu0 0.0
      %3324 = vmatprep.subr.mxu0 0.0
      %3325 = vmatpush2.msra.mxu0 0.0
      %3326 = vmatprep.subr.mxu0 0.0
      %3327 = vmatpush2.msra.mxu0 0.0
      %3328 = vmatprep.subr.mxu0 0.0
      %3329 = vmatpush2.msra.mxu0 0.0
      %3330 = vmatprep.subr.mxu0 0.0
      %3331 = vmatpush2.msra.mxu0 0.0
      %3332 = vmatprep.subr.mxu0 0.0
      %3333 = vmatpush2.msra.mxu0 0.0
      %3334 = vmatprep.subr.mxu0 0.0
      %3335 = vmatpush2.msra.mxu0 0.0
      %3336 = vmatprep.subr.mxu0 0.0
      %3337 = vmatpush2.msra.mxu0 0.0
      %3338 = vmatprep.mubr.f32.mxu0 0.0
      %3339 = vmatmul.mubr.f32.gmra.mxu0 %v3267
      %v3340 = vpop.f32.mrf.mxu0
      %v3341 = vadd.f32 %v3272, %v3340
      %v3342 = vpop.f32.mrf.mxu0
      %3343 = vdwg.mxu0
      %v3344 = vsub.f32 %v3341, %v493
      %vm3345 = vcmp.gt.f32.partialorder %v3344, 0.0
      %vm3346 = vcmp.lt.f32.partialorder %v3344, 0.0
      %v3347 = vsel %vm3346, -1.0, 0.0
      %v3348 = vsel %vm3345, 1.0, %v3347
      %v3349 = vmul.f32 %v3348, 0.0078125
      %3350 = vxpose.xlu0.b32.start [1/16] %v3267, 128
      %3351 = vxpose.xlu0.b32.cont [2/16] 0.0, 128
      %3352 = vxpose.xlu0.b32.cont [3/16] 0.0, 128
      %3353 = vxpose.xlu0.b32.cont [4/16] 0.0, 128
      %3354 = vxpose.xlu0.b32.cont [5/16] 0.0, 128
      %3355 = vxpose.xlu0.b32.cont [6/16] 0.0, 128
      %3356 = vxpose.xlu0.b32.cont [7/16] 0.0, 128
      %3357 = vxpose.xlu0.b32.cont [8/16] 0.0, 128
      %3358 = vxpose.xlu0.b32.cont [9/16] 0.0, 128
      %3359 = vxpose.xlu0.b32.cont [10/16] 0.0, 128
      %3360 = vxpose.xlu0.b32.cont [11/16] 0.0, 128
      %3361 = vxpose.xlu0.b32.cont [12/16] 0.0, 128
      %3362 = vxpose.xlu0.b32.cont [13/16] 0.0, 128
      %3363 = vxpose.xlu0.b32.cont [14/16] 0.0, 128
      %3364 = vxpose.xlu0.b32.cont [15/16] 0.0, 128
      %3365 = vxpose.xlu0.b32.end [16/16] 0.0, 128
      %v3366 = vpop.trf.xlu0
      %v3367 = vpop.trf.xlu0
      %v3368 = vpop.trf.xlu0
      %v3369 = vpop.trf.xlu0
      %v3370 = vpop.trf.xlu0
      %v3371 = vpop.trf.xlu0
      %v3372 = vpop.trf.xlu0
      %v3373 = vpop.trf.xlu0
      %v3374 = vpop.trf.xlu0
      %v3375 = vpop.trf.xlu0
      %v3376 = vpop.trf.xlu0
      %v3377 = vpop.trf.xlu0
      %v3378 = vpop.trf.xlu0
      %v3379 = vpop.trf.xlu0
      %v3380 = vpop.trf.xlu0
      %v3381 = vpop.trf.xlu0
      %v3383 = vsel %vm821, %v3366, 0
      %v3386 = vsel %vm821, %v3367, 0
      %v3389 = vsel %vm821, %v3368, 0
      %v3392 = vsel %vm821, %v3369, 0
      %v3395 = vsel %vm821, %v3370, 0
      %v3398 = vsel %vm821, %v3371, 0
      %v3401 = vsel %vm821, %v3372, 0
      %v3404 = vsel %vm821, %v3373, 0
      %v3407 = vsel %vm821, %v3374, 0
      %v3410 = vsel %vm821, %v3375, 0
      %v3413 = vsel %vm821, %v3376, 0
      %v3416 = vsel %vm821, %v3377, 0
      %v3419 = vsel %vm821, %v3378, 0
      %v3422 = vsel %vm821, %v3379, 0
      %v3425 = vsel %vm821, %v3380, 0
      %v3428 = vsel %vm821, %v3381, 0
      %3430 = vmatprep.subr.mxu0 0.0
      %3431 = vmatpush1.msra.mxu0 0.0
      %3432 = vmatprep.subr.mxu0 0.0
      %3433 = vmatpush1.msra.mxu0 0.0
      %3434 = vmatprep.subr.mxu0 0.0
      %3435 = vmatpush1.msra.mxu0 0.0
      %3436 = vmatprep.subr.mxu0 0.0
      %3437 = vmatpush1.msra.mxu0 0.0
      %3438 = vmatprep.subr.mxu0 0.0
      %3439 = vmatpush1.msra.mxu0 0.0
      %3440 = vmatprep.subr.mxu0 0.0
      %3441 = vmatpush1.msra.mxu0 0.0
      %3442 = vmatprep.subr.mxu0 0.0
      %3443 = vmatpush1.msra.mxu0 0.0
      %3444 = vmatprep.subr.mxu0 0.0
      %3445 = vmatpush1.msra.mxu0 0.0
      %3446 = vmatprep.subr.mxu0 0.0
      %3447 = vmatpush1.msra.mxu0 0.0
      %3448 = vmatprep.subr.mxu0 0.0
      %3449 = vmatpush1.msra.mxu0 0.0
      %3450 = vmatprep.subr.mxu0 0.0
      %3451 = vmatpush1.msra.mxu0 0.0
      %3452 = vmatprep.subr.mxu0 0.0
      %3453 = vmatpush1.msra.mxu0 0.0
      %3454 = vmatprep.subr.mxu0 0.0
      %3455 = vmatpush1.msra.mxu0 0.0
      %3456 = vmatprep.subr.mxu0 0.0
      %3457 = vmatpush1.msra.mxu0 0.0
      %3458 = vmatprep.subr.mxu0 0.0
      %3459 = vmatpush1.msra.mxu0 0.0
      %3460 = vmatprep.subr.mxu0 0.0
      %3461 = vmatpush1.msra.mxu0 %v3349
      %3462 = vmatprep.subr.mxu0 0.0
      %3463 = vmatpush2.msra.mxu0 0.0
      %3464 = vmatprep.subr.mxu0 0.0
      %3465 = vmatpush2.msra.mxu0 0.0
      %3466 = vmatprep.subr.mxu0 0.0
      %3467 = vmatpush2.msra.mxu0 0.0
      %3468 = vmatprep.subr.mxu0 0.0
      %3469 = vmatpush2.msra.mxu0 0.0
      %3470 = vmatprep.subr.mxu0 0.0
      %3471 = vmatpush2.msra.mxu0 0.0
      %3472 = vmatprep.subr.mxu0 0.0
      %3473 = vmatpush2.msra.mxu0 0.0
      %3474 = vmatprep.subr.mxu0 0.0
      %3475 = vmatpush2.msra.mxu0 0.0
      %3476 = vmatprep.subr.mxu0 0.0
      %3477 = vmatpush2.msra.mxu0 0.0
      %3478 = vmatprep.subr.mxu0 0.0
      %3479 = vmatpush2.msra.mxu0 0.0
      %3480 = vmatprep.subr.mxu0 0.0
      %3481 = vmatpush2.msra.mxu0 0.0
      %3482 = vmatprep.subr.mxu0 0.0
      %3483 = vmatpush2.msra.mxu0 0.0
      %3484 = vmatprep.subr.mxu0 0.0
      %3485 = vmatpush2.msra.mxu0 0.0
      %3486 = vmatprep.subr.mxu0 0.0
      %3487 = vmatpush2.msra.mxu0 0.0
      %3488 = vmatprep.subr.mxu0 0.0
      %3489 = vmatpush2.msra.mxu0 0.0
      %3490 = vmatprep.subr.mxu0 0.0
      %3491 = vmatpush2.msra.mxu0 0.0
      %3492 = vmatprep.subr.mxu0 0.0
      %3493 = vmatpush2.msra.mxu0 0.0
      %3494 = vmatprep.mubr.f32.mxu0 0.0
      %3495 = vmatmul.mubr.f32.gmra.mxu0 %v3383
      %v3496 = vpop.f32.mrf.mxu0
      %v3497 = vadd.f32 0.0, %v3496
      %v3498 = vpop.f32.mrf.mxu0
      %3499 = vmatprep.mubr.f32.mxu0 0.0
      %3500 = vmatmul.mubr.f32.gmra.mxu0 %v3386
      %v3501 = vpop.f32.mrf.mxu0
      %v3502 = vadd.f32 0.0, %v3501
      %v3503 = vpop.f32.mrf.mxu0
      %3504 = vmatprep.mubr.f32.mxu0 0.0
      %3505 = vmatmul.mubr.f32.gmra.mxu0 %v3389
      %v3506 = vpop.f32.mrf.mxu0
      %v3507 = vadd.f32 0.0, %v3506
      %v3508 = vpop.f32.mrf.mxu0
      %3509 = vmatprep.mubr.f32.mxu0 0.0
      %3510 = vmatmul.mubr.f32.gmra.mxu0 %v3392
      %v3511 = vpop.f32.mrf.mxu0
      %v3512 = vadd.f32 0.0, %v3511
      %v3513 = vpop.f32.mrf.mxu0
      %3514 = vmatprep.mubr.f32.mxu0 0.0
      %3515 = vmatmul.mubr.f32.gmra.mxu0 %v3395
      %v3516 = vpop.f32.mrf.mxu0
      %v3517 = vadd.f32 0.0, %v3516
      %v3518 = vpop.f32.mrf.mxu0
      %3519 = vmatprep.mubr.f32.mxu0 0.0
      %3520 = vmatmul.mubr.f32.gmra.mxu0 %v3398
      %v3521 = vpop.f32.mrf.mxu0
      %v3522 = vadd.f32 0.0, %v3521
      %v3523 = vpop.f32.mrf.mxu0
      %3524 = vmatprep.mubr.f32.mxu0 0.0
      %3525 = vmatmul.mubr.f32.gmra.mxu0 %v3401
      %v3526 = vpop.f32.mrf.mxu0
      %v3527 = vadd.f32 0.0, %v3526
      %v3528 = vpop.f32.mrf.mxu0
      %3529 = vmatprep.mubr.f32.mxu0 0.0
      %3530 = vmatmul.mubr.f32.gmra.mxu0 %v3404
      %v3531 = vpop.f32.mrf.mxu0
      %v3532 = vadd.f32 0.0, %v3531
      %v3533 = vpop.f32.mrf.mxu0
      %3534 = vmatprep.mubr.f32.mxu0 0.0
      %3535 = vmatmul.mubr.f32.gmra.mxu0 %v3407
      %v3536 = vpop.f32.mrf.mxu0
      %v3537 = vadd.f32 0.0, %v3536
      %v3538 = vpop.f32.mrf.mxu0
      %3539 = vmatprep.mubr.f32.mxu0 0.0
      %3540 = vmatmul.mubr.f32.gmra.mxu0 %v3410
      %v3541 = vpop.f32.mrf.mxu0
      %v3542 = vadd.f32 0.0, %v3541
      %v3543 = vpop.f32.mrf.mxu0
      %3544 = vmatprep.mubr.f32.mxu0 0.0
      %3545 = vmatmul.mubr.f32.gmra.mxu0 %v3413
      %v3546 = vpop.f32.mrf.mxu0
      %v3547 = vadd.f32 0.0, %v3546
      %v3548 = vpop.f32.mrf.mxu0
      %3549 = vmatprep.mubr.f32.mxu0 0.0
      %3550 = vmatmul.mubr.f32.gmra.mxu0 %v3416
      %v3551 = vpop.f32.mrf.mxu0
      %v3552 = vadd.f32 0.0, %v3551
      %v3553 = vpop.f32.mrf.mxu0
      %3554 = vmatprep.mubr.f32.mxu0 0.0
      %3555 = vmatmul.mubr.f32.gmra.mxu0 %v3419
      %v3556 = vpop.f32.mrf.mxu0
      %v3557 = vadd.f32 0.0, %v3556
      %v3558 = vpop.f32.mrf.mxu0
      %3559 = vmatprep.mubr.f32.mxu0 0.0
      %3560 = vmatmul.mubr.f32.gmra.mxu0 %v3422
      %v3561 = vpop.f32.mrf.mxu0
      %v3562 = vadd.f32 0.0, %v3561
      %v3563 = vpop.f32.mrf.mxu0
      %3564 = vmatprep.mubr.f32.mxu0 0.0
      %3565 = vmatmul.mubr.f32.gmra.mxu0 %v3425
      %v3566 = vpop.f32.mrf.mxu0
      %v3567 = vadd.f32 0.0, %v3566
      %v3568 = vpop.f32.mrf.mxu0
      %3569 = vmatprep.mubr.f32.mxu0 0.0
      %3570 = vmatmul.mubr.f32.gmra.mxu0 %v3428
      %v3571 = vpop.f32.mrf.mxu0
      %v3572 = vadd.f32 0.0, %v3571
      %v3573 = vpop.f32.mrf.mxu0
      %3574 = vdwg.mxu0
      %v3575 = vsel %vm470, %v3349, 0.0
      %v3576 = vrot.slane %v3575, 4
      %v3577 = vadd.f32 %v3575, %v3576
      %v3578 = vrot.slane %v3577, 2
      %v3579 = vadd.f32 %v3577, %v3578
      %v3580 = vrot.slane %v3579, 1
      %v3581 = vadd.f32 %v3579, %v3580
      %v3583 = vsel %vm470, %v3349, 0
      %v3586 = vsel %vm470, %v3104, 0
      %v3589 = vsel %vm470, %v3105, 0
      %v3592 = vsel %vm470, %v3106, 0
      %v3595 = vsel %vm470, %v3107, 0
      %v3598 = vsel %vm470, %v3108, 0
      %v3601 = vsel %vm470, %v3109, 0
      %v3604 = vsel %vm470, %v3110, 0
      %v3607 = vsel %vm470, %v3111, 0
      %v3610 = vsel %vm470, %v3112, 0
      %v3613 = vsel %vm470, %v3113, 0
      %v3616 = vsel %vm470, %v3114, 0
      %v3619 = vsel %vm470, %v3115, 0
      %v3622 = vsel %vm470, %v3116, 0
      %v3625 = vsel %vm470, %v3117, 0
      %v3628 = vsel %vm470, %v3118, 0
      %v3631 = vsel %vm470, %v3119, 0
      %3633 = vmatprep.subr.mxu0 0.0
      %3634 = vmatpush1.xpose.msra.mxu0 %v3631
      %3635 = vmatprep.subr.mxu0 0.0
      %3636 = vmatpush1.xpose.msra.mxu0 %v3628
      %3637 = vmatprep.subr.mxu0 0.0
      %3638 = vmatpush1.xpose.msra.mxu0 %v3625
      %3639 = vmatprep.subr.mxu0 0.0
      %3640 = vmatpush1.xpose.msra.mxu0 %v3622
      %3641 = vmatprep.subr.mxu0 0.0
      %3642 = vmatpush1.xpose.msra.mxu0 %v3619
      %3643 = vmatprep.subr.mxu0 0.0
      %3644 = vmatpush1.xpose.msra.mxu0 %v3616
      %3645 = vmatprep.subr.mxu0 0.0
      %3646 = vmatpush1.xpose.msra.mxu0 %v3613
      %3647 = vmatprep.subr.mxu0 0.0
      %3648 = vmatpush1.xpose.msra.mxu0 %v3610
      %3649 = vmatprep.subr.mxu0 0.0
      %3650 = vmatpush1.xpose.msra.mxu0 %v3607
      %3651 = vmatprep.subr.mxu0 0.0
      %3652 = vmatpush1.xpose.msra.mxu0 %v3604
      %3653 = vmatprep.subr.mxu0 0.0
      %3654 = vmatpush1.xpose.msra.mxu0 %v3601
      %3655 = vmatprep.subr.mxu0 0.0
      %3656 = vmatpush1.xpose.msra.mxu0 %v3598
      %3657 = vmatprep.subr.mxu0 0.0
      %3658 = vmatpush1.xpose.msra.mxu0 %v3595
      %3659 = vmatprep.subr.mxu0 0.0
      %3660 = vmatpush1.xpose.msra.mxu0 %v3592
      %3661 = vmatprep.subr.mxu0 0.0
      %3662 = vmatpush1.xpose.msra.mxu0 %v3589
      %3663 = vmatprep.subr.mxu0 0.0
      %3664 = vmatpush1.xpose.msra.mxu0 %v3586
      %3665 = vmatprep.subr.mxu0 0.0
      %3666 = vmatpush2.xpose.msra.mxu0 0.0
      %3667 = vmatprep.subr.mxu0 0.0
      %3668 = vmatpush2.xpose.msra.mxu0 0.0
      %3669 = vmatprep.subr.mxu0 0.0
      %3670 = vmatpush2.xpose.msra.mxu0 0.0
      %3671 = vmatprep.subr.mxu0 0.0
      %3672 = vmatpush2.xpose.msra.mxu0 0.0
      %3673 = vmatprep.subr.mxu0 0.0
      %3674 = vmatpush2.xpose.msra.mxu0 0.0
      %3675 = vmatprep.subr.mxu0 0.0
      %3676 = vmatpush2.xpose.msra.mxu0 0.0
      %3677 = vmatprep.subr.mxu0 0.0
      %3678 = vmatpush2.xpose.msra.mxu0 0.0
      %3679 = vmatprep.subr.mxu0 0.0
      %3680 = vmatpush2.xpose.msra.mxu0 0.0
      %3681 = vmatprep.subr.mxu0 0.0
      %3682 = vmatpush2.xpose.msra.mxu0 0.0
      %3683 = vmatprep.subr.mxu0 0.0
      %3684 = vmatpush2.xpose.msra.mxu0 0.0
      %3685 = vmatprep.subr.mxu0 0.0
      %3686 = vmatpush2.xpose.msra.mxu0 0.0
      %3687 = vmatprep.subr.mxu0 0.0
      %3688 = vmatpush2.xpose.msra.mxu0 0.0
      %3689 = vmatprep.subr.mxu0 0.0
      %3690 = vmatpush2.xpose.msra.mxu0 0.0
      %3691 = vmatprep.subr.mxu0 0.0
      %3692 = vmatpush2.xpose.msra.mxu0 0.0
      %3693 = vmatprep.subr.mxu0 0.0
      %3694 = vmatpush2.xpose.msra.mxu0 0.0
      %3695 = vmatprep.subr.mxu0 0.0
      %3696 = vmatpush2.xpose.msra.mxu0 0.0
      %3697 = vmatprep.mubr.f32.mxu0 0.0
      %3698 = vmatmul.mubr.f32.gmra.mxu0 %v3583
      %v3699 = vpop.f32.mrf.mxu0
      %v3700 = vadd.f32 0.0, %v3699
      %v3701 = vpop.f32.mrf.mxu0
      %3702 = vdwg.mxu0
      %v3703 = vmul.f32 %v3267, %v3267
      %v3704 = vsub.f32 1.0, %v3703
      %v3705 = vmul.f32 %v3700, %v3704
      %3706 = vmatprep.subr.mxu0 0.0
      %3707 = vmatpush1.msra.mxu0 0.0
      %3708 = vmatprep.subr.mxu0 0.0
      %3709 = vmatpush1.msra.mxu0 0.0
      %3710 = vmatprep.subr.mxu0 0.0
      %3711 = vmatpush1.msra.mxu0 0.0
      %3712 = vmatprep.subr.mxu0 0.0
      %3713 = vmatpush1.msra.mxu0 0.0
      %3714 = vmatprep.subr.mxu0 0.0
      %3715 = vmatpush1.msra.mxu0 0.0
      %3716 = vmatprep.subr.mxu0 0.0
      %3717 = vmatpush1.msra.mxu0 0.0
      %3718 = vmatprep.subr.mxu0 0.0
      %3719 = vmatpush1.msra.mxu0 0.0
      %3720 = vmatprep.subr.mxu0 0.0
      %3721 = vmatpush1.msra.mxu0 0.0
      %3722 = vmatprep.subr.mxu0 0.0
      %3723 = vmatpush1.msra.mxu0 0.0
      %3724 = vmatprep.subr.mxu0 0.0
      %3725 = vmatpush1.msra.mxu0 0.0
      %3726 = vmatprep.subr.mxu0 0.0
      %3727 = vmatpush1.msra.mxu0 0.0
      %3728 = vmatprep.subr.mxu0 0.0
      %3729 = vmatpush1.msra.mxu0 0.0
      %3730 = vmatprep.subr.mxu0 0.0
      %3731 = vmatpush1.msra.mxu0 0.0
      %3732 = vmatprep.subr.mxu0 0.0
      %3733 = vmatpush1.msra.mxu0 0.0
      %3734 = vmatprep.subr.mxu0 0.0
      %3735 = vmatpush1.msra.mxu0 0.0
      %3736 = vmatprep.subr.mxu0 0.0
      %3737 = vmatpush1.msra.mxu0 %v3705
      %3738 = vmatprep.subr.mxu0 0.0
      %3739 = vmatpush2.msra.mxu0 0.0
      %3740 = vmatprep.subr.mxu0 0.0
      %3741 = vmatpush2.msra.mxu0 0.0
      %3742 = vmatprep.subr.mxu0 0.0
      %3743 = vmatpush2.msra.mxu0 0.0
      %3744 = vmatprep.subr.mxu0 0.0
      %3745 = vmatpush2.msra.mxu0 0.0
      %3746 = vmatprep.subr.mxu0 0.0
      %3747 = vmatpush2.msra.mxu0 0.0
      %3748 = vmatprep.subr.mxu0 0.0
      %3749 = vmatpush2.msra.mxu0 0.0
      %3750 = vmatprep.subr.mxu0 0.0
      %3751 = vmatpush2.msra.mxu0 0.0
      %3752 = vmatprep.subr.mxu0 0.0
      %3753 = vmatpush2.msra.mxu0 0.0
      %3754 = vmatprep.subr.mxu0 0.0
      %3755 = vmatpush2.msra.mxu0 0.0
      %3756 = vmatprep.subr.mxu0 0.0
      %3757 = vmatpush2.msra.mxu0 0.0
      %3758 = vmatprep.subr.mxu0 0.0
      %3759 = vmatpush2.msra.mxu0 0.0
      %3760 = vmatprep.subr.mxu0 0.0
      %3761 = vmatpush2.msra.mxu0 0.0
      %3762 = vmatprep.subr.mxu0 0.0
      %3763 = vmatpush2.msra.mxu0 0.0
      %3764 = vmatprep.subr.mxu0 0.0
      %3765 = vmatpush2.msra.mxu0 0.0
      %3766 = vmatprep.subr.mxu0 0.0
      %3767 = vmatpush2.msra.mxu0 0.0
      %3768 = vmatprep.subr.mxu0 0.0
      %3769 = vmatpush2.msra.mxu0 0.0
      %3770 = vmatprep.mubr.f32.mxu0 0.0
      %3771 = vmatmul.mubr.f32.gmra.mxu0 %v1243
      %v3772 = vpop.f32.mrf.mxu0
      %v3773 = vadd.f32 0.0, %v3772
      %v3774 = vpop.f32.mrf.mxu0
      %3775 = vmatprep.mubr.f32.mxu0 0.0
      %3776 = vmatmul.mubr.f32.gmra.mxu0 %v1246
      %v3777 = vpop.f32.mrf.mxu0
      %v3778 = vadd.f32 0.0, %v3777
      %v3779 = vpop.f32.mrf.mxu0
      %3780 = vmatprep.mubr.f32.mxu0 0.0
      %3781 = vmatmul.mubr.f32.gmra.mxu0 %v1249
      %v3782 = vpop.f32.mrf.mxu0
      %v3783 = vadd.f32 0.0, %v3782
      %v3784 = vpop.f32.mrf.mxu0
      %3785 = vmatprep.mubr.f32.mxu0 0.0
      %3786 = vmatmul.mubr.f32.gmra.mxu0 %v1252
      %v3787 = vpop.f32.mrf.mxu0
      %v3788 = vadd.f32 0.0, %v3787
      %v3789 = vpop.f32.mrf.mxu0
      %3790 = vmatprep.mubr.f32.mxu0 0.0
      %3791 = vmatmul.mubr.f32.gmra.mxu0 %v1255
      %v3792 = vpop.f32.mrf.mxu0
      %v3793 = vadd.f32 0.0, %v3792
      %v3794 = vpop.f32.mrf.mxu0
      %3795 = vmatprep.mubr.f32.mxu0 0.0
      %3796 = vmatmul.mubr.f32.gmra.mxu0 %v1258
      %v3797 = vpop.f32.mrf.mxu0
      %v3798 = vadd.f32 0.0, %v3797
      %v3799 = vpop.f32.mrf.mxu0
      %3800 = vmatprep.mubr.f32.mxu0 0.0
      %3801 = vmatmul.mubr.f32.gmra.mxu0 %v1261
      %v3802 = vpop.f32.mrf.mxu0
      %v3803 = vadd.f32 0.0, %v3802
      %v3804 = vpop.f32.mrf.mxu0
      %3805 = vmatprep.mubr.f32.mxu0 0.0
      %3806 = vmatmul.mubr.f32.gmra.mxu0 %v1264
      %v3807 = vpop.f32.mrf.mxu0
      %v3808 = vadd.f32 0.0, %v3807
      %v3809 = vpop.f32.mrf.mxu0
      %3810 = vmatprep.mubr.f32.mxu0 0.0
      %3811 = vmatmul.mubr.f32.gmra.mxu0 %v1267
      %v3812 = vpop.f32.mrf.mxu0
      %v3813 = vadd.f32 0.0, %v3812
      %v3814 = vpop.f32.mrf.mxu0
      %3815 = vmatprep.mubr.f32.mxu0 0.0
      %3816 = vmatmul.mubr.f32.gmra.mxu0 %v1270
      %v3817 = vpop.f32.mrf.mxu0
      %v3818 = vadd.f32 0.0, %v3817
      %v3819 = vpop.f32.mrf.mxu0
      %3820 = vmatprep.mubr.f32.mxu0 0.0
      %3821 = vmatmul.mubr.f32.gmra.mxu0 %v1273
      %v3822 = vpop.f32.mrf.mxu0
      %v3823 = vadd.f32 0.0, %v3822
      %v3824 = vpop.f32.mrf.mxu0
      %3825 = vmatprep.mubr.f32.mxu0 0.0
      %3826 = vmatmul.mubr.f32.gmra.mxu0 %v1276
      %v3827 = vpop.f32.mrf.mxu0
      %v3828 = vadd.f32 0.0, %v3827
      %v3829 = vpop.f32.mrf.mxu0
      %3830 = vmatprep.mubr.f32.mxu0 0.0
      %3831 = vmatmul.mubr.f32.gmra.mxu0 %v1279
      %v3832 = vpop.f32.mrf.mxu0
      %v3833 = vadd.f32 0.0, %v3832
      %v3834 = vpop.f32.mrf.mxu0
      %3835 = vmatprep.mubr.f32.mxu0 0.0
      %3836 = vmatmul.mubr.f32.gmra.mxu0 %v1282
      %v3837 = vpop.f32.mrf.mxu0
      %v3838 = vadd.f32 0.0, %v3837
      %v3839 = vpop.f32.mrf.mxu0
      %3840 = vmatprep.mubr.f32.mxu0 0.0
      %3841 = vmatmul.mubr.f32.gmra.mxu0 %v1285
      %v3842 = vpop.f32.mrf.mxu0
      %v3843 = vadd.f32 0.0, %v3842
      %v3844 = vpop.f32.mrf.mxu0
      %3845 = vmatprep.mubr.f32.mxu0 0.0
      %3846 = vmatmul.mubr.f32.gmra.mxu0 %v1288
      %v3847 = vpop.f32.mrf.mxu0
      %v3848 = vadd.f32 0.0, %v3847
      %v3849 = vpop.f32.mrf.mxu0
      %3850 = vmatprep.mubr.f32.mxu0 0.0
      %3851 = vmatmul.mubr.f32.gmra.mxu0 %v1291
      %v3852 = vpop.f32.mrf.mxu0
      %v3853 = vadd.f32 0.0, %v3852
      %v3854 = vpop.f32.mrf.mxu0
      %3855 = vmatprep.mubr.f32.mxu0 0.0
      %3856 = vmatmul.mubr.f32.gmra.mxu0 %v1294
      %v3857 = vpop.f32.mrf.mxu0
      %v3858 = vadd.f32 0.0, %v3857
      %v3859 = vpop.f32.mrf.mxu0
      %3860 = vmatprep.mubr.f32.mxu0 0.0
      %3861 = vmatmul.mubr.f32.gmra.mxu0 %v1297
      %v3862 = vpop.f32.mrf.mxu0
      %v3863 = vadd.f32 0.0, %v3862
      %v3864 = vpop.f32.mrf.mxu0
      %3865 = vmatprep.mubr.f32.mxu0 0.0
      %3866 = vmatmul.mubr.f32.gmra.mxu0 %v1300
      %v3867 = vpop.f32.mrf.mxu0
      %v3868 = vadd.f32 0.0, %v3867
      %v3869 = vpop.f32.mrf.mxu0
      %3870 = vmatprep.mubr.f32.mxu0 0.0
      %3871 = vmatmul.mubr.f32.gmra.mxu0 %v1303
      %v3872 = vpop.f32.mrf.mxu0
      %v3873 = vadd.f32 0.0, %v3872
      %v3874 = vpop.f32.mrf.mxu0
      %3875 = vmatprep.mubr.f32.mxu0 0.0
      %3876 = vmatmul.mubr.f32.gmra.mxu0 %v1306
      %v3877 = vpop.f32.mrf.mxu0
      %v3878 = vadd.f32 0.0, %v3877
      %v3879 = vpop.f32.mrf.mxu0
      %3880 = vmatprep.mubr.f32.mxu0 0.0
      %3881 = vmatmul.mubr.f32.gmra.mxu0 %v1309
      %v3882 = vpop.f32.mrf.mxu0
      %v3883 = vadd.f32 0.0, %v3882
      %v3884 = vpop.f32.mrf.mxu0
      %3885 = vmatprep.mubr.f32.mxu0 0.0
      %3886 = vmatmul.mubr.f32.gmra.mxu0 %v1312
      %v3887 = vpop.f32.mrf.mxu0
      %v3888 = vadd.f32 0.0, %v3887
      %v3889 = vpop.f32.mrf.mxu0
      %3890 = vmatprep.mubr.f32.mxu0 0.0
      %3891 = vmatmul.mubr.f32.gmra.mxu0 %v1315
      %v3892 = vpop.f32.mrf.mxu0
      %v3893 = vadd.f32 0.0, %v3892
      %v3894 = vpop.f32.mrf.mxu0
      %3895 = vmatprep.mubr.f32.mxu0 0.0
      %3896 = vmatmul.mubr.f32.gmra.mxu0 %v1318
      %v3897 = vpop.f32.mrf.mxu0
      %v3898 = vadd.f32 0.0, %v3897
      %v3899 = vpop.f32.mrf.mxu0
      %3900 = vmatprep.mubr.f32.mxu0 0.0
      %3901 = vmatmul.mubr.f32.gmra.mxu0 %v1321
      %v3902 = vpop.f32.mrf.mxu0
      %v3903 = vadd.f32 0.0, %v3902
      %v3904 = vpop.f32.mrf.mxu0
      %3905 = vmatprep.mubr.f32.mxu0 0.0
      %3906 = vmatmul.mubr.f32.gmra.mxu0 %v1324
      %v3907 = vpop.f32.mrf.mxu0
      %v3908 = vadd.f32 0.0, %v3907
      %v3909 = vpop.f32.mrf.mxu0
      %3910 = vmatprep.mubr.f32.mxu0 0.0
      %3911 = vmatmul.mubr.f32.gmra.mxu0 %v1327
      %v3912 = vpop.f32.mrf.mxu0
      %v3913 = vadd.f32 0.0, %v3912
      %v3914 = vpop.f32.mrf.mxu0
      %3915 = vmatprep.mubr.f32.mxu0 0.0
      %3916 = vmatmul.mubr.f32.gmra.mxu0 %v1330
      %v3917 = vpop.f32.mrf.mxu0
      %v3918 = vadd.f32 0.0, %v3917
      %v3919 = vpop.f32.mrf.mxu0
      %3920 = vmatprep.mubr.f32.mxu0 0.0
      %3921 = vmatmul.mubr.f32.gmra.mxu0 %v1333
      %v3922 = vpop.f32.mrf.mxu0
      %v3923 = vadd.f32 0.0, %v3922
      %v3924 = vpop.f32.mrf.mxu0
      %3925 = vmatprep.mubr.f32.mxu0 0.0
      %3926 = vmatmul.mubr.f32.gmra.mxu0 %v1336
      %v3927 = vpop.f32.mrf.mxu0
      %v3928 = vadd.f32 0.0, %v3927
      %v3929 = vpop.f32.mrf.mxu0
      %3930 = vmatprep.mubr.f32.mxu0 0.0
      %3931 = vmatmul.mubr.f32.gmra.mxu0 %v1339
      %v3932 = vpop.f32.mrf.mxu0
      %v3933 = vadd.f32 0.0, %v3932
      %v3934 = vpop.f32.mrf.mxu0
      %3935 = vmatprep.mubr.f32.mxu0 0.0
      %3936 = vmatmul.mubr.f32.gmra.mxu0 %v1342
      %v3937 = vpop.f32.mrf.mxu0
      %v3938 = vadd.f32 0.0, %v3937
      %v3939 = vpop.f32.mrf.mxu0
      %3940 = vmatprep.mubr.f32.mxu0 0.0
      %3941 = vmatmul.mubr.f32.gmra.mxu0 %v1345
      %v3942 = vpop.f32.mrf.mxu0
      %v3943 = vadd.f32 0.0, %v3942
      %v3944 = vpop.f32.mrf.mxu0
      %3945 = vmatprep.mubr.f32.mxu0 0.0
      %3946 = vmatmul.mubr.f32.gmra.mxu0 %v1348
      %v3947 = vpop.f32.mrf.mxu0
      %v3948 = vadd.f32 0.0, %v3947
      %v3949 = vpop.f32.mrf.mxu0
      %3950 = vmatprep.mubr.f32.mxu0 0.0
      %3951 = vmatmul.mubr.f32.gmra.mxu0 %v1351
      %v3952 = vpop.f32.mrf.mxu0
      %v3953 = vadd.f32 0.0, %v3952
      %v3954 = vpop.f32.mrf.mxu0
      %3955 = vmatprep.mubr.f32.mxu0 0.0
      %3956 = vmatmul.mubr.f32.gmra.mxu0 %v1354
      %v3957 = vpop.f32.mrf.mxu0
      %v3958 = vadd.f32 0.0, %v3957
      %v3959 = vpop.f32.mrf.mxu0
      %3960 = vmatprep.mubr.f32.mxu0 0.0
      %3961 = vmatmul.mubr.f32.gmra.mxu0 %v1357
      %v3962 = vpop.f32.mrf.mxu0
      %v3963 = vadd.f32 0.0, %v3962
      %v3964 = vpop.f32.mrf.mxu0
      %3965 = vmatprep.mubr.f32.mxu0 0.0
      %3966 = vmatmul.mubr.f32.gmra.mxu0 %v1360
      %v3967 = vpop.f32.mrf.mxu0
      %v3968 = vadd.f32 0.0, %v3967
      %v3969 = vpop.f32.mrf.mxu0
      %3970 = vmatprep.mubr.f32.mxu0 0.0
      %3971 = vmatmul.mubr.f32.gmra.mxu0 %v1363
      %v3972 = vpop.f32.mrf.mxu0
      %v3973 = vadd.f32 0.0, %v3972
      %v3974 = vpop.f32.mrf.mxu0
      %3975 = vmatprep.mubr.f32.mxu0 0.0
      %3976 = vmatmul.mubr.f32.gmra.mxu0 %v1366
      %v3977 = vpop.f32.mrf.mxu0
      %v3978 = vadd.f32 0.0, %v3977
      %v3979 = vpop.f32.mrf.mxu0
      %3980 = vmatprep.mubr.f32.mxu0 0.0
      %3981 = vmatmul.mubr.f32.gmra.mxu0 %v1369
      %v3982 = vpop.f32.mrf.mxu0
      %v3983 = vadd.f32 0.0, %v3982
      %v3984 = vpop.f32.mrf.mxu0
      %3985 = vmatprep.mubr.f32.mxu0 0.0
      %3986 = vmatmul.mubr.f32.gmra.mxu0 %v1372
      %v3987 = vpop.f32.mrf.mxu0
      %v3988 = vadd.f32 0.0, %v3987
      %v3989 = vpop.f32.mrf.mxu0
      %3990 = vmatprep.mubr.f32.mxu0 0.0
      %3991 = vmatmul.mubr.f32.gmra.mxu0 %v1375
      %v3992 = vpop.f32.mrf.mxu0
      %v3993 = vadd.f32 0.0, %v3992
      %v3994 = vpop.f32.mrf.mxu0
      %3995 = vmatprep.mubr.f32.mxu0 0.0
      %3996 = vmatmul.mubr.f32.gmra.mxu0 %v1378
      %v3997 = vpop.f32.mrf.mxu0
      %v3998 = vadd.f32 0.0, %v3997
      %v3999 = vpop.f32.mrf.mxu0
      %4000 = vmatprep.mubr.f32.mxu0 0.0
      %4001 = vmatmul.mubr.f32.gmra.mxu0 %v1381
      %v4002 = vpop.f32.mrf.mxu0
      %v4003 = vadd.f32 0.0, %v4002
      %v4004 = vpop.f32.mrf.mxu0
      %4005 = vmatprep.mubr.f32.mxu0 0.0
      %4006 = vmatmul.mubr.f32.gmra.mxu0 %v1384
      %v4007 = vpop.f32.mrf.mxu0
      %v4008 = vadd.f32 0.0, %v4007
      %v4009 = vpop.f32.mrf.mxu0
      %4010 = vdwg.mxu0
      %v4011 = vrot.slane %v3705, 4
      %v4012 = vadd.f32 %v3705, %v4011
      %v4013 = vrot.slane %v4012, 2
      %v4014 = vadd.f32 %v4012, %v4013
      %v4015 = vrot.slane %v4014, 1
      %v4016 = vadd.f32 %v4014, %v4015
      %v4017 = vmul.f32 %v3773, 0.01
      %v4018 = vmul.f32 %v3778, 0.01
      %v4019 = vmul.f32 %v3783, 0.01
      %v4020 = vmul.f32 %v3788, 0.01
      %v4021 = vmul.f32 %v3793, 0.01
      %v4022 = vmul.f32 %v3798, 0.01
      %v4023 = vmul.f32 %v3803, 0.01
      %v4024 = vmul.f32 %v3808, 0.01
      %v4025 = vmul.f32 %v3813, 0.01
      %v4026 = vmul.f32 %v3818, 0.01
      %v4027 = vmul.f32 %v3823, 0.01
      %v4028 = vmul.f32 %v3828, 0.01
      %v4029 = vmul.f32 %v3833, 0.01
      %v4030 = vmul.f32 %v3838, 0.01
      %v4031 = vmul.f32 %v3843, 0.01
      %v4032 = vmul.f32 %v3848, 0.01
      %v4033 = vmul.f32 %v3853, 0.01
      %v4034 = vmul.f32 %v3858, 0.01
      %v4035 = vmul.f32 %v3863, 0.01
      %v4036 = vmul.f32 %v3868, 0.01
      %v4037 = vmul.f32 %v3873, 0.01
      %v4038 = vmul.f32 %v3878, 0.01
      %v4039 = vmul.f32 %v3883, 0.01
      %v4040 = vmul.f32 %v3888, 0.01
      %v4041 = vmul.f32 %v3893, 0.01
      %v4042 = vmul.f32 %v3898, 0.01
      %v4043 = vmul.f32 %v3903, 0.01
      %v4044 = vmul.f32 %v3908, 0.01
      %v4045 = vmul.f32 %v3913, 0.01
      %v4046 = vmul.f32 %v3918, 0.01
      %v4047 = vmul.f32 %v3923, 0.01
      %v4048 = vmul.f32 %v3928, 0.01
      %v4049 = vmul.f32 %v3933, 0.01
      %v4050 = vmul.f32 %v3938, 0.01
      %v4051 = vmul.f32 %v3943, 0.01
      %v4052 = vmul.f32 %v3948, 0.01
      %v4053 = vmul.f32 %v3953, 0.01
      %v4054 = vmul.f32 %v3958, 0.01
      %v4055 = vmul.f32 %v3963, 0.01
      %v4056 = vmul.f32 %v3968, 0.01
      %v4057 = vmul.f32 %v3973, 0.01
      %v4058 = vmul.f32 %v3978, 0.01
      %v4059 = vmul.f32 %v3983, 0.01
      %v4060 = vmul.f32 %v3988, 0.01
      %v4061 = vmul.f32 %v3993, 0.01
      %v4062 = vmul.f32 %v3998, 0.01
      %v4063 = vmul.f32 %v4003, 0.01
      %v4064 = vmul.f32 %v4008, 0.01
      %v4065 = vsub.f32 %v3055, %v4017
      %v4066 = vsub.f32 %v3056, %v4018
      %v4067 = vsub.f32 %v3057, %v4019
      %v4068 = vsub.f32 %v3058, %v4020
      %v4069 = vsub.f32 %v3059, %v4021
      %v4070 = vsub.f32 %v3060, %v4022
      %v4071 = vsub.f32 %v3061, %v4023
      %v4072 = vsub.f32 %v3062, %v4024
      %v4073 = vsub.f32 %v3063, %v4025
      %v4074 = vsub.f32 %v3064, %v4026
      %v4075 = vsub.f32 %v3065, %v4027
      %v4076 = vsub.f32 %v3066, %v4028
      %v4077 = vsub.f32 %v3067, %v4029
      %v4078 = vsub.f32 %v3068, %v4030
      %v4079 = vsub.f32 %v3069, %v4031
      %v4080 = vsub.f32 %v3070, %v4032
      %v4081 = vsub.f32 %v3071, %v4033
      %v4082 = vsub.f32 %v3072, %v4034
      %v4083 = vsub.f32 %v3073, %v4035
      %v4084 = vsub.f32 %v3074, %v4036
      %v4085 = vsub.f32 %v3075, %v4037
      %v4086 = vsub.f32 %v3076, %v4038
      %v4087 = vsub.f32 %v3077, %v4039
      %v4088 = vsub.f32 %v3078, %v4040
      %v4089 = vsub.f32 %v3079, %v4041
      %v4090 = vsub.f32 %v3080, %v4042
      %v4091 = vsub.f32 %v3081, %v4043
      %v4092 = vsub.f32 %v3082, %v4044
      %v4093 = vsub.f32 %v3083, %v4045
      %v4094 = vsub.f32 %v3084, %v4046
      %v4095 = vsub.f32 %v3085, %v4047
      %v4096 = vsub.f32 %v3086, %v4048
      %v4097 = vsub.f32 %v3087, %v4049
      %v4098 = vsub.f32 %v3088, %v4050
      %v4099 = vsub.f32 %v3089, %v4051
      %v4100 = vsub.f32 %v3090, %v4052
      %v4101 = vsub.f32 %v3091, %v4053
      %v4102 = vsub.f32 %v3092, %v4054
      %v4103 = vsub.f32 %v3093, %v4055
      %v4104 = vsub.f32 %v3094, %v4056
      %v4105 = vsub.f32 %v3095, %v4057
      %v4106 = vsub.f32 %v3096, %v4058
      %v4107 = vsub.f32 %v3097, %v4059
      %v4108 = vsub.f32 %v3098, %v4060
      %v4109 = vsub.f32 %v3099, %v4061
      %v4110 = vsub.f32 %v3100, %v4062
      %v4111 = vsub.f32 %v3101, %v4063
      %v4112 = vsub.f32 %v3102, %v4064
      %4113 = vst [vmem:[#allocation2] sm:$0xff] %v4065
      %4114 = vst [vmem:[#allocation2 + $0x8] sm:$0xff] %v4066
      %4115 = vst [vmem:[#allocation2 + $0x10] sm:$0xff] %v4067
      %4116 = vst [vmem:[#allocation2 + $0x18] sm:$0xff] %v4068
      %4117 = vst [vmem:[#allocation2 + $0x20] sm:$0xff] %v4069
      %4118 = vst [vmem:[#allocation2 + $0x28] sm:$0xff] %v4070
      %4119 = vst [vmem:[#allocation2 + $0x30] sm:$0xff] %v4071
      %4120 = vst [vmem:[#allocation2 + $0x38] sm:$0xff] %v4072
      %4121 = vst [vmem:[#allocation2 + $0x40] sm:$0xff] %v4073
      %4122 = vst [vmem:[#allocation2 + $0x48] sm:$0xff] %v4074
      %4123 = vst [vmem:[#allocation2 + $0x50] sm:$0xff] %v4075
      %4124 = vst [vmem:[#allocation2 + $0x58] sm:$0xff] %v4076
      %4125 = vst [vmem:[#allocation2 + $0x60] sm:$0xff] %v4077
      %4126 = vst [vmem:[#allocation2 + $0x68] sm:$0xff] %v4078
      %4127 = vst [vmem:[#allocation2 + $0x70] sm:$0xff] %v4079
      %4128 = vst [vmem:[#allocation2 + $0x78] sm:$0xff] %v4080
      %4129 = vst [vmem:[#allocation2 + $0x80] sm:$0xff] %v4081
      %4130 = vst [vmem:[#allocation2 + $0x88] sm:$0xff] %v4082
      %4131 = vst [vmem:[#allocation2 + $0x90] sm:$0xff] %v4083
      %4132 = vst [vmem:[#allocation2 + $0x98] sm:$0xff] %v4084
      %4133 = vst [vmem:[#allocation2 + $0xa0] sm:$0xff] %v4085
      %4134 = vst [vmem:[#allocation2 + $0xa8] sm:$0xff] %v4086
      %4135 = vst [vmem:[#allocation2 + $0xb0] sm:$0xff] %v4087
      %4136 = vst [vmem:[#allocation2 + $0xb8] sm:$0xff] %v4088
      %4137 = vst [vmem:[#allocation2 + $0xc0] sm:$0xff] %v4089
      %4138 = vst [vmem:[#allocation2 + $0xc8] sm:$0xff] %v4090
      %4139 = vst [vmem:[#allocation2 + $0xd0] sm:$0xff] %v4091
      %4140 = vst [vmem:[#allocation2 + $0xd8] sm:$0xff] %v4092
      %4141 = vst [vmem:[#allocation2 + $0xe0] sm:$0xff] %v4093
      %4142 = vst [vmem:[#allocation2 + $0xe8] sm:$0xff] %v4094
      %4143 = vst [vmem:[#allocation2 + $0xf0] sm:$0xff] %v4095
      %4144 = vst [vmem:[#allocation2 + $0xf8] sm:$0xff] %v4096
      %4145 = vst [vmem:[#allocation2 + $0x100] sm:$0xff] %v4097
      %4146 = vst [vmem:[#allocation2 + $0x108] sm:$0xff] %v4098
      %4147 = vst [vmem:[#allocation2 + $0x110] sm:$0xff] %v4099
      %4148 = vst [vmem:[#allocation2 + $0x118] sm:$0xff] %v4100
      %4149 = vst [vmem:[#allocation2 + $0x120] sm:$0xff] %v4101
      %4150 = vst [vmem:[#allocation2 + $0x128] sm:$0xff] %v4102
      %4151 = vst [vmem:[#allocation2 + $0x130] sm:$0xff] %v4103
      %4152 = vst [vmem:[#allocation2 + $0x138] sm:$0xff] %v4104
      %4153 = vst [vmem:[#allocation2 + $0x140] sm:$0xff] %v4105
      %4154 = vst [vmem:[#allocation2 + $0x148] sm:$0xff] %v4106
      %4155 = vst [vmem:[#allocation2 + $0x150] sm:$0xff] %v4107
      %4156 = vst [vmem:[#allocation2 + $0x158] sm:$0xff] %v4108
      %4157 = vst [vmem:[#allocation2 + $0x160] sm:$0xff] %v4109
      %4158 = vst [vmem:[#allocation2 + $0x168] sm:$0xff] %v4110
      %4159 = vst [vmem:[#allocation2 + $0x170] sm:$0xff] %v4111
      %4160 = vst [vmem:[#allocation2 + $0x178] sm:$0xff] %v4112
      %v4161 = vmul.f32 %v4016, 0.01
      %v4162 = vsub.f32 %v3103, %v4161
      %4163 = vst [vmem:[#allocation3] sm:$0x1] %v4162
      %v4164 = vmul.f32 %v3497, 0.01
      %v4165 = vmul.f32 %v3502, 0.01
      %v4166 = vmul.f32 %v3507, 0.01
      %v4167 = vmul.f32 %v3512, 0.01
      %v4168 = vmul.f32 %v3517, 0.01
      %v4169 = vmul.f32 %v3522, 0.01
      %v4170 = vmul.f32 %v3527, 0.01
      %v4171 = vmul.f32 %v3532, 0.01
      %v4172 = vmul.f32 %v3537, 0.01
      %v4173 = vmul.f32 %v3542, 0.01
      %v4174 = vmul.f32 %v3547, 0.01
      %v4175 = vmul.f32 %v3552, 0.01
      %v4176 = vmul.f32 %v3557, 0.01
      %v4177 = vmul.f32 %v3562, 0.01
      %v4178 = vmul.f32 %v3567, 0.01
      %v4179 = vmul.f32 %v3572, 0.01
      %v4180 = vsub.f32 %v3104, %v4164
      %v4181 = vsub.f32 %v3105, %v4165
      %v4182 = vsub.f32 %v3106, %v4166
      %v4183 = vsub.f32 %v3107, %v4167
      %v4184 = vsub.f32 %v3108, %v4168
      %v4185 = vsub.f32 %v3109, %v4169
      %v4186 = vsub.f32 %v3110, %v4170
      %v4187 = vsub.f32 %v3111, %v4171
      %v4188 = vsub.f32 %v3112, %v4172
      %v4189 = vsub.f32 %v3113, %v4173
      %v4190 = vsub.f32 %v3114, %v4174
      %v4191 = vsub.f32 %v3115, %v4175
      %v4192 = vsub.f32 %v3116, %v4176
      %v4193 = vsub.f32 %v3117, %v4177
      %v4194 = vsub.f32 %v3118, %v4178
      %v4195 = vsub.f32 %v3119, %v4179
      %4196 = vst.msk [vmem:[#allocation4] sm:$0xff] %vm470, %v4180
      %4197 = vst.msk [vmem:[#allocation4 + $0x8] sm:$0xff] %vm470, %v4181
      %4198 = vst.msk [vmem:[#allocation4 + $0x10] sm:$0xff] %vm470, %v4182
      %4199 = vst.msk [vmem:[#allocation4 + $0x18] sm:$0xff] %vm470, %v4183
      %4200 = vst.msk [vmem:[#allocation4 + $0x20] sm:$0xff] %vm470, %v4184
      %4201 = vst.msk [vmem:[#allocation4 + $0x28] sm:$0xff] %vm470, %v4185
      %4202 = vst.msk [vmem:[#allocation4 + $0x30] sm:$0xff] %vm470, %v4186
      %4203 = vst.msk [vmem:[#allocation4 + $0x38] sm:$0xff] %vm470, %v4187
      %4204 = vst.msk [vmem:[#allocation4 + $0x40] sm:$0xff] %vm470, %v4188
      %4205 = vst.msk [vmem:[#allocation4 + $0x48] sm:$0xff] %vm470, %v4189
      %4206 = vst.msk [vmem:[#allocation4 + $0x50] sm:$0xff] %vm470, %v4190
      %4207 = vst.msk [vmem:[#allocation4 + $0x58] sm:$0xff] %vm470, %v4191
      %4208 = vst.msk [vmem:[#allocation4 + $0x60] sm:$0xff] %vm470, %v4192
      %4209 = vst.msk [vmem:[#allocation4 + $0x68] sm:$0xff] %vm470, %v4193
      %4210 = vst.msk [vmem:[#allocation4 + $0x70] sm:$0xff] %vm470, %v4194
      %4211 = vst.msk [vmem:[#allocation4 + $0x78] sm:$0xff] %vm470, %v4195
      %v4212 = vmul.f32 %v3581, 0.01
      %v4213 = vsub.f32 %v3120, %v4212
      %4214 = vst.msk [vmem:[#allocation5] sm:$0x1] %vm488, %v4213
      %v4215 = vld [vmem:[%s348] sm:$0xff]
      %v4216 = vld [vmem:[%s348 + $0x8] sm:$0xff]
      %v4217 = vld [vmem:[%s348 + $0x10] sm:$0xff]
      %v4218 = vld [vmem:[%s352] sm:$0xff]
      %v4219 = vld [vmem:[#allocation2] sm:$0xff]
      %v4220 = vld [vmem:[#allocation2 + $0x8] sm:$0xff]
      %v4221 = vld [vmem:[#allocation2 + $0x10] sm:$0xff]
      %v4222 = vld [vmem:[#allocation2 + $0x18] sm:$0xff]
      %v4223 = vld [vmem:[#allocation2 + $0x20] sm:$0xff]
      %v4224 = vld [vmem:[#allocation2 + $0x28] sm:$0xff]
      %v4225 = vld [vmem:[#allocation2 + $0x30] sm:$0xff]
      %v4226 = vld [vmem:[#allocation2 + $0x38] sm:$0xff]
      %v4227 = vld [vmem:[#allocation2 + $0x40] sm:$0xff]
      %v4228 = vld [vmem:[#allocation2 + $0x48] sm:$0xff]
      %v4229 = vld [vmem:[#allocation2 + $0x50] sm:$0xff]
      %v4230 = vld [vmem:[#allocation2 + $0x58] sm:$0xff]
      %v4231 = vld [vmem:[#allocation2 + $0x60] sm:$0xff]
      %v4232 = vld [vmem:[#allocation2 + $0x68] sm:$0xff]
      %v4233 = vld [vmem:[#allocation2 + $0x70] sm:$0xff]
      %v4234 = vld [vmem:[#allocation2 + $0x78] sm:$0xff]
      %v4235 = vld [vmem:[#allocation2 + $0x80] sm:$0xff]
      %v4236 = vld [vmem:[#allocation2 + $0x88] sm:$0xff]
      %v4237 = vld [vmem:[#allocation2 + $0x90] sm:$0xff]
      %v4238 = vld [vmem:[#allocation2 + $0x98] sm:$0xff]
      %v4239 = vld [vmem:[#allocation2 + $0xa0] sm:$0xff]
      %v4240 = vld [vmem:[#allocation2 + $0xa8] sm:$0xff]
      %v4241 = vld [vmem:[#allocation2 + $0xb0] sm:$0xff]
      %v4242 = vld [vmem:[#allocation2 + $0xb8] sm:$0xff]
      %v4243 = vld [vmem:[#allocation2 + $0xc0] sm:$0xff]
      %v4244 = vld [vmem:[#allocation2 + $0xc8] sm:$0xff]
      %v4245 = vld [vmem:[#allocation2 + $0xd0] sm:$0xff]
      %v4246 = vld [vmem:[#allocation2 + $0xd8] sm:$0xff]
      %v4247 = vld [vmem:[#allocation2 + $0xe0] sm:$0xff]
      %v4248 = vld [vmem:[#allocation2 + $0xe8] sm:$0xff]
      %v4249 = vld [vmem:[#allocation2 + $0xf0] sm:$0xff]
      %v4250 = vld [vmem:[#allocation2 + $0xf8] sm:$0xff]
      %v4251 = vld [vmem:[#allocation2 + $0x100] sm:$0xff]
      %v4252 = vld [vmem:[#allocation2 + $0x108] sm:$0xff]
      %v4253 = vld [vmem:[#allocation2 + $0x110] sm:$0xff]
      %v4254 = vld [vmem:[#allocation2 + $0x118] sm:$0xff]
      %v4255 = vld [vmem:[#allocation2 + $0x120] sm:$0xff]
      %v4256 = vld [vmem:[#allocation2 + $0x128] sm:$0xff]
      %v4257 = vld [vmem:[#allocation2 + $0x130] sm:$0xff]
      %v4258 = vld [vmem:[#allocation2 + $0x138] sm:$0xff]
      %v4259 = vld [vmem:[#allocation2 + $0x140] sm:$0xff]
      %v4260 = vld [vmem:[#allocation2 + $0x148] sm:$0xff]
      %v4261 = vld [vmem:[#allocation2 + $0x150] sm:$0xff]
      %v4262 = vld [vmem:[#allocation2 + $0x158] sm:$0xff]
      %v4263 = vld [vmem:[#allocation2 + $0x160] sm:$0xff]
      %v4264 = vld [vmem:[#allocation2 + $0x168] sm:$0xff]
      %v4265 = vld [vmem:[#allocation2 + $0x170] sm:$0xff]
      %v4266 = vld [vmem:[#allocation2 + $0x178] sm:$0xff]
      %v4267 = vld [vmem:[#allocation3] sm:$0x1]
      %v4269 = vlaneseq
      %v4270 = vshrl.u32 %v4269, 7
      %v4271 = vsub.s32 0, %v4270
      %v4272 = vrot.slane %v4267, %v4271
      %4274 = vmatprep.subr.mxu0 0.0
      %4275 = vmatpush1.msra.mxu0 %v4234
      %4276 = vmatprep.subr.mxu0 0.0
      %4277 = vmatpush1.msra.mxu0 %v4233
      %4278 = vmatprep.subr.mxu0 0.0
      %4279 = vmatpush1.msra.mxu0 %v4232
      %4280 = vmatprep.subr.mxu0 0.0
      %4281 = vmatpush1.msra.mxu0 %v4231
      %4282 = vmatprep.subr.mxu0 0.0
      %4283 = vmatpush1.msra.mxu0 %v4230
      %4284 = vmatprep.subr.mxu0 0.0
      %4285 = vmatpush1.msra.mxu0 %v4229
      %4286 = vmatprep.subr.mxu0 0.0
      %4287 = vmatpush1.msra.mxu0 %v4228
      %4288 = vmatprep.subr.mxu0 0.0
      %4289 = vmatpush1.msra.mxu0 %v4227
      %4290 = vmatprep.subr.mxu0 0.0
      %4291 = vmatpush1.msra.mxu0 %v4226
      %4292 = vmatprep.subr.mxu0 0.0
      %4293 = vmatpush1.msra.mxu0 %v4225
      %4294 = vmatprep.subr.mxu0 0.0
      %4295 = vmatpush1.msra.mxu0 %v4224
      %4296 = vmatprep.subr.mxu0 0.0
      %4297 = vmatpush1.msra.mxu0 %v4223
      %4298 = vmatprep.subr.mxu0 0.0
      %4299 = vmatpush1.msra.mxu0 %v4222
      %4300 = vmatprep.subr.mxu0 0.0
      %4301 = vmatpush1.msra.mxu0 %v4221
      %4302 = vmatprep.subr.mxu0 0.0
      %4303 = vmatpush1.msra.mxu0 %v4220
      %4304 = vmatprep.subr.mxu0 0.0
      %4305 = vmatpush1.msra.mxu0 %v4219
      %4306 = vmatprep.subr.mxu0 0.0
      %4307 = vmatpush2.msra.mxu0 %v4250
      %4308 = vmatprep.subr.mxu0 0.0
      %4309 = vmatpush2.msra.mxu0 %v4249
      %4310 = vmatprep.subr.mxu0 0.0
      %4311 = vmatpush2.msra.mxu0 %v4248
      %4312 = vmatprep.subr.mxu0 0.0
      %4313 = vmatpush2.msra.mxu0 %v4247
      %4314 = vmatprep.subr.mxu0 0.0
      %4315 = vmatpush2.msra.mxu0 %v4246
      %4316 = vmatprep.subr.mxu0 0.0
      %4317 = vmatpush2.msra.mxu0 %v4245
      %4318 = vmatprep.subr.mxu0 0.0
      %4319 = vmatpush2.msra.mxu0 %v4244
      %4320 = vmatprep.subr.mxu0 0.0
      %4321 = vmatpush2.msra.mxu0 %v4243
      %4322 = vmatprep.subr.mxu0 0.0
      %4323 = vmatpush2.msra.mxu0 %v4242
      %4324 = vmatprep.subr.mxu0 0.0
      %4325 = vmatpush2.msra.mxu0 %v4241
      %4326 = vmatprep.subr.mxu0 0.0
      %4327 = vmatpush2.msra.mxu0 %v4240
      %4328 = vmatprep.subr.mxu0 0.0
      %4329 = vmatpush2.msra.mxu0 %v4239
      %4330 = vmatprep.subr.mxu0 0.0
      %4331 = vmatpush2.msra.mxu0 %v4238
      %4332 = vmatprep.subr.mxu0 0.0
      %4333 = vmatpush2.msra.mxu0 %v4237
      %4334 = vmatprep.subr.mxu0 0.0
      %4335 = vmatpush2.msra.mxu0 %v4236
      %4336 = vmatprep.subr.mxu0 0.0
      %4337 = vmatpush2.msra.mxu0 %v4235
      %4338 = vmatprep.mubr.f32.mxu0 %v4216
      %4339 = vmatmul.mubr.f32.gmra.mxu0 %v4215
      %v4340 = vpop.f32.mrf.mxu0
      %v4341 = vadd.f32 %v4272, %v4340
      %v4342 = vpop.f32.mrf.mxu0
      %4343 = vdwg.mxu0
      %4344 = vmatprep.subr.mxu0 0.0
      %4345 = vmatpush1.msra.mxu0 %v4266
      %4346 = vmatprep.subr.mxu0 0.0
      %4347 = vmatpush1.msra.mxu0 %v4265
      %4348 = vmatprep.subr.mxu0 0.0
      %4349 = vmatpush1.msra.mxu0 %v4264
      %4350 = vmatprep.subr.mxu0 0.0
      %4351 = vmatpush1.msra.mxu0 %v4263
      %4352 = vmatprep.subr.mxu0 0.0
      %4353 = vmatpush1.msra.mxu0 %v4262
      %4354 = vmatprep.subr.mxu0 0.0
      %4355 = vmatpush1.msra.mxu0 %v4261
      %4356 = vmatprep.subr.mxu0 0.0
      %4357 = vmatpush1.msra.mxu0 %v4260
      %4358 = vmatprep.subr.mxu0 0.0
      %4359 = vmatpush1.msra.mxu0 %v4259
      %4360 = vmatprep.subr.mxu0 0.0
      %4361 = vmatpush1.msra.mxu0 %v4258
      %4362 = vmatprep.subr.mxu0 0.0
      %4363 = vmatpush1.msra.mxu0 %v4257
      %4364 = vmatprep.subr.mxu0 0.0
      %4365 = vmatpush1.msra.mxu0 %v4256
      %4366 = vmatprep.subr.mxu0 0.0
      %4367 = vmatpush1.msra.mxu0 %v4255
      %4368 = vmatprep.subr.mxu0 0.0
      %4369 = vmatpush1.msra.mxu0 %v4254
      %4370 = vmatprep.subr.mxu0 0.0
      %4371 = vmatpush1.msra.mxu0 %v4253
      %4372 = vmatprep.subr.mxu0 0.0
      %4373 = vmatpush1.msra.mxu0 %v4252
      %4374 = vmatprep.subr.mxu0 0.0
      %4375 = vmatpush1.msra.mxu0 %v4251
      %4376 = vmatprep.subr.mxu0 0.0
      %4377 = vmatpush2.msra.mxu0 0.0
      %4378 = vmatprep.subr.mxu0 0.0
      %4379 = vmatpush2.msra.mxu0 0.0
      %4380 = vmatprep.subr.mxu0 0.0
      %4381 = vmatpush2.msra.mxu0 0.0
      %4382 = vmatprep.subr.mxu0 0.0
      %4383 = vmatpush2.msra.mxu0 0.0
      %4384 = vmatprep.subr.mxu0 0.0
      %4385 = vmatpush2.msra.mxu0 0.0
      %4386 = vmatprep.subr.mxu0 0.0
      %4387 = vmatpush2.msra.mxu0 0.0
      %4388 = vmatprep.subr.mxu0 0.0
      %4389 = vmatpush2.msra.mxu0 0.0
      %4390 = vmatprep.subr.mxu0 0.0
      %4391 = vmatpush2.msra.mxu0 0.0
      %4392 = vmatprep.subr.mxu0 0.0
      %4393 = vmatpush2.msra.mxu0 0.0
      %4394 = vmatprep.subr.mxu0 0.0
      %4395 = vmatpush2.msra.mxu0 0.0
      %4396 = vmatprep.subr.mxu0 0.0
      %4397 = vmatpush2.msra.mxu0 0.0
      %4398 = vmatprep.subr.mxu0 0.0
      %4399 = vmatpush2.msra.mxu0 0.0
      %4400 = vmatprep.subr.mxu0 0.0
      %4401 = vmatpush2.msra.mxu0 0.0
      %4402 = vmatprep.subr.mxu0 0.0
      %4403 = vmatpush2.msra.mxu0 0.0
      %4404 = vmatprep.subr.mxu0 0.0
      %4405 = vmatpush2.msra.mxu0 0.0
      %4406 = vmatprep.subr.mxu0 0.0
      %4407 = vmatpush2.msra.mxu0 0.0
      %4408 = vmatprep.mubr.f32.mxu0 0.0
      %4409 = vmatmul.mubr.f32.gmra.mxu0 %v4217
      %v4410 = vpop.f32.mrf.mxu0
      %v4411 = vadd.f32 %v4341, %v4410
      %v4412 = vpop.f32.mrf.mxu0
      %4413 = vdwg.mxu0
      %v4414 = vtanh.pop %v4411
      %v4415 = vld [vmem:[#allocation4] sm:$0xff]
      %v4416 = vld [vmem:[#allocation4 + $0x8] sm:$0xff]
      %v4417 = vld [vmem:[#allocation4 + $0x10] sm:$0xff]
      %v4418 = vld [vmem:[#allocation4 + $0x18] sm:$0xff]
      %v4419 = vld [vmem:[#allocation4 + $0x20] sm:$0xff]
      %v4420 = vld [vmem:[#allocation4 + $0x28] sm:$0xff]
      %v4421 = vld [vmem:[#allocation4 + $0x30] sm:$0xff]
      %v4422 = vld [vmem:[#allocation4 + $0x38] sm:$0xff]
      %v4423 = vld [vmem:[#allocation4 + $0x40] sm:$0xff]
      %v4424 = vld [vmem:[#allocation4 + $0x48] sm:$0xff]
      %v4425 = vld [vmem:[#allocation4 + $0x50] sm:$0xff]
      %v4426 = vld [vmem:[#allocation4 + $0x58] sm:$0xff]
      %v4427 = vld [vmem:[#allocation4 + $0x60] sm:$0xff]
      %v4428 = vld [vmem:[#allocation4 + $0x68] sm:$0xff]
      %v4429 = vld [vmem:[#allocation4 + $0x70] sm:$0xff]
      %v4430 = vld [vmem:[#allocation4 + $0x78] sm:$0xff]
      %v4431 = vld [vmem:[#allocation5] sm:$0x1]
      %v4433 = vlaneseq
      %v4434 = vshrl.u32 %v4433, 7
      %v4435 = vsub.s32 0, %v4434
      %v4436 = vrot.slane %v4431, %v4435
      %4438 = vmatprep.subr.mxu0 0.0
      %4439 = vmatpush1.msra.mxu0 %v4430
      %4440 = vmatprep.subr.mxu0 0.0
      %4441 = vmatpush1.msra.mxu0 %v4429
      %4442 = vmatprep.subr.mxu0 0.0
      %4443 = vmatpush1.msra.mxu0 %v4428
      %4444 = vmatprep.subr.mxu0 0.0
      %4445 = vmatpush1.msra.mxu0 %v4427
      %4446 = vmatprep.subr.mxu0 0.0
      %4447 = vmatpush1.msra.mxu0 %v4426
      %4448 = vmatprep.subr.mxu0 0.0
      %4449 = vmatpush1.msra.mxu0 %v4425
      %4450 = vmatprep.subr.mxu0 0.0
      %4451 = vmatpush1.msra.mxu0 %v4424
      %4452 = vmatprep.subr.mxu0 0.0
      %4453 = vmatpush1.msra.mxu0 %v4423
      %4454 = vmatprep.subr.mxu0 0.0
      %4455 = vmatpush1.msra.mxu0 %v4422
      %4456 = vmatprep.subr.mxu0 0.0
      %4457 = vmatpush1.msra.mxu0 %v4421
      %4458 = vmatprep.subr.mxu0 0.0
      %4459 = vmatpush1.msra.mxu0 %v4420
      %4460 = vmatprep.subr.mxu0 0.0
      %4461 = vmatpush1.msra.mxu0 %v4419
      %4462 = vmatprep.subr.mxu0 0.0
      %4463 = vmatpush1.msra.mxu0 %v4418
      %4464 = vmatprep.subr.mxu0 0.0
      %4465 = vmatpush1.msra.mxu0 %v4417
      %4466 = vmatprep.subr.mxu0 0.0
      %4467 = vmatpush1.msra.mxu0 %v4416
      %4468 = vmatprep.subr.mxu0 0.0
      %4469 = vmatpush1.msra.mxu0 %v4415
      %4470 = vmatprep.subr.mxu0 0.0
      %4471 = vmatpush2.msra.mxu0 0.0
      %4472 = vmatprep.subr.mxu0 0.0
      %4473 = vmatpush2.msra.mxu0 0.0
      %4474 = vmatprep.subr.mxu0 0.0
      %4475 = vmatpush2.msra.mxu0 0.0
      %4476 = vmatprep.subr.mxu0 0.0
      %4477 = vmatpush2.msra.mxu0 0.0
      %4478 = vmatprep.subr.mxu0 0.0
      %4479 = vmatpush2.msra.mxu0 0.0
      %4480 = vmatprep.subr.mxu0 0.0
      %4481 = vmatpush2.msra.mxu0 0.0
      %4482 = vmatprep.subr.mxu0 0.0
      %4483 = vmatpush2.msra.mxu0 0.0
      %4484 = vmatprep.subr.mxu0 0.0
      %4485 = vmatpush2.msra.mxu0 0.0
      %4486 = vmatprep.subr.mxu0 0.0
      %4487 = vmatpush2.msra.mxu0 0.0
      %4488 = vmatprep.subr.mxu0 0.0
      %4489 = vmatpush2.msra.mxu0 0.0
      %4490 = vmatprep.subr.mxu0 0.0
      %4491 = vmatpush2.msra.mxu0 0.0
      %4492 = vmatprep.subr.mxu0 0.0
      %4493 = vmatpush2.msra.mxu0 0.0
      %4494 = vmatprep.subr.mxu0 0.0
      %4495 = vmatpush2.msra.mxu0 0.0
      %4496 = vmatprep.subr.mxu0 0.0
      %4497 = vmatpush2.msra.mxu0 0.0
      %4498 = vmatprep.subr.mxu0 0.0
      %4499 = vmatpush2.msra.mxu0 0.0
      %4500 = vmatprep.subr.mxu0 0.0
      %4501 = vmatpush2.msra.mxu0 0.0
      %4502 = vmatprep.mubr.f32.mxu0 0.0
      %4503 = vmatmul.mubr.f32.gmra.mxu0 %v4414
      %v4504 = vpop.f32.mrf.mxu0
      %v4505 = vadd.f32 %v4436, %v4504
      %v4506 = vpop.f32.mrf.mxu0
      %4507 = vdwg.mxu0
      %v4508 = vsub.f32 %v4505, %v4218
      %v4509 = vand.u32 2147483647, %v4508
      %v4510 = vsel %vm470, %v4509, 0.0
      %4511 = vadd.xlane.f32.xlu0 %v4510
      %v4512 = vpop.xlane.xlu0 %4511
      %v4513 = vrot.slane %v4512, 4
      %v4514 = vadd.f32 %v4512, %v4513
      %v4515 = vrot.slane %v4514, 2
      %v4516 = vadd.f32 %v4514, %v4515
      %v4517 = vrot.slane %v4516, 1
      %v4518 = vadd.f32 %v4516, %v4517
      %s4519 = vtos %v4518
      %s4520 = smul.f32 %s4519, 0.0078125
      %v4521 = vstv %s4520
      %4522 = vst [vmem:[%s355] sm:$0x1] %v4521
      %p4523 = scmp.lt.s32.totalorder %s19, 1
      %s4524 = scalar_select %p4523, %s19, 1
      %s4525 = scalar_lea.vmem %s8, %s4524
      // Predicated region
      $region53: #{meta_forward.1} parent=51 // pred_check
        %p4526 = pneg %p225
      $region54: #{meta_forward.1} parent=51 // pred_check_branch
        %4528 = sbr.rel (%p4526) target = $region56
      $region55: #{meta_forward.1} parent=51 // pred_region
        _
      $region56: #{meta_forward.1} parent=51 // pred_fallthru
        _
    $region52: #{meta_forward.1} parent=5 // pred_fallthru
      _
    %p4529 = scmp.le.s32.totalorder 2, %s14
    // Predicated region
    $region57: #{meta_forward.1} parent=5 // pred_check
      %p4530 = pneg %p4529
    $region58: #{meta_forward.1} parent=5 // pred_check_branch
      %4532 = sbr.rel (%p4530) target = $region60
    $region59: #{meta_forward.1} parent=5 // pred_region
      %s4533 = ssub.s32 %s14, 2
      // Predicated region
      $region61: #{meta_forward.1} parent=59 // pred_check
        %p4534 = pneg %p231
      $region62: #{meta_forward.1} parent=59 // pred_check_branch
        %4536 = sbr.rel (%p4534) target = $region64
      $region63: #{meta_forward.1} parent=59 // pred_region
        %p4537 = scmp.lt.s32.totalorder %s20, 1
        %s4538 = scalar_select %p4537, %s20, 1
        %s4539 = scalar_lea.vmem %s8, %s4538
      $region64: #{meta_forward.1} parent=59 // pred_fallthru
        _
    $region60: #{meta_forward.1} parent=5 // pred_fallthru
      _
  $region6: #{meta_forward.1} parent=0 // loop_footer
    %s18 = sadd.s32 1, %s14
  $region7: #{meta_forward.1} parent=0 // loop_footer_branch
    %13 = sbr.rel target = $region3
  $region8: #{meta_forward.1} parent=0 // loop_exit
    _

</llo_original>
